<compile_context>
chip_gen: v7x
topology: tpu7x:2x2x1
jax: 0.10.0
libtpu: 0.0.40
codegen_flags: <defaults>
</compile_context>

<pallas_src>
import numpy as np
import jax
import jax.numpy as jnp
from jax import lax
from jax.experimental import pallas as pl

# ----- small, consistent model config -----
B, C, IMG, PATCH = 2, 4, 16, 4
D_MODEL, N_HEADS, FF, N_LAYERS = 32, 4, 64, 2
N_OUT = 10
N_PATCH = (IMG // PATCH) ** 2          # 16
P_DIM = C * PATCH * PATCH              # 64
SEQ = N_PATCH + 1                      # 17 (CLS + patches)
BS = B * SEQ                           # 34 rows: whole-batch activation slab
D_HEAD = D_MODEL // N_HEADS            # 8
LN_EPS = 1e-5
OUT_LANES = 128                        # lane-dense logits slab (sliced to N_OUT outside)


def _layernorm(x, w, b):
    mu = jnp.mean(x, axis=-1, keepdims=True)
    var = jnp.mean((x - mu) ** 2, axis=-1, keepdims=True)
    return (x - mu) * lax.rsqrt(var + LN_EPS) * w + b


def _norm(x):
    # affine part is folded into the downstream weight matrix host-side
    mu = jnp.mean(x, axis=-1, keepdims=True)
    var = jnp.mean((x - mu) ** 2, axis=-1, keepdims=True)
    return (x - mu) * lax.rsqrt(var + LN_EPS)


def _softmax_last(x):
    # kernel-only: divide goes to the EUP via approx reciprocal
    m = jnp.max(x, axis=-1, keepdims=True)
    e = jnp.exp(x - m)
    return e * pl.reciprocal(jnp.sum(e, axis=-1, keepdims=True), approx=True)


# --------------------------- Pallas kernel ---------------------------------

def vit_kernel(patches_ref, wp_ref, addc_ref, bias_ref,
               wqkv_ref, wo_ref, w1_ref, w2_ref, lv_ref, head_ref, out_ref):
    f32 = jnp.float32

    # Patch-embed matmul.  CLS token, conv bias, sqrt(d_model) scale and the
    # positional encoding are folded into addc (exact host-side rewrite; the
    # CLS rows of `patches` are zero so they contribute nothing here).
    h = jnp.dot(patches_ref[...], wp_ref[...],
                preferred_element_type=f32) + addc_ref[...]          # (BS, D)

    # Hoisted constants (computed once, reused by both layers).
    lane = lax.broadcasted_iota(jnp.int32, (BS, D_MODEL), 1)
    head_masks = [(lane >= hd * D_HEAD) & (lane < (hd + 1) * D_HEAD)
                  for hd in range(N_HEADS)]
    attn_bias = bias_ref[...]                                        # (NH*BS, BS)

    for l in range(N_LAYERS):
        lv = lv_ref[l]                                               # (4, 3*D)
        bqkv = lv[0:1, :]
        bo = lv[1:2, 0:D_MODEL]
        b1 = lv[2:3, 0:FF]
        b2 = lv[3:4, 0:D_MODEL]

        # ---- sublayer 0: pre-norm multi-head self-attention ----
        # ln1 affine and 1/sqrt(d_head) are pre-folded into wqkv/bqkv.
        nq = _norm(h)
        qkv = jnp.dot(nq, wqkv_ref[l], preferred_element_type=f32) + bqkv  # (BS, 3D)
        q = qkv[:, 0:D_MODEL]
        k = qkv[:, D_MODEL:2 * D_MODEL]
        v = qkv[:, 2 * D_MODEL:3 * D_MODEL]

        # All heads in one pass: stack lane-masked q along sublanes; the
        # full-D contraction then yields exact per-head scores per row-block.
        q_stack = jnp.concatenate(
            [jnp.where(m, q, 0.0) for m in head_masks], axis=0)      # (NH*BS, D)
        scores = lax.dot_general(q_stack, k, (((1,), (1,)), ((), ())),
                                 preferred_element_type=f32)         # (NH*BS, BS)
        alphas = _softmax_last(scores + attn_bias)                   # (NH*BS, BS)
        av = jnp.dot(alphas, v, preferred_element_type=f32)          # (NH*BS, D)
        ctx = jnp.zeros((BS, D_MODEL), f32)
        for hd in range(N_HEADS):
            ctx = ctx + jnp.where(head_masks[hd],
                                  av[hd * BS:(hd + 1) * BS, :], 0.0)
        h = h + jnp.dot(ctx, wo_ref[l], preferred_element_type=f32) + bo

        # ---- sublayer 1: pre-norm feed-forward (Linear -> ReLU -> Linear) ----
        # ln2 affine is pre-folded into w1/b1.
        na = _norm(h)
        ffh = jnp.maximum(jnp.dot(na, w1_ref[l], preferred_element_type=f32) + b1, 0.0)
        h = h + jnp.dot(ffh, w2_ref[l], preferred_element_type=f32) + b2

    # Final LayerNorm (affine folded into head weights) + classification head
    # on the CLS rows only; 128-lane padded -> lane-dense store.
    cls = jnp.concatenate([h[i * SEQ:i * SEQ + 1, :] for i in range(B)], axis=0)  # (B, D)
    hf = _norm(cls)
    out_ref[...] = (jnp.dot(hf, head_ref[0:D_MODEL, :], preferred_element_type=f32)
                    + head_ref[D_MODEL:D_MODEL + 1, :])              # (B, 128)


# --------------------------- host-side glue --------------------------------

def patchify(x_nchw):
    b, c, h, w = x_nchw.shape
    nh, nw = h // PATCH, w // PATCH
    p = x_nchw.reshape(b, c, nh, PATCH, nw, PATCH)
    return p.transpose(0, 2, 4, 1, 3, 5).reshape(b, nh * nw, c * PATCH * PATCH)


def pack_params(p):
    """Pack the 24 raw parameters into 9 lane/sublane-dense kernel inputs.

    All rewrites are exact: LN affines fold into the consuming weight matrix,
    the attention score scale folds into the Q columns of the fused QKV
    weight, and sqrt(d_model)/conv-bias/CLS/PE fold into an additive constant.
    """
    sd = float(np.sqrt(D_MODEL))
    inv_sqrt_dk = 1.0 / float(np.sqrt(D_HEAD))

    wp_s = p["wp"] * sd                                              # fold sqrt(d_model)
    # additive constant per row: CLS rows get cls*sqrt(d)+pe[0],
    # patch rows get bp*sqrt(d)+pe[s]
    base = jnp.concatenate([p["cls"] * sd + p["pe"][0:1],
                            p["bp"] * sd + p["pe"][1:]], axis=0)     # (SEQ, D)
    add_const = jnp.tile(base, (B, 1))                               # (BS, D)

    # block-diagonal (per-example) attention bias, replicated per head
    kb = np.repeat(np.arange(B), SEQ)
    qb = np.tile(kb, N_HEADS)
    attn_bias = jnp.asarray(np.where(qb[:, None] == kb[None, :], 0.0, -1e30),
                            dtype=jnp.float32)                       # (NH*BS, BS)

    # fused QKV with ln1 affine and 1/sqrt(d_head) folded in
    wqkv = jnp.concatenate([p["wq"], p["wk"], p["wv"]], axis=-1)     # (L, D, 3D)
    bqkv = jnp.concatenate([p["bq"], p["bk"], p["bv"]], axis=-1)     # (L, 1, 3D)
    wqkv_f = jnp.swapaxes(p["ln1w"], 1, 2) * wqkv
    bqkv_f = jnp.einsum("lod,ldf->lof", p["ln1b"], wqkv) + bqkv
    qscale = jnp.concatenate([jnp.full((D_MODEL,), inv_sqrt_dk, jnp.float32),
                              jnp.ones((2 * D_MODEL,), jnp.float32)])
    wqkv_f = wqkv_f * qscale
    bqkv_f = bqkv_f * qscale

    # FFN first linear with ln2 affine folded in
    w1_f = jnp.swapaxes(p["ln2w"], 1, 2) * p["w1"]
    b1_f = jnp.einsum("lod,ldf->lof", p["ln2b"], p["w1"]) + p["b1"]

    def row(v):
        return jnp.pad(v, ((0, 0), (0, 0), (0, 3 * D_MODEL - v.shape[-1])))

    layer_vecs = jnp.concatenate(
        [row(bqkv_f), row(p["bo"]), row(b1_f), row(p["b2"])], axis=1)  # (L, 4, 3D)

    # classifier head with final LN affine folded in, padded to 128 lanes
    wh_f = p["lnfw"].reshape(D_MODEL, 1) * p["wh"]                   # (D, N_OUT)
    bh_f = p["lnfb"] @ p["wh"] + p["bh"]                             # (1, N_OUT)
    head_const = jnp.concatenate(
        [jnp.pad(wh_f, ((0, 0), (0, OUT_LANES - N_OUT))),
         jnp.pad(bh_f, ((0, 0), (0, OUT_LANES - N_OUT)))], axis=0)   # (D+1, 128)

    return (wp_s, add_const, attn_bias, wqkv_f, p["wo"], w1_f, p["w2"],
            layer_vecs, head_const)


def vit_pallas(x_nchw, params):
    assert x_nchw.shape[0] == B
    packed = pack_params(params)
    patches = jnp.pad(patchify(x_nchw), ((0, 0), (1, 0), (0, 0)))    # zero CLS rows
    patches = patches.reshape(BS, P_DIM)
    # Single grid step: whole model (<200 KB) is VMEM resident; no BlockSpec
    # tiling needed (full-array blocks, lane-dense 128-wide output).
    out = pl.pallas_call(
        vit_kernel,
        out_shape=jax.ShapeDtypeStruct((B, OUT_LANES), jnp.float32),
    )(patches, *packed)
    return out[:, :N_OUT]


# --------------------------- reference & init ------------------------------

def sinusoidal_pe(max_len, d_model):
    pos = np.arange(max_len, dtype=np.float32)[:, None]
    ang = np.exp(np.arange(0, d_model, 2, dtype=np.float32)
                 * (-np.log(10000.0) / d_model))
    pe = np.zeros((max_len, d_model), dtype=np.float32)
    pe[:, 0::2] = np.sin(pos * ang)
    pe[:, 1::2] = np.cos(pos * ang)
    return jnp.asarray(pe)


def init_params(key):
    ks = jax.random.split(key, 24)

    def rnd(k, shape, scale=0.02):
        return (scale * jax.random.normal(k, shape)).astype(jnp.float32)

    L, D = N_LAYERS, D_MODEL
    return {
        "cls":  jnp.zeros((1, D), jnp.float32),          # nn.Parameter(zeros)
        "pe":   sinusoidal_pe(SEQ, D),
        "wp":   rnd(ks[0], (P_DIM, D)),
        "bp":   rnd(ks[1], (1, D)),
        "ln1w": jnp.ones((L, 1, D), jnp.float32),
        "ln1b": jnp.zeros((L, 1, D), jnp.float32),
        "wq":   rnd(ks[2], (L, D, D)),  "bq": rnd(ks[3], (L, 1, D)),
        "wk":   rnd(ks[4], (L, D, D)),  "bk": rnd(ks[5], (L, 1, D)),
        "wv":   rnd(ks[6], (L, D, D)),  "bv": rnd(ks[7], (L, 1, D)),
        "wo":   rnd(ks[8], (L, D, D)),  "bo": rnd(ks[9], (L, 1, D)),
        "ln2w": jnp.ones((L, 1, D), jnp.float32),
        "ln2b": jnp.zeros((L, 1, D), jnp.float32),
        "w1":   rnd(ks[10], (L, D, FF)), "b1": rnd(ks[11], (L, 1, FF)),
        "w2":   rnd(ks[12], (L, FF, D)), "b2": rnd(ks[13], (L, 1, D)),
        "lnfw": jnp.ones((1, D), jnp.float32),
        "lnfb": jnp.zeros((1, D), jnp.float32),
        "wh":   rnd(ks[14], (D, N_OUT)), "bh": rnd(ks[15], (1, N_OUT)),
    }


def vit_ref_single(patch_rows, p):
    """Pure-JAX per-example reference using the original (unfused) math."""
    sd = float(np.sqrt(D_MODEL))
    emb = patch_rows @ p["wp"] + p["bp"]                             # (N_PATCH, D)
    src = jnp.concatenate([p["cls"], emb], axis=0)                   # (SEQ, D)
    h = src * sd + p["pe"]
    for l in range(N_LAYERS):
        nq = _layernorm(h, p["ln1w"][l], p["ln1b"][l])
        q = nq @ p["wq"][l] + p["bq"][l]
        k = nq @ p["wk"][l] + p["bk"][l]
        v = nq @ p["wv"][l] + p["bv"][l]
        heads = []
        for hd in range(N_HEADS):
            sl = slice(hd * D_HEAD, (hd + 1) * D_HEAD)
            s = (q[:, sl] @ k[:, sl].T) / float(np.sqrt(D_HEAD))
            heads.append(jax.nn.softmax(s, axis=-1) @ v[:, sl])
        ctx = jnp.concatenate(heads, axis=-1)
        h = h + ctx @ p["wo"][l] + p["bo"][l]
        na = _layernorm(h, p["ln2w"][l], p["ln2b"][l])
        ffh = jax.nn.relu(na @ p["w1"][l] + p["b1"][l])
        h = h + ffh @ p["w2"][l] + p["b2"][l]
    h = _layernorm(h, p["lnfw"], p["lnfb"])
    return h[0] @ p["wh"] + p["bh"][0]


if __name__ == "__main__":
    key = jax.random.PRNGKey(0)
    kx, kp = jax.random.split(key)
    x = jax.random.normal(kx, (B, C, IMG, IMG), dtype=jnp.float32)
    params = init_params(kp)

    out = jax.block_until_ready(vit_pallas(x, params))
    assert out.shape == (B, N_OUT)

    ref = jax.vmap(lambda pr: vit_ref_single(pr, params))(patchify(x))
    # Only deviation source vs. the exact reference is the EUP approx
    # reciprocal in the in-kernel softmax.
    np.testing.assert_allclose(np.asarray(out), np.asarray(ref),
                               rtol=1e-2, atol=1e-2)
    print("KERNEL_OK")
</pallas_src>

<mosaic_0001>
module attributes {stable_mosaic.version = 11 : i64} {
  func.func @vit_kernel(%arg0: memref<34x64xf32, #tpu.memory_space<vmem>>, %arg1: memref<64x32xf32, #tpu.memory_space<vmem>>, %arg2: memref<34x32xf32, #tpu.memory_space<vmem>>, %arg3: memref<136x34xf32, #tpu.memory_space<vmem>>, %arg4: memref<2x32x96xf32, #tpu.memory_space<vmem>>, %arg5: memref<2x32x32xf32, #tpu.memory_space<vmem>>, %arg6: memref<2x32x64xf32, #tpu.memory_space<vmem>>, %arg7: memref<2x64x32xf32, #tpu.memory_space<vmem>>, %arg8: memref<2x4x96xf32, #tpu.memory_space<vmem>>, %arg9: memref<33x128xf32, #tpu.memory_space<vmem>>, %arg10: memref<2x128xf32, #tpu.memory_space<vmem>>) attributes {dimension_semantics = [], scalar_prefetch = 0 : i64, scratch_operands = 0 : i64, tpu.core_type = #tpu.core_type<tc>} {
    %c0 = arith.constant 0 : index
    %c0_0 = arith.constant 0 : index
    %0 = vector.load %arg0[%c0, %c0_0] : memref<34x64xf32, #tpu.memory_space<vmem>>, vector<34x64xf32>
    %c0_1 = arith.constant 0 : index
    %c0_2 = arith.constant 0 : index
    %1 = vector.load %arg1[%c0_1, %c0_2] : memref<64x32xf32, #tpu.memory_space<vmem>>, vector<64x32xf32>
    %cst = arith.constant dense<0.000000e+00> : vector<34x32xf32>
    %2 = tpu.matmul %0, %1, %cst {dimension_numbers = #tpu.dot_dimension_numbers<[1], [0], [0], [1], [0, 0, 1, 1], [], []>} : vector<34x64xf32>, vector<64x32xf32>, vector<34x32xf32> -> vector<34x32xf32>
    %c0_3 = arith.constant 0 : index
    %c0_4 = arith.constant 0 : index
    %3 = vector.load %arg2[%c0_3, %c0_4] : memref<34x32xf32, #tpu.memory_space<vmem>>, vector<34x32xf32>
    %4 = arith.addf %2, %3 : vector<34x32xf32>
    %5 = tpu.iota {dimensions = array<i32: 1>} : vector<34x32xi32>
    %c0_i32 = arith.constant 0 : i32
    %6 = vector.broadcast %c0_i32 : i32 to vector<34x32xi32>
    %7 = arith.cmpi sge, %5, %6 : vector<34x32xi32>
    %c8_i32 = arith.constant 8 : i32
    %8 = vector.broadcast %c8_i32 : i32 to vector<34x32xi32>
    %9 = arith.cmpi slt, %5, %8 : vector<34x32xi32>
    %10 = arith.andi %7, %9 : vector<34x32xi1>
    %c8_i32_5 = arith.constant 8 : i32
    %11 = vector.broadcast %c8_i32_5 : i32 to vector<34x32xi32>
    %12 = arith.cmpi sge, %5, %11 : vector<34x32xi32>
    %c16_i32 = arith.constant 16 : i32
    %13 = vector.broadcast %c16_i32 : i32 to vector<34x32xi32>
    %14 = arith.cmpi slt, %5, %13 : vector<34x32xi32>
    %15 = arith.andi %12, %14 : vector<34x32xi1>
    %c16_i32_6 = arith.constant 16 : i32
    %16 = vector.broadcast %c16_i32_6 : i32 to vector<34x32xi32>
    %17 = arith.cmpi sge, %5, %16 : vector<34x32xi32>
    %c24_i32 = arith.constant 24 : i32
    %18 = vector.broadcast %c24_i32 : i32 to vector<34x32xi32>
    %19 = arith.cmpi slt, %5, %18 : vector<34x32xi32>
    %20 = arith.andi %17, %19 : vector<34x32xi1>
    %c24_i32_7 = arith.constant 24 : i32
    %21 = vector.broadcast %c24_i32_7 : i32 to vector<34x32xi32>
    %22 = arith.cmpi sge, %5, %21 : vector<34x32xi32>
    %c32_i32 = arith.constant 32 : i32
    %23 = vector.broadcast %c32_i32 : i32 to vector<34x32xi32>
    %24 = arith.cmpi slt, %5, %23 : vector<34x32xi32>
    %25 = arith.andi %22, %24 : vector<34x32xi1>
    %c0_8 = arith.constant 0 : index
    %c0_9 = arith.constant 0 : index
    %26 = vector.load %arg3[%c0_8, %c0_9] : memref<136x34xf32, #tpu.memory_space<vmem>>, vector<136x34xf32>
    %c0_10 = arith.constant 0 : index
    %c0_11 = arith.constant 0 : index
    %c0_12 = arith.constant 0 : index
    %27 = vector.load %arg8[%c0_10, %c0_11, %c0_12] : memref<2x4x96xf32, #tpu.memory_space<vmem>>, vector<1x4x96xf32>
    %28 = vector.shape_cast %27 : vector<1x4x96xf32> to vector<4x96xf32>
    %29 = vector.extract_strided_slice %28 {offsets = [0, 0], sizes = [1, 96], strides = [1, 1]} : vector<4x96xf32> to vector<1x96xf32>
    %30 = vector.extract_strided_slice %28 {offsets = [1, 0], sizes = [1, 32], strides = [1, 1]} : vector<4x96xf32> to vector<1x32xf32>
    %31 = vector.extract_strided_slice %28 {offsets = [2, 0], sizes = [1, 64], strides = [1, 1]} : vector<4x96xf32> to vector<1x64xf32>
    %32 = vector.extract_strided_slice %28 {offsets = [3, 0], sizes = [1, 32], strides = [1, 1]} : vector<4x96xf32> to vector<1x32xf32>
    %cst_13 = arith.constant dense<0.000000e+00> : vector<34xf32>
    %33 = vector.multi_reduction <add>, %4, %cst_13 [1] : vector<34x32xf32> to vector<34xf32>
    %34 = vector.shape_cast %33 : vector<34xf32> to vector<34x1xf32>
    %cst_14 = arith.constant 3.200000e+01 : f32
    %35 = vector.broadcast %cst_14 : f32 to vector<34x1xf32>
    %36 = arith.divf %34, %35 : vector<34x1xf32>
    %37 = vector.broadcast %36 : vector<34x1xf32> to vector<34x32xf32>
    %38 = arith.subf %4, %37 : vector<34x32xf32>
    %39 = arith.mulf %38, %38 : vector<34x32xf32>
    %cst_15 = arith.constant dense<0.000000e+00> : vector<34xf32>
    %40 = vector.multi_reduction <add>, %39, %cst_15 [1] : vector<34x32xf32> to vector<34xf32>
    %41 = vector.shape_cast %40 : vector<34xf32> to vector<34x1xf32>
    %cst_16 = arith.constant 3.200000e+01 : f32
    %42 = vector.broadcast %cst_16 : f32 to vector<34x1xf32>
    %43 = arith.divf %41, %42 : vector<34x1xf32>
    %44 = vector.broadcast %36 : vector<34x1xf32> to vector<34x32xf32>
    %45 = arith.subf %4, %44 : vector<34x32xf32>
    %cst_17 = arith.constant 9.99999974E-6 : f32
    %46 = vector.broadcast %cst_17 : f32 to vector<34x1xf32>
    %47 = arith.addf %43, %46 : vector<34x1xf32>
    %48 = math.rsqrt %47 : vector<34x1xf32>
    %49 = vector.broadcast %48 : vector<34x1xf32> to vector<34x32xf32>
    %50 = arith.mulf %45, %49 : vector<34x32xf32>
    %c0_18 = arith.constant 0 : index
    %c0_19 = arith.constant 0 : index
    %c0_20 = arith.constant 0 : index
    %51 = vector.load %arg4[%c0_18, %c0_19, %c0_20] : memref<2x32x96xf32, #tpu.memory_space<vmem>>, vector<1x32x96xf32>
    %52 = vector.shape_cast %51 : vector<1x32x96xf32> to vector<32x96xf32>
    %cst_21 = arith.constant dense<0.000000e+00> : vector<34x96xf32>
    %53 = tpu.matmul %50, %52, %cst_21 {dimension_numbers = #tpu.dot_dimension_numbers<[1], [0], [0], [1], [0, 0, 1, 1], [], []>} : vector<34x32xf32>, vector<32x96xf32>, vector<34x96xf32> -> vector<34x96xf32>
    %54 = vector.broadcast %29 : vector<1x96xf32> to vector<34x96xf32>
    %55 = arith.addf %53, %54 : vector<34x96xf32>
    %56 = vector.extract_strided_slice %55 {offsets = [0, 0], sizes = [34, 32], strides = [1, 1]} : vector<34x96xf32> to vector<34x32xf32>
    %57 = vector.extract_strided_slice %55 {offsets = [0, 32], sizes = [34, 32], strides = [1, 1]} : vector<34x96xf32> to vector<34x32xf32>
    %58 = vector.extract_strided_slice %55 {offsets = [0, 64], sizes = [34, 32], strides = [1, 1]} : vector<34x96xf32> to vector<34x32xf32>
    %cst_22 = arith.constant 0.000000e+00 : f32
    %59 = vector.broadcast %cst_22 : f32 to vector<34x32xf32>
    %60 = arith.select %10, %56, %59 : vector<34x32xi1>, vector<34x32xf32>
    %cst_23 = arith.constant 0.000000e+00 : f32
    %61 = vector.broadcast %cst_23 : f32 to vector<34x32xf32>
    %62 = arith.select %15, %56, %61 : vector<34x32xi1>, vector<34x32xf32>
    %cst_24 = arith.constant 0.000000e+00 : f32
    %63 = vector.broadcast %cst_24 : f32 to vector<34x32xf32>
    %64 = arith.select %20, %56, %63 : vector<34x32xi1>, vector<34x32xf32>
    %cst_25 = arith.constant 0.000000e+00 : f32
    %65 = vector.broadcast %cst_25 : f32 to vector<34x32xf32>
    %66 = arith.select %25, %56, %65 : vector<34x32xi1>, vector<34x32xf32>
    %67 = tpu.concatenate %60, %62, %64, %66 in 0 : vector<34x32xf32>, vector<34x32xf32>, vector<34x32xf32>, vector<34x32xf32> -> vector<136x32xf32>
    %cst_26 = arith.constant dense<0.000000e+00> : vector<136x34xf32>
    %68 = tpu.matmul %67, %57, %cst_26 {dimension_numbers = #tpu.dot_dimension_numbers<[1], [1], [0], [0], [0, 0, 1, 0], [], []>} : vector<136x32xf32>, vector<34x32xf32>, vector<136x34xf32> -> vector<136x34xf32>
    %69 = arith.addf %68, %26 : vector<136x34xf32>
    %cst_27 = arith.constant dense<0xFF800000> : vector<136xf32>
    %70 = vector.multi_reduction <maximumf>, %69, %cst_27 [1] : vector<136x34xf32> to vector<136xf32>
    %71 = vector.shape_cast %70 : vector<136xf32> to vector<136x1xf32>
    %72 = vector.broadcast %71 : vector<136x1xf32> to vector<136x34xf32>
    %73 = arith.subf %69, %72 : vector<136x34xf32>
    %74 = math.exp %73 : vector<136x34xf32>
    %cst_28 = arith.constant dense<0.000000e+00> : vector<136xf32>
    %75 = vector.multi_reduction <add>, %74, %cst_28 [1] : vector<136x34xf32> to vector<136xf32>
    %76 = vector.shape_cast %75 : vector<136xf32> to vector<136x1xf32>
    %77 = tpu.reciprocal %76 {approx = true} : vector<136x1xf32> -> vector<136x1xf32>
    %78 = vector.broadcast %77 : vector<136x1xf32> to vector<136x34xf32>
    %79 = arith.mulf %74, %78 : vector<136x34xf32>
    %cst_29 = arith.constant dense<0.000000e+00> : vector<136x32xf32>
    %80 = tpu.matmul %79, %58, %cst_29 {dimension_numbers = #tpu.dot_dimension_numbers<[1], [0], [0], [1], [0, 0, 1, 1], [], []>} : vector<136x34xf32>, vector<34x32xf32>, vector<136x32xf32> -> vector<136x32xf32>
    %cst_30 = arith.constant 0.000000e+00 : f32
    %81 = vector.broadcast %cst_30 : f32 to vector<34x32xf32>
    %82 = vector.extract_strided_slice %80 {offsets = [0, 0], sizes = [34, 32], strides = [1, 1]} : vector<136x32xf32> to vector<34x32xf32>
    %cst_31 = arith.constant 0.000000e+00 : f32
    %83 = vector.broadcast %cst_31 : f32 to vector<34x32xf32>
    %84 = arith.select %10, %82, %83 : vector<34x32xi1>, vector<34x32xf32>
    %85 = arith.addf %81, %84 : vector<34x32xf32>
    %86 = vector.extract_strided_slice %80 {offsets = [34, 0], sizes = [34, 32], strides = [1, 1]} : vector<136x32xf32> to vector<34x32xf32>
    %cst_32 = arith.constant 0.000000e+00 : f32
    %87 = vector.broadcast %cst_32 : f32 to vector<34x32xf32>
    %88 = arith.select %15, %86, %87 : vector<34x32xi1>, vector<34x32xf32>
    %89 = arith.addf %85, %88 : vector<34x32xf32>
    %90 = vector.extract_strided_slice %80 {offsets = [68, 0], sizes = [34, 32], strides = [1, 1]} : vector<136x32xf32> to vector<34x32xf32>
    %cst_33 = arith.constant 0.000000e+00 : f32
    %91 = vector.broadcast %cst_33 : f32 to vector<34x32xf32>
    %92 = arith.select %20, %90, %91 : vector<34x32xi1>, vector<34x32xf32>
    %93 = arith.addf %89, %92 : vector<34x32xf32>
    %94 = vector.extract_strided_slice %80 {offsets = [102, 0], sizes = [34, 32], strides = [1, 1]} : vector<136x32xf32> to vector<34x32xf32>
    %cst_34 = arith.constant 0.000000e+00 : f32
    %95 = vector.broadcast %cst_34 : f32 to vector<34x32xf32>
    %96 = arith.select %25, %94, %95 : vector<34x32xi1>, vector<34x32xf32>
    %97 = arith.addf %93, %96 : vector<34x32xf32>
    %c0_35 = arith.constant 0 : index
    %c0_36 = arith.constant 0 : index
    %c0_37 = arith.constant 0 : index
    %98 = vector.load %arg5[%c0_35, %c0_36, %c0_37] : memref<2x32x32xf32, #tpu.memory_space<vmem>>, vector<1x32x32xf32>
    %99 = vector.shape_cast %98 : vector<1x32x32xf32> to vector<32x32xf32>
    %cst_38 = arith.constant dense<0.000000e+00> : vector<34x32xf32>
    %100 = tpu.matmul %97, %99, %cst_38 {dimension_numbers = #tpu.dot_dimension_numbers<[1], [0], [0], [1], [0, 0, 1, 1], [], []>} : vector<34x32xf32>, vector<32x32xf32>, vector<34x32xf32> -> vector<34x32xf32>
    %101 = arith.addf %4, %100 : vector<34x32xf32>
    %102 = vector.broadcast %30 : vector<1x32xf32> to vector<34x32xf32>
    %103 = arith.addf %101, %102 : vector<34x32xf32>
    %cst_39 = arith.constant dense<0.000000e+00> : vector<34xf32>
    %104 = vector.multi_reduction <add>, %103, %cst_39 [1] : vector<34x32xf32> to vector<34xf32>
    %105 = vector.shape_cast %104 : vector<34xf32> to vector<34x1xf32>
    %cst_40 = arith.constant 3.200000e+01 : f32
    %106 = vector.broadcast %cst_40 : f32 to vector<34x1xf32>
    %107 = arith.divf %105, %106 : vector<34x1xf32>
    %108 = vector.broadcast %107 : vector<34x1xf32> to vector<34x32xf32>
    %109 = arith.subf %103, %108 : vector<34x32xf32>
    %110 = arith.mulf %109, %109 : vector<34x32xf32>
    %cst_41 = arith.constant dense<0.000000e+00> : vector<34xf32>
    %111 = vector.multi_reduction <add>, %110, %cst_41 [1] : vector<34x32xf32> to vector<34xf32>
    %112 = vector.shape_cast %111 : vector<34xf32> to vector<34x1xf32>
    %cst_42 = arith.constant 3.200000e+01 : f32
    %113 = vector.broadcast %cst_42 : f32 to vector<34x1xf32>
    %114 = arith.divf %112, %113 : vector<34x1xf32>
    %115 = vector.broadcast %107 : vector<34x1xf32> to vector<34x32xf32>
    %116 = arith.subf %103, %115 : vector<34x32xf32>
    %cst_43 = arith.constant 9.99999974E-6 : f32
    %117 = vector.broadcast %cst_43 : f32 to vector<34x1xf32>
    %118 = arith.addf %114, %117 : vector<34x1xf32>
    %119 = math.rsqrt %118 : vector<34x1xf32>
    %120 = vector.broadcast %119 : vector<34x1xf32> to vector<34x32xf32>
    %121 = arith.mulf %116, %120 : vector<34x32xf32>
    %c0_44 = arith.constant 0 : index
    %c0_45 = arith.constant 0 : index
    %c0_46 = arith.constant 0 : index
    %122 = vector.load %arg6[%c0_44, %c0_45, %c0_46] : memref<2x32x64xf32, #tpu.memory_space<vmem>>, vector<1x32x64xf32>
    %123 = vector.shape_cast %122 : vector<1x32x64xf32> to vector<32x64xf32>
    %cst_47 = arith.constant dense<0.000000e+00> : vector<34x64xf32>
    %124 = tpu.matmul %121, %123, %cst_47 {dimension_numbers = #tpu.dot_dimension_numbers<[1], [0], [0], [1], [0, 0, 1, 1], [], []>} : vector<34x32xf32>, vector<32x64xf32>, vector<34x64xf32> -> vector<34x64xf32>
    %125 = vector.broadcast %31 : vector<1x64xf32> to vector<34x64xf32>
    %126 = arith.addf %124, %125 : vector<34x64xf32>
    %cst_48 = arith.constant 0.000000e+00 : f32
    %127 = vector.broadcast %cst_48 : f32 to vector<34x64xf32>
    %128 = arith.maximumf %126, %127 : vector<34x64xf32>
    %c0_49 = arith.constant 0 : index
    %c0_50 = arith.constant 0 : index
    %c0_51 = arith.constant 0 : index
    %129 = vector.load %arg7[%c0_49, %c0_50, %c0_51] : memref<2x64x32xf32, #tpu.memory_space<vmem>>, vector<1x64x32xf32>
    %130 = vector.shape_cast %129 : vector<1x64x32xf32> to vector<64x32xf32>
    %cst_52 = arith.constant dense<0.000000e+00> : vector<34x32xf32>
    %131 = tpu.matmul %128, %130, %cst_52 {dimension_numbers = #tpu.dot_dimension_numbers<[1], [0], [0], [1], [0, 0, 1, 1], [], []>} : vector<34x64xf32>, vector<64x32xf32>, vector<34x32xf32> -> vector<34x32xf32>
    %132 = arith.addf %103, %131 : vector<34x32xf32>
    %133 = vector.broadcast %32 : vector<1x32xf32> to vector<34x32xf32>
    %134 = arith.addf %132, %133 : vector<34x32xf32>
    %c1 = arith.constant 1 : index
    %c0_53 = arith.constant 0 : index
    %c0_54 = arith.constant 0 : index
    %135 = vector.load %arg8[%c1, %c0_53, %c0_54] : memref<2x4x96xf32, #tpu.memory_space<vmem>>, vector<1x4x96xf32>
    %136 = vector.shape_cast %135 : vector<1x4x96xf32> to vector<4x96xf32>
    %137 = vector.extract_strided_slice %136 {offsets = [0, 0], sizes = [1, 96], strides = [1, 1]} : vector<4x96xf32> to vector<1x96xf32>
    %138 = vector.extract_strided_slice %136 {offsets = [1, 0], sizes = [1, 32], strides = [1, 1]} : vector<4x96xf32> to vector<1x32xf32>
    %139 = vector.extract_strided_slice %136 {offsets = [2, 0], sizes = [1, 64], strides = [1, 1]} : vector<4x96xf32> to vector<1x64xf32>
    %140 = vector.extract_strided_slice %136 {offsets = [3, 0], sizes = [1, 32], strides = [1, 1]} : vector<4x96xf32> to vector<1x32xf32>
    %cst_55 = arith.constant dense<0.000000e+00> : vector<34xf32>
    %141 = vector.multi_reduction <add>, %134, %cst_55 [1] : vector<34x32xf32> to vector<34xf32>
    %142 = vector.shape_cast %141 : vector<34xf32> to vector<34x1xf32>
    %cst_56 = arith.constant 3.200000e+01 : f32
    %143 = vector.broadcast %cst_56 : f32 to vector<34x1xf32>
    %144 = arith.divf %142, %143 : vector<34x1xf32>
    %145 = vector.broadcast %144 : vector<34x1xf32> to vector<34x32xf32>
    %146 = arith.subf %134, %145 : vector<34x32xf32>
    %147 = arith.mulf %146, %146 : vector<34x32xf32>
    %cst_57 = arith.constant dense<0.000000e+00> : vector<34xf32>
    %148 = vector.multi_reduction <add>, %147, %cst_57 [1] : vector<34x32xf32> to vector<34xf32>
    %149 = vector.shape_cast %148 : vector<34xf32> to vector<34x1xf32>
    %cst_58 = arith.constant 3.200000e+01 : f32
    %150 = vector.broadcast %cst_58 : f32 to vector<34x1xf32>
    %151 = arith.divf %149, %150 : vector<34x1xf32>
    %152 = vector.broadcast %144 : vector<34x1xf32> to vector<34x32xf32>
    %153 = arith.subf %134, %152 : vector<34x32xf32>
    %cst_59 = arith.constant 9.99999974E-6 : f32
    %154 = vector.broadcast %cst_59 : f32 to vector<34x1xf32>
    %155 = arith.addf %151, %154 : vector<34x1xf32>
    %156 = math.rsqrt %155 : vector<34x1xf32>
    %157 = vector.broadcast %156 : vector<34x1xf32> to vector<34x32xf32>
    %158 = arith.mulf %153, %157 : vector<34x32xf32>
    %c1_60 = arith.constant 1 : index
    %c0_61 = arith.constant 0 : index
    %c0_62 = arith.constant 0 : index
    %159 = vector.load %arg4[%c1_60, %c0_61, %c0_62] : memref<2x32x96xf32, #tpu.memory_space<vmem>>, vector<1x32x96xf32>
    %160 = vector.shape_cast %159 : vector<1x32x96xf32> to vector<32x96xf32>
    %cst_63 = arith.constant dense<0.000000e+00> : vector<34x96xf32>
    %161 = tpu.matmul %158, %160, %cst_63 {dimension_numbers = #tpu.dot_dimension_numbers<[1], [0], [0], [1], [0, 0, 1, 1], [], []>} : vector<34x32xf32>, vector<32x96xf32>, vector<34x96xf32> -> vector<34x96xf32>
    %162 = vector.broadcast %137 : vector<1x96xf32> to vector<34x96xf32>
    %163 = arith.addf %161, %162 : vector<34x96xf32>
    %164 = vector.extract_strided_slice %163 {offsets = [0, 0], sizes = [34, 32], strides = [1, 1]} : vector<34x96xf32> to vector<34x32xf32>
    %165 = vector.extract_strided_slice %163 {offsets = [0, 32], sizes = [34, 32], strides = [1, 1]} : vector<34x96xf32> to vector<34x32xf32>
    %166 = vector.extract_strided_slice %163 {offsets = [0, 64], sizes = [34, 32], strides = [1, 1]} : vector<34x96xf32> to vector<34x32xf32>
    %cst_64 = arith.constant 0.000000e+00 : f32
    %167 = vector.broadcast %cst_64 : f32 to vector<34x32xf32>
    %168 = arith.select %10, %164, %167 : vector<34x32xi1>, vector<34x32xf32>
    %cst_65 = arith.constant 0.000000e+00 : f32
    %169 = vector.broadcast %cst_65 : f32 to vector<34x32xf32>
    %170 = arith.select %15, %164, %169 : vector<34x32xi1>, vector<34x32xf32>
    %cst_66 = arith.constant 0.000000e+00 : f32
    %171 = vector.broadcast %cst_66 : f32 to vector<34x32xf32>
    %172 = arith.select %20, %164, %171 : vector<34x32xi1>, vector<34x32xf32>
    %cst_67 = arith.constant 0.000000e+00 : f32
    %173 = vector.broadcast %cst_67 : f32 to vector<34x32xf32>
    %174 = arith.select %25, %164, %173 : vector<34x32xi1>, vector<34x32xf32>
    %175 = tpu.concatenate %168, %170, %172, %174 in 0 : vector<34x32xf32>, vector<34x32xf32>, vector<34x32xf32>, vector<34x32xf32> -> vector<136x32xf32>
    %cst_68 = arith.constant dense<0.000000e+00> : vector<136x34xf32>
    %176 = tpu.matmul %175, %165, %cst_68 {dimension_numbers = #tpu.dot_dimension_numbers<[1], [1], [0], [0], [0, 0, 1, 0], [], []>} : vector<136x32xf32>, vector<34x32xf32>, vector<136x34xf32> -> vector<136x34xf32>
    %177 = arith.addf %176, %26 : vector<136x34xf32>
    %cst_69 = arith.constant dense<0xFF800000> : vector<136xf32>
    %178 = vector.multi_reduction <maximumf>, %177, %cst_69 [1] : vector<136x34xf32> to vector<136xf32>
    %179 = vector.shape_cast %178 : vector<136xf32> to vector<136x1xf32>
    %180 = vector.broadcast %179 : vector<136x1xf32> to vector<136x34xf32>
    %181 = arith.subf %177, %180 : vector<136x34xf32>
    %182 = math.exp %181 : vector<136x34xf32>
    %cst_70 = arith.constant dense<0.000000e+00> : vector<136xf32>
    %183 = vector.multi_reduction <add>, %182, %cst_70 [1] : vector<136x34xf32> to vector<136xf32>
    %184 = vector.shape_cast %183 : vector<136xf32> to vector<136x1xf32>
    %185 = tpu.reciprocal %184 {approx = true} : vector<136x1xf32> -> vector<136x1xf32>
    %186 = vector.broadcast %185 : vector<136x1xf32> to vector<136x34xf32>
    %187 = arith.mulf %182, %186 : vector<136x34xf32>
    %cst_71 = arith.constant dense<0.000000e+00> : vector<136x32xf32>
    %188 = tpu.matmul %187, %166, %cst_71 {dimension_numbers = #tpu.dot_dimension_numbers<[1], [0], [0], [1], [0, 0, 1, 1], [], []>} : vector<136x34xf32>, vector<34x32xf32>, vector<136x32xf32> -> vector<136x32xf32>
    %cst_72 = arith.constant 0.000000e+00 : f32
    %189 = vector.broadcast %cst_72 : f32 to vector<34x32xf32>
    %190 = vector.extract_strided_slice %188 {offsets = [0, 0], sizes = [34, 32], strides = [1, 1]} : vector<136x32xf32> to vector<34x32xf32>
    %cst_73 = arith.constant 0.000000e+00 : f32
    %191 = vector.broadcast %cst_73 : f32 to vector<34x32xf32>
    %192 = arith.select %10, %190, %191 : vector<34x32xi1>, vector<34x32xf32>
    %193 = arith.addf %189, %192 : vector<34x32xf32>
    %194 = vector.extract_strided_slice %188 {offsets = [34, 0], sizes = [34, 32], strides = [1, 1]} : vector<136x32xf32> to vector<34x32xf32>
    %cst_74 = arith.constant 0.000000e+00 : f32
    %195 = vector.broadcast %cst_74 : f32 to vector<34x32xf32>
    %196 = arith.select %15, %194, %195 : vector<34x32xi1>, vector<34x32xf32>
    %197 = arith.addf %193, %196 : vector<34x32xf32>
    %198 = vector.extract_strided_slice %188 {offsets = [68, 0], sizes = [34, 32], strides = [1, 1]} : vector<136x32xf32> to vector<34x32xf32>
    %cst_75 = arith.constant 0.000000e+00 : f32
    %199 = vector.broadcast %cst_75 : f32 to vector<34x32xf32>
    %200 = arith.select %20, %198, %199 : vector<34x32xi1>, vector<34x32xf32>
    %201 = arith.addf %197, %200 : vector<34x32xf32>
    %202 = vector.extract_strided_slice %188 {offsets = [102, 0], sizes = [34, 32], strides = [1, 1]} : vector<136x32xf32> to vector<34x32xf32>
    %cst_76 = arith.constant 0.000000e+00 : f32
    %203 = vector.broadcast %cst_76 : f32 to vector<34x32xf32>
    %204 = arith.select %25, %202, %203 : vector<34x32xi1>, vector<34x32xf32>
    %205 = arith.addf %201, %204 : vector<34x32xf32>
    %c1_77 = arith.constant 1 : index
    %c0_78 = arith.constant 0 : index
    %c0_79 = arith.constant 0 : index
    %206 = vector.load %arg5[%c1_77, %c0_78, %c0_79] : memref<2x32x32xf32, #tpu.memory_space<vmem>>, vector<1x32x32xf32>
    %207 = vector.shape_cast %206 : vector<1x32x32xf32> to vector<32x32xf32>
    %cst_80 = arith.constant dense<0.000000e+00> : vector<34x32xf32>
    %208 = tpu.matmul %205, %207, %cst_80 {dimension_numbers = #tpu.dot_dimension_numbers<[1], [0], [0], [1], [0, 0, 1, 1], [], []>} : vector<34x32xf32>, vector<32x32xf32>, vector<34x32xf32> -> vector<34x32xf32>
    %209 = arith.addf %134, %208 : vector<34x32xf32>
    %210 = vector.broadcast %138 : vector<1x32xf32> to vector<34x32xf32>
    %211 = arith.addf %209, %210 : vector<34x32xf32>
    %cst_81 = arith.constant dense<0.000000e+00> : vector<34xf32>
    %212 = vector.multi_reduction <add>, %211, %cst_81 [1] : vector<34x32xf32> to vector<34xf32>
    %213 = vector.shape_cast %212 : vector<34xf32> to vector<34x1xf32>
    %cst_82 = arith.constant 3.200000e+01 : f32
    %214 = vector.broadcast %cst_82 : f32 to vector<34x1xf32>
    %215 = arith.divf %213, %214 : vector<34x1xf32>
    %216 = vector.broadcast %215 : vector<34x1xf32> to vector<34x32xf32>
    %217 = arith.subf %211, %216 : vector<34x32xf32>
    %218 = arith.mulf %217, %217 : vector<34x32xf32>
    %cst_83 = arith.constant dense<0.000000e+00> : vector<34xf32>
    %219 = vector.multi_reduction <add>, %218, %cst_83 [1] : vector<34x32xf32> to vector<34xf32>
    %220 = vector.shape_cast %219 : vector<34xf32> to vector<34x1xf32>
    %cst_84 = arith.constant 3.200000e+01 : f32
    %221 = vector.broadcast %cst_84 : f32 to vector<34x1xf32>
    %222 = arith.divf %220, %221 : vector<34x1xf32>
    %223 = vector.broadcast %215 : vector<34x1xf32> to vector<34x32xf32>
    %224 = arith.subf %211, %223 : vector<34x32xf32>
    %cst_85 = arith.constant 9.99999974E-6 : f32
    %225 = vector.broadcast %cst_85 : f32 to vector<34x1xf32>
    %226 = arith.addf %222, %225 : vector<34x1xf32>
    %227 = math.rsqrt %226 : vector<34x1xf32>
    %228 = vector.broadcast %227 : vector<34x1xf32> to vector<34x32xf32>
    %229 = arith.mulf %224, %228 : vector<34x32xf32>
    %c1_86 = arith.constant 1 : index
    %c0_87 = arith.constant 0 : index
    %c0_88 = arith.constant 0 : index
    %230 = vector.load %arg6[%c1_86, %c0_87, %c0_88] : memref<2x32x64xf32, #tpu.memory_space<vmem>>, vector<1x32x64xf32>
    %231 = vector.shape_cast %230 : vector<1x32x64xf32> to vector<32x64xf32>
    %cst_89 = arith.constant dense<0.000000e+00> : vector<34x64xf32>
    %232 = tpu.matmul %229, %231, %cst_89 {dimension_numbers = #tpu.dot_dimension_numbers<[1], [0], [0], [1], [0, 0, 1, 1], [], []>} : vector<34x32xf32>, vector<32x64xf32>, vector<34x64xf32> -> vector<34x64xf32>
    %233 = vector.broadcast %139 : vector<1x64xf32> to vector<34x64xf32>
    %234 = arith.addf %232, %233 : vector<34x64xf32>
    %cst_90 = arith.constant 0.000000e+00 : f32
    %235 = vector.broadcast %cst_90 : f32 to vector<34x64xf32>
    %236 = arith.maximumf %234, %235 : vector<34x64xf32>
    %c1_91 = arith.constant 1 : index
    %c0_92 = arith.constant 0 : index
    %c0_93 = arith.constant 0 : index
    %237 = vector.load %arg7[%c1_91, %c0_92, %c0_93] : memref<2x64x32xf32, #tpu.memory_space<vmem>>, vector<1x64x32xf32>
    %238 = vector.shape_cast %237 : vector<1x64x32xf32> to vector<64x32xf32>
    %cst_94 = arith.constant dense<0.000000e+00> : vector<34x32xf32>
    %239 = tpu.matmul %236, %238, %cst_94 {dimension_numbers = #tpu.dot_dimension_numbers<[1], [0], [0], [1], [0, 0, 1, 1], [], []>} : vector<34x64xf32>, vector<64x32xf32>, vector<34x32xf32> -> vector<34x32xf32>
    %240 = arith.addf %211, %239 : vector<34x32xf32>
    %241 = vector.broadcast %140 : vector<1x32xf32> to vector<34x32xf32>
    %242 = arith.addf %240, %241 : vector<34x32xf32>
    %243 = vector.extract_strided_slice %242 {offsets = [0, 0], sizes = [1, 32], strides = [1, 1]} : vector<34x32xf32> to vector<1x32xf32>
    %244 = vector.extract_strided_slice %242 {offsets = [17, 0], sizes = [1, 32], strides = [1, 1]} : vector<34x32xf32> to vector<1x32xf32>
    %245 = tpu.concatenate %243, %244 in 0 : vector<1x32xf32>, vector<1x32xf32> -> vector<2x32xf32>
    %cst_95 = arith.constant dense<0.000000e+00> : vector<2xf32>
    %246 = vector.multi_reduction <add>, %245, %cst_95 [1] : vector<2x32xf32> to vector<2xf32>
    %247 = vector.shape_cast %246 : vector<2xf32> to vector<2x1xf32>
    %cst_96 = arith.constant 3.200000e+01 : f32
    %248 = vector.broadcast %cst_96 : f32 to vector<2x1xf32>
    %249 = arith.divf %247, %248 : vector<2x1xf32>
    %250 = vector.broadcast %249 : vector<2x1xf32> to vector<2x32xf32>
    %251 = arith.subf %245, %250 : vector<2x32xf32>
    %252 = arith.mulf %251, %251 : vector<2x32xf32>
    %cst_97 = arith.constant dense<0.000000e+00> : vector<2xf32>
    %253 = vector.multi_reduction <add>, %252, %cst_97 [1] : vector<2x32xf32> to vector<2xf32>
    %254 = vector.shape_cast %253 : vector<2xf32> to vector<2x1xf32>
    %cst_98 = arith.constant 3.200000e+01 : f32
    %255 = vector.broadcast %cst_98 : f32 to vector<2x1xf32>
    %256 = arith.divf %254, %255 : vector<2x1xf32>
    %257 = vector.broadcast %249 : vector<2x1xf32> to vector<2x32xf32>
    %258 = arith.subf %245, %257 : vector<2x32xf32>
    %cst_99 = arith.constant 9.99999974E-6 : f32
    %259 = vector.broadcast %cst_99 : f32 to vector<2x1xf32>
    %260 = arith.addf %256, %259 : vector<2x1xf32>
    %261 = math.rsqrt %260 : vector<2x1xf32>
    %262 = vector.broadcast %261 : vector<2x1xf32> to vector<2x32xf32>
    %263 = arith.mulf %258, %262 : vector<2x32xf32>
    %c0_100 = arith.constant 0 : index
    %c0_101 = arith.constant 0 : index
    %264 = vector.load %arg9[%c0_100, %c0_101] : memref<33x128xf32, #tpu.memory_space<vmem>>, vector<32x128xf32>
    %cst_102 = arith.constant dense<0.000000e+00> : vector<2x128xf32>
    %265 = tpu.matmul %263, %264, %cst_102 {dimension_numbers = #tpu.dot_dimension_numbers<[1], [0], [0], [1], [0, 0, 1, 1], [], []>} : vector<2x32xf32>, vector<32x128xf32>, vector<2x128xf32> -> vector<2x128xf32>
    %c32 = arith.constant 32 : index
    %c0_103 = arith.constant 0 : index
    %266 = vector.load %arg9[%c32, %c0_103] : memref<33x128xf32, #tpu.memory_space<vmem>>, vector<1x128xf32>
    %267 = vector.broadcast %266 : vector<1x128xf32> to vector<2x128xf32>
    %268 = arith.addf %265, %267 : vector<2x128xf32>
    %c0_104 = arith.constant 0 : index
    %c0_105 = arith.constant 0 : index
    %269 = vector.load %arg10[%c0_104, %c0_105] : memref<2x128xf32, #tpu.memory_space<vmem>>, vector<2x128xf32>
    tpu.vector_store %arg10[%c0_104, %c0_105], %268 {strides = array<i32>} : memref<2x128xf32, #tpu.memory_space<vmem>>, vector<2x128xf32>,
    return
  }
}

</mosaic_0001>

<llo_original>
// kernel: tpu_custom_call.1
$region0: #{tpu_custom_call.1}
  #allocation0 [shape = 'u32[]', space=smem, size = 0x4, offset = 0x4, fixed_abs, tag = 'smem constant byte address 0x4 - core index']
  #allocation1 [shape = 'u32[144,128]{1,0:T(1,128)}', space=vmem, size = 0x12000, scoped, tag = 'internal scratch']
  %s0 = inlined_call_operand.vmem [shape: f32[34,64], index: 0, kind: input, shape index: {}]
  %s1 = inlined_call_operand.vmem [shape: f32[64,32], index: 1, kind: input, shape index: {}]
  %s2 = inlined_call_operand.vmem [shape: f32[34,32], index: 2, kind: input, shape index: {}]
  %s3 = inlined_call_operand.vmem [shape: f32[136,34], index: 3, kind: input, shape index: {}]
  %s4 = inlined_call_operand.vmem [shape: f32[2,32,96], index: 4, kind: input, shape index: {}]
  %s5 = inlined_call_operand.vmem [shape: f32[2,32,32], index: 5, kind: input, shape index: {}]
  %s6 = inlined_call_operand.vmem [shape: f32[2,32,64], index: 6, kind: input, shape index: {}]
  %s7 = inlined_call_operand.vmem [shape: f32[2,64,32], index: 7, kind: input, shape index: {}]
  %s8 = inlined_call_operand.vmem [shape: f32[2,4,96], index: 8, kind: input, shape index: {}]
  %s9 = inlined_call_operand.vmem [shape: f32[33,128], index: 9, kind: input, shape index: {}]
  %s10 = inlined_call_operand.hbm [shape: f32[2,128], index: 10, kind: output, shape index: {}]
  %s11 = sld [smem:[#allocation0]]
  $region50: #{tpu_custom_call.1} parent=0
    _
  %s13 = ssub.s32 1, %s11
  %s14 = scalar_select 0, %s13, %s11
  $region1: #{tpu_custom_call.1} parent=0
    #allocation2 [shape = 'u8[1024]{0}', space=vmem, size = 0x400, scoped, tag = 'output window, operand 0, single buffered']
    #allocation3 [shape = 's32[1]{0}', space=sflag, size = 0x4, scoped, tag = 'scoped memory for tpu_custom_call.1']
    %15 = vsyncpa [#allocation3], 0
    // Predicated region
    $region2: #{tpu_custom_call.1} parent=1 // pred_check
      _
    $region3: #{tpu_custom_call.1} parent=1 // pred_check_branch
      %17 = sbr.rel (0) target = $region5
    $region4: #{tpu_custom_call.1} parent=1 // pred_region
      _
    $region5: #{tpu_custom_call.1} parent=1 // pred_fallthru
      _
    // Predicated region
    $region6: #{tpu_custom_call.1} parent=1 // pred_check
      _
    $region7: #{tpu_custom_call.1} parent=1 // pred_check_branch
      %19 = sbr.rel (0) target = $region9
    $region8: #{tpu_custom_call.1} parent=1 // pred_region
      _
    $region9: #{tpu_custom_call.1} parent=1 // pred_fallthru
      _
    // Predicated region
    $region10: #{tpu_custom_call.1} parent=1 // pred_check
      _
    $region11: #{tpu_custom_call.1} parent=1 // pred_check_branch
      %21 = sbr.rel (0) target = $region13
    $region12: #{tpu_custom_call.1} parent=1 // pred_region
      _
    $region13: #{tpu_custom_call.1} parent=1 // pred_fallthru
      _
    // Predicated region
    $region14: #{tpu_custom_call.1} parent=1 // pred_check
      _
    $region15: #{tpu_custom_call.1} parent=1 // pred_check_branch
      %23 = sbr.rel (0) target = $region17
    $region16: #{tpu_custom_call.1} parent=1 // pred_region
      _
    $region17: #{tpu_custom_call.1} parent=1 // pred_fallthru
      _
    // Predicated region
    $region18: #{tpu_custom_call.1} parent=1 // pred_check
      _
    $region19: #{tpu_custom_call.1} parent=1 // pred_check_branch
      %25 = sbr.rel (0) target = $region21
    $region20: #{tpu_custom_call.1} parent=1 // pred_region
      _
    $region21: #{tpu_custom_call.1} parent=1 // pred_fallthru
      _
    // Predicated region
    $region22: #{tpu_custom_call.1} parent=1 // pred_check
      _
    $region23: #{tpu_custom_call.1} parent=1 // pred_check_branch
      %27 = sbr.rel (0) target = $region25
    $region24: #{tpu_custom_call.1} parent=1 // pred_region
      _
    $region25: #{tpu_custom_call.1} parent=1 // pred_fallthru
      _
    // Predicated region
    $region26: #{tpu_custom_call.1} parent=1 // pred_check
      _
    $region27: #{tpu_custom_call.1} parent=1 // pred_check_branch
      %29 = sbr.rel (0) target = $region29
    $region28: #{tpu_custom_call.1} parent=1 // pred_region
      _
    $region29: #{tpu_custom_call.1} parent=1 // pred_fallthru
      _
    // Predicated region
    $region30: #{tpu_custom_call.1} parent=1 // pred_check
      _
    $region31: #{tpu_custom_call.1} parent=1 // pred_check_branch
      %31 = sbr.rel (0) target = $region33
    $region32: #{tpu_custom_call.1} parent=1 // pred_region
      _
    $region33: #{tpu_custom_call.1} parent=1 // pred_fallthru
      _
    // Predicated region
    $region34: #{tpu_custom_call.1} parent=1 // pred_check
      _
    $region35: #{tpu_custom_call.1} parent=1 // pred_check_branch
      %33 = sbr.rel (0) target = $region37
    $region36: #{tpu_custom_call.1} parent=1 // pred_region
      _
    $region37: #{tpu_custom_call.1} parent=1 // pred_fallthru
      _
    // Predicated region
    $region38: #{tpu_custom_call.1} parent=1 // pred_check
      _
    $region39: #{tpu_custom_call.1} parent=1 // pred_check_branch
      %35 = sbr.rel (0) target = $region41
    $region40: #{tpu_custom_call.1} parent=1 // pred_region
      _
    $region41: #{tpu_custom_call.1} parent=1 // pred_fallthru
      _
    %v36 = vld [vmem:[%s0] sm:$0xff]
    %v37 = vld [vmem:[%s0 + $0x8] sm:$0xff]
    %v38 = vld [vmem:[%s0 + $0x10] sm:$0xff]
    %v39 = vld [vmem:[%s0 + $0x18] sm:$0xff]
    %v40 = vld [vmem:[%s0 + $0x20] sm:$0x3]
    %v41 = vld [vmem:[%s1] sm:$0xff]
    %v42 = vld [vmem:[%s1 + $0x8] sm:$0xff]
    %v43 = vld [vmem:[%s1 + $0x10] sm:$0xff]
    %v44 = vld [vmem:[%s1 + $0x18] sm:$0xff]
    %v45 = vld [vmem:[%s1 + $0x20] sm:$0xff]
    %v46 = vld [vmem:[%s1 + $0x28] sm:$0xff]
    %v47 = vld [vmem:[%s1 + $0x30] sm:$0xff]
    %v48 = vld [vmem:[%s1 + $0x38] sm:$0xff]
    %v49 = vld [vmem:[%s2] sm:$0xff]
    %v50 = vld [vmem:[%s2 + $0x8] sm:$0xff]
    %v51 = vld [vmem:[%s2 + $0x10] sm:$0xff]
    %v52 = vld [vmem:[%s2 + $0x18] sm:$0xff]
    %v53 = vld [vmem:[%s2 + $0x20] sm:$0x3]
    %vm54 = vcmask 523264
    %v56 = vsel %vm54, %v36, 0
    %v59 = vsel %vm54, %v37, 0
    %v62 = vsel %vm54, %v38, 0
    %v65 = vsel %vm54, %v39, 0
    %v68 = vsel %vm54, %v40, 0
    %70 = vmatprep.subr.mxu0 0.0
    %71 = vmatpush1.msra.mxu0 %v41
    %72 = vmatprep.subr.mxu0 0.0
    %73 = vmatpush1.msra.mxu0 %v42
    %74 = vmatprep.subr.mxu0 0.0
    %75 = vmatpush1.msra.mxu0 %v43
    %76 = vmatprep.subr.mxu0 0.0
    %77 = vmatpush1.msra.mxu0 %v44
    %78 = vmatprep.subr.mxu0 0.0
    %79 = vmatpush1.msra.mxu0 %v45
    %80 = vmatprep.subr.mxu0 0.0
    %81 = vmatpush1.msra.mxu0 %v46
    %82 = vmatprep.subr.mxu0 0.0
    %83 = vmatpush1.msra.mxu0 %v47
    %84 = vmatprep.subr.mxu0 0.0
    %85 = vmatpush1.msra.mxu0 %v48
    %86 = vmatprep.subr.mxu0 0.0
    %87 = vmatpush1.msra.mxu0 0.0
    %88 = vmatprep.subr.mxu0 0.0
    %89 = vmatpush1.msra.mxu0 0.0
    %90 = vmatprep.subr.mxu0 0.0
    %91 = vmatpush1.msra.mxu0 0.0
    %92 = vmatprep.subr.mxu0 0.0
    %93 = vmatpush1.msra.mxu0 0.0
    %94 = vmatprep.subr.mxu0 0.0
    %95 = vmatpush1.msra.mxu0 0.0
    %96 = vmatprep.subr.mxu0 0.0
    %97 = vmatpush1.msra.mxu0 0.0
    %98 = vmatprep.subr.mxu0 0.0
    %99 = vmatpush1.msra.mxu0 0.0
    %100 = vmatprep.subr.mxu0 0.0
    %101 = vmatpush1.msra.mxu0 0.0
    %102 = vmatprep.subr.mxu0 0.0
    %103 = vmatpush1.msra.mxu0 0.0
    %104 = vmatprep.subr.mxu0 0.0
    %105 = vmatpush1.msra.mxu0 0.0
    %106 = vmatprep.subr.mxu0 0.0
    %107 = vmatpush1.msra.mxu0 0.0
    %108 = vmatprep.subr.mxu0 0.0
    %109 = vmatpush1.msra.mxu0 0.0
    %110 = vmatprep.subr.mxu0 0.0
    %111 = vmatpush1.msra.mxu0 0.0
    %112 = vmatprep.subr.mxu0 0.0
    %113 = vmatpush1.msra.mxu0 0.0
    %114 = vmatprep.subr.mxu0 0.0
    %115 = vmatpush1.msra.mxu0 0.0
    %116 = vmatprep.subr.mxu0 0.0
    %117 = vmatpush1.msra.mxu0 0.0
    %118 = vmatprep.subr.mxu0 0.0
    %119 = vmatpush1.msra.mxu0 0.0
    %120 = vmatprep.subr.mxu0 0.0
    %121 = vmatpush1.msra.mxu0 0.0
    %122 = vmatprep.subr.mxu0 0.0
    %123 = vmatpush1.msra.mxu0 0.0
    %124 = vmatprep.subr.mxu0 0.0
    %125 = vmatpush1.msra.mxu0 0.0
    %126 = vmatprep.subr.mxu0 0.0
    %127 = vmatpush1.msra.mxu0 0.0
    %128 = vmatprep.subr.mxu0 0.0
    %129 = vmatpush1.msra.mxu0 0.0
    %130 = vmatprep.subr.mxu0 0.0
    %131 = vmatpush1.msra.mxu0 0.0
    %132 = vmatprep.subr.mxu0 0.0
    %133 = vmatpush1.msra.mxu0 0.0
    %134 = vmatprep.mubr.f32.mxu0 0.0
    %135 = vmatmul.mubr.f32.gmra.mrb[0].mxu0 %v56
    %v136 = vpop.f32.mrb[0].mxu0
    %v137 = vadd.f32 %v49, %v136
    %v138 = vpop.f32.mrb[0].mxu0
    %139 = vmatprep.mubr.f32.mxu0 0.0
    %140 = vmatmul.mubr.f32.gmra.mrb[0].mxu0 %v59
    %v141 = vpop.f32.mrb[0].mxu0
    %v142 = vadd.f32 %v50, %v141
    %v143 = vpop.f32.mrb[0].mxu0
    %144 = vmatprep.mubr.f32.mxu0 0.0
    %145 = vmatmul.mubr.f32.gmra.mrb[0].mxu0 %v62
    %v146 = vpop.f32.mrb[0].mxu0
    %v147 = vadd.f32 %v51, %v146
    %v148 = vpop.f32.mrb[0].mxu0
    %149 = vmatprep.mubr.f32.mxu0 0.0
    %150 = vmatmul.mubr.f32.gmra.mrb[0].mxu0 %v65
    %v151 = vpop.f32.mrb[0].mxu0
    %v152 = vadd.f32 %v52, %v151
    %v153 = vpop.f32.mrb[0].mxu0
    %154 = vmatprep.mubr.f32.mxu0 0.0
    %155 = vmatmul.mubr.f32.gmra.mrb[0].mxu0 %v68
    %v156 = vpop.f32.mrb[0].mxu0
    %v157 = vadd.f32 %v53, %v156
    %v158 = vpop.f32.mrb[0].mxu0
    %159 = vdwg.mxu0
    %v160 = vlaneseq
    %v161 = vand.u32 %v160, 127
    %vm162 = vcmp.ge.s32.totalorder %v161, 0
    %vm163 = vcmp.lt.s32.totalorder %v161, 8
    %vm164 = vmand %vm162, %vm163
    %vm165 = vcmp.ge.s32.totalorder %v161, 8
    %vm166 = vcmp.lt.s32.totalorder %v161, 16
    %vm167 = vmand %vm165, %vm166
    %vm168 = vcmp.ge.s32.totalorder %v161, 16
    %vm169 = vcmp.lt.s32.totalorder %v161, 24
    %vm170 = vmand %vm168, %vm169
    %vm171 = vcmp.ge.s32.totalorder %v161, 24
    %vm172 = vcmp.lt.s32.totalorder %v161, 32
    %vm173 = vmand %vm171, %vm172
    %v174 = vld [vmem:[%s3] sm:$0xff]
    %v175 = vld [vmem:[%s3 + $0x8] sm:$0xff]
    %v176 = vld [vmem:[%s3 + $0x10] sm:$0xff]
    %v177 = vld [vmem:[%s3 + $0x18] sm:$0xff]
    %v178 = vld [vmem:[%s3 + $0x20] sm:$0xff]
    %v179 = vld [vmem:[%s3 + $0x28] sm:$0xff]
    %v180 = vld [vmem:[%s3 + $0x30] sm:$0xff]
    %v181 = vld [vmem:[%s3 + $0x38] sm:$0xff]
    %v182 = vld [vmem:[%s3 + $0x40] sm:$0xff]
    %v183 = vld [vmem:[%s3 + $0x48] sm:$0xff]
    %v184 = vld [vmem:[%s3 + $0x50] sm:$0xff]
    %v185 = vld [vmem:[%s3 + $0x58] sm:$0xff]
    %v186 = vld [vmem:[%s3 + $0x60] sm:$0xff]
    %v187 = vld [vmem:[%s3 + $0x68] sm:$0xff]
    %v188 = vld [vmem:[%s3 + $0x70] sm:$0xff]
    %v189 = vld [vmem:[%s3 + $0x78] sm:$0xff]
    %v190 = vld [vmem:[%s3 + $0x80] sm:$0xff]
    %v191 = vld [vmem:[%s8] sm:$0xf]
    %vm192 = vcmask 261120
    %v193 = vsel %vm192, %v137, 0.0
    %194 = vadd.xlane.f32.xlu0 %v193
    %v195 = vpop.xlane.xlu0 %194
    %v196 = vsel %vm192, %v142, 0.0
    %197 = vadd.xlane.f32.xlu0 %v196
    %v198 = vpop.xlane.xlu0 %197
    %v199 = vsel %vm192, %v147, 0.0
    %200 = vadd.xlane.f32.xlu0 %v199
    %v201 = vpop.xlane.xlu0 %200
    %v202 = vsel %vm192, %v152, 0.0
    %203 = vadd.xlane.f32.xlu0 %v202
    %v204 = vpop.xlane.xlu0 %203
    %vm205 = vcmask 254976
    %v206 = vsel %vm205, %v157, 0.0
    %207 = vadd.xlane.f32.xlu0 %v206
    %v208 = vpop.xlane.xlu0 %207
    %v209 = vrcp.pop 32.0
    %v210 = vmul.f32 %v195, %v209
    %v211 = vmul.f32 %v198, %v209
    %v212 = vmul.f32 %v201, %v209
    %v213 = vmul.f32 %v204, %v209
    %v214 = vmul.f32 %v208, %v209
    %v215 = vsub.f32 %v137, %v210
    %v216 = vsub.f32 %v142, %v211
    %v217 = vsub.f32 %v147, %v212
    %v218 = vsub.f32 %v152, %v213
    %v219 = vsub.f32 %v157, %v214
    %v220 = vmul.f32 %v215, %v215
    %v221 = vmul.f32 %v216, %v216
    %v222 = vmul.f32 %v217, %v217
    %v223 = vmul.f32 %v218, %v218
    %v224 = vmul.f32 %v219, %v219
    %v225 = vsel %vm192, %v220, 0.0
    %226 = vadd.xlane.f32.xlu0 %v225
    %v227 = vpop.xlane.xlu0 %226
    %v228 = vsel %vm192, %v221, 0.0
    %229 = vadd.xlane.f32.xlu0 %v228
    %v230 = vpop.xlane.xlu0 %229
    %v231 = vsel %vm192, %v222, 0.0
    %232 = vadd.xlane.f32.xlu0 %v231
    %v233 = vpop.xlane.xlu0 %232
    %v234 = vsel %vm192, %v223, 0.0
    %235 = vadd.xlane.f32.xlu0 %v234
    %v236 = vpop.xlane.xlu0 %235
    %v237 = vsel %vm205, %v224, 0.0
    %238 = vadd.xlane.f32.xlu0 %v237
    %v239 = vpop.xlane.xlu0 %238
    %v240 = vmul.f32 %v227, %v209
    %v241 = vmul.f32 %v230, %v209
    %v242 = vmul.f32 %v233, %v209
    %v243 = vmul.f32 %v236, %v209
    %v244 = vmul.f32 %v239, %v209
    %v245 = vadd.f32 %v240, 1e-05
    %v246 = vadd.f32 %v241, 1e-05
    %v247 = vadd.f32 %v242, 1e-05
    %v248 = vadd.f32 %v243, 1e-05
    %v249 = vadd.f32 %v244, 1e-05
    %v250 = vrsqrt.pop %v245
    %v251 = vrsqrt.pop %v246
    %v252 = vrsqrt.pop %v247
    %v253 = vrsqrt.pop %v248
    %v254 = vrsqrt.pop %v249
    %v255 = vmul.f32 %v215, %v250
    %v256 = vmul.f32 %v216, %v251
    %v257 = vmul.f32 %v217, %v252
    %v258 = vmul.f32 %v218, %v253
    %v259 = vmul.f32 %v219, %v254
    %v260 = vld [vmem:[%s4] sm:$0xff]
    %v261 = vld [vmem:[%s4 + $0x8] sm:$0xff]
    %v262 = vld [vmem:[%s4 + $0x10] sm:$0xff]
    %v263 = vld [vmem:[%s4 + $0x18] sm:$0xff]
    %v264 = vlaneseq
    %v265 = vshrl.u32 %v264, 7
    %v266 = vsub.s32 0, %v265
    %v267 = vrot.slane %v191, %v266
    %v269 = vsel %vm192, %v255, 0
    %v272 = vsel %vm192, %v256, 0
    %v275 = vsel %vm192, %v257, 0
    %v278 = vsel %vm192, %v258, 0
    %v281 = vsel %vm192, %v259, 0
    %283 = vmatprep.subr.mxu0 0.0
    %284 = vmatpush1.msra.mxu0 %v260
    %285 = vmatprep.subr.mxu0 0.0
    %286 = vmatpush1.msra.mxu0 %v261
    %287 = vmatprep.subr.mxu0 0.0
    %288 = vmatpush1.msra.mxu0 %v262
    %289 = vmatprep.subr.mxu0 0.0
    %290 = vmatpush1.msra.mxu0 %v263
    %291 = vmatprep.subr.mxu0 0.0
    %292 = vmatpush1.msra.mxu0 0.0
    %293 = vmatprep.subr.mxu0 0.0
    %294 = vmatpush1.msra.mxu0 0.0
    %295 = vmatprep.subr.mxu0 0.0
    %296 = vmatpush1.msra.mxu0 0.0
    %297 = vmatprep.subr.mxu0 0.0
    %298 = vmatpush1.msra.mxu0 0.0
    %299 = vmatprep.subr.mxu0 0.0
    %300 = vmatpush1.msra.mxu0 0.0
    %301 = vmatprep.subr.mxu0 0.0
    %302 = vmatpush1.msra.mxu0 0.0
    %303 = vmatprep.subr.mxu0 0.0
    %304 = vmatpush1.msra.mxu0 0.0
    %305 = vmatprep.subr.mxu0 0.0
    %306 = vmatpush1.msra.mxu0 0.0
    %307 = vmatprep.subr.mxu0 0.0
    %308 = vmatpush1.msra.mxu0 0.0
    %309 = vmatprep.subr.mxu0 0.0
    %310 = vmatpush1.msra.mxu0 0.0
    %311 = vmatprep.subr.mxu0 0.0
    %312 = vmatpush1.msra.mxu0 0.0
    %313 = vmatprep.subr.mxu0 0.0
    %314 = vmatpush1.msra.mxu0 0.0
    %315 = vmatprep.subr.mxu0 0.0
    %316 = vmatpush1.msra.mxu0 0.0
    %317 = vmatprep.subr.mxu0 0.0
    %318 = vmatpush1.msra.mxu0 0.0
    %319 = vmatprep.subr.mxu0 0.0
    %320 = vmatpush1.msra.mxu0 0.0
    %321 = vmatprep.subr.mxu0 0.0
    %322 = vmatpush1.msra.mxu0 0.0
    %323 = vmatprep.subr.mxu0 0.0
    %324 = vmatpush1.msra.mxu0 0.0
    %325 = vmatprep.subr.mxu0 0.0
    %326 = vmatpush1.msra.mxu0 0.0
    %327 = vmatprep.subr.mxu0 0.0
    %328 = vmatpush1.msra.mxu0 0.0
    %329 = vmatprep.subr.mxu0 0.0
    %330 = vmatpush1.msra.mxu0 0.0
    %331 = vmatprep.subr.mxu0 0.0
    %332 = vmatpush1.msra.mxu0 0.0
    %333 = vmatprep.subr.mxu0 0.0
    %334 = vmatpush1.msra.mxu0 0.0
    %335 = vmatprep.subr.mxu0 0.0
    %336 = vmatpush1.msra.mxu0 0.0
    %337 = vmatprep.subr.mxu0 0.0
    %338 = vmatpush1.msra.mxu0 0.0
    %339 = vmatprep.subr.mxu0 0.0
    %340 = vmatpush1.msra.mxu0 0.0
    %341 = vmatprep.subr.mxu0 0.0
    %342 = vmatpush1.msra.mxu0 0.0
    %343 = vmatprep.subr.mxu0 0.0
    %344 = vmatpush1.msra.mxu0 0.0
    %345 = vmatprep.subr.mxu0 0.0
    %346 = vmatpush1.msra.mxu0 0.0
    %347 = vmatprep.mubr.f32.mxu0 0.0
    %348 = vmatmul.mubr.f32.gmra.mrb[0].mxu0 %v269
    %v349 = vpop.f32.mrb[0].mxu0
    %v350 = vadd.f32 %v267, %v349
    %v351 = vpop.f32.mrb[0].mxu0
    %352 = vmatprep.mubr.f32.mxu0 0.0
    %353 = vmatmul.mubr.f32.gmra.mrb[0].mxu0 %v272
    %v354 = vpop.f32.mrb[0].mxu0
    %v355 = vadd.f32 %v267, %v354
    %v356 = vpop.f32.mrb[0].mxu0
    %357 = vmatprep.mubr.f32.mxu0 0.0
    %358 = vmatmul.mubr.f32.gmra.mrb[0].mxu0 %v275
    %v359 = vpop.f32.mrb[0].mxu0
    %v360 = vadd.f32 %v267, %v359
    %v361 = vpop.f32.mrb[0].mxu0
    %362 = vmatprep.mubr.f32.mxu0 0.0
    %363 = vmatmul.mubr.f32.gmra.mrb[0].mxu0 %v278
    %v364 = vpop.f32.mrb[0].mxu0
    %v365 = vadd.f32 %v267, %v364
    %v366 = vpop.f32.mrb[0].mxu0
    %367 = vmatprep.mubr.f32.mxu0 0.0
    %368 = vmatmul.mubr.f32.gmra.mrb[0].mxu0 %v281
    %v369 = vpop.f32.mrb[0].mxu0
    %v370 = vadd.f32 %v267, %v369
    %v371 = vpop.f32.mrb[0].mxu0
    %372 = vdwg.mxu0
    %v373 = vsel %vm164, %v350, 0.0
    %v374 = vsel %vm164, %v355, 0.0
    %v375 = vsel %vm164, %v360, 0.0
    %v376 = vsel %vm164, %v365, 0.0
    %v377 = vsel %vm164, %v370, 0.0
    %v378 = vsel %vm167, %v350, 0.0
    %v379 = vsel %vm167, %v355, 0.0
    %v380 = vsel %vm167, %v360, 0.0
    %v381 = vsel %vm167, %v365, 0.0
    %v382 = vsel %vm167, %v370, 0.0
    %v383 = vsel %vm170, %v350, 0.0
    %v384 = vsel %vm170, %v355, 0.0
    %v385 = vsel %vm170, %v360, 0.0
    %v386 = vsel %vm170, %v365, 0.0
    %v387 = vsel %vm170, %v370, 0.0
    %v388 = vsel %vm173, %v350, 0.0
    %v389 = vsel %vm173, %v355, 0.0
    %v390 = vsel %vm173, %v360, 0.0
    %v391 = vsel %vm173, %v365, 0.0
    %v392 = vsel %vm173, %v370, 0.0
    %vm398 = vcmask 1041408
    %v399 = vrot.slane %v378, 6
    %v400 = vrot.slane %v379, 6
    %v401 = vsel %vm398, %v399, %v400
    %v402 = vrot.slane %v380, 6
    %v403 = vsel %vm398, %v400, %v402
    %v404 = vrot.slane %v381, 6
    %v405 = vsel %vm398, %v402, %v404
    %v406 = vrot.slane %v382, 6
    %v407 = vsel %vm398, %v404, %v406
    %vm415 = vcmask 1043456
    %v416 = vrot.slane %v383, 4
    %v417 = vrot.slane %v384, 4
    %v418 = vsel %vm415, %v416, %v417
    %v419 = vrot.slane %v385, 4
    %v420 = vsel %vm415, %v417, %v419
    %v421 = vrot.slane %v386, 4
    %v422 = vsel %vm415, %v419, %v421
    %v423 = vrot.slane %v387, 4
    %v424 = vsel %vm415, %v421, %v423
    %vm432 = vcmask 1045504
    %v433 = vrot.slane %v388, 2
    %v434 = vrot.slane %v389, 2
    %v435 = vsel %vm432, %v433, %v434
    %v436 = vrot.slane %v390, 2
    %v437 = vsel %vm432, %v434, %v436
    %v438 = vrot.slane %v391, 2
    %v439 = vsel %vm432, %v436, %v438
    %v440 = vrot.slane %v392, 2
    %v441 = vsel %vm432, %v438, %v440
    %v443 = vsel %vm398, %v377, %v399
    %v444 = vsel %vm415, %v407, %v416
    %v445 = vsel %vm432, %v424, %v433
    %451 = vrot.lane.b32.xlu0 %v350, 96
    %v452 = vpop.permute.xlu0 %451
    %453 = vrot.lane.b32.xlu0 %v355, 96
    %v454 = vpop.permute.xlu0 %453
    %455 = vrot.lane.b32.xlu0 %v360, 96
    %v456 = vpop.permute.xlu0 %455
    %457 = vrot.lane.b32.xlu0 %v365, 96
    %v458 = vpop.permute.xlu0 %457
    %459 = vrot.lane.b32.xlu0 %v370, 96
    %v460 = vpop.permute.xlu0 %459
    %v462 = vsel %vm192, %v373, 0
    %v465 = vsel %vm192, %v374, 0
    %v468 = vsel %vm192, %v375, 0
    %v471 = vsel %vm192, %v376, 0
    %v474 = vsel %vm192, %v443, 0
    %v476 = vsel %vm192, %v401, 0
    %v478 = vsel %vm192, %v403, 0
    %v480 = vsel %vm192, %v405, 0
    %v483 = vsel %vm192, %v444, 0
    %v485 = vsel %vm192, %v418, 0
    %v487 = vsel %vm192, %v420, 0
    %v489 = vsel %vm192, %v422, 0
    %v492 = vsel %vm192, %v445, 0
    %v494 = vsel %vm192, %v435, 0
    %v496 = vsel %vm192, %v437, 0
    %v498 = vsel %vm192, %v439, 0
    %v500 = vsel %vm192, %v441, 0
    %v502 = vsel %vm192, %v452, 0
    %v504 = vsel %vm192, %v454, 0
    %v506 = vsel %vm192, %v456, 0
    %v508 = vsel %vm192, %v458, 0
    %v510 = vsel %vm192, %v460, 0
    %512 = vmatprep.subr.mxu0 0.0
    %513 = vmatpush1.xpose.msra.mxu0 %v502
    %514 = vmatprep.subr.mxu0 0.0
    %515 = vmatpush1.xpose.msra.mxu0 %v504
    %516 = vmatprep.subr.mxu0 0.0
    %517 = vmatpush1.xpose.msra.mxu0 %v506
    %518 = vmatprep.subr.mxu0 0.0
    %519 = vmatpush1.xpose.msra.mxu0 %v508
    %520 = vmatprep.subr.mxu0 0.0
    %521 = vmatpush1.xpose.msra.mxu0 %v510
    %522 = vmatprep.subr.mxu0 0.0
    %523 = vmatpush1.xpose.msra.mxu0 0.0
    %524 = vmatprep.subr.mxu0 0.0
    %525 = vmatpush1.xpose.msra.mxu0 0.0
    %526 = vmatprep.subr.mxu0 0.0
    %527 = vmatpush1.xpose.msra.mxu0 0.0
    %528 = vmatprep.subr.mxu0 0.0
    %529 = vmatpush1.xpose.msra.mxu0 0.0
    %530 = vmatprep.subr.mxu0 0.0
    %531 = vmatpush1.xpose.msra.mxu0 0.0
    %532 = vmatprep.subr.mxu0 0.0
    %533 = vmatpush1.xpose.msra.mxu0 0.0
    %534 = vmatprep.subr.mxu0 0.0
    %535 = vmatpush1.xpose.msra.mxu0 0.0
    %536 = vmatprep.subr.mxu0 0.0
    %537 = vmatpush1.xpose.msra.mxu0 0.0
    %538 = vmatprep.subr.mxu0 0.0
    %539 = vmatpush1.xpose.msra.mxu0 0.0
    %540 = vmatprep.subr.mxu0 0.0
    %541 = vmatpush1.xpose.msra.mxu0 0.0
    %542 = vmatprep.subr.mxu0 0.0
    %543 = vmatpush1.xpose.msra.mxu0 0.0
    %544 = vmatprep.subr.mxu0 0.0
    %545 = vmatpush1.xpose.msra.mxu0 0.0
    %546 = vmatprep.subr.mxu0 0.0
    %547 = vmatpush1.xpose.msra.mxu0 0.0
    %548 = vmatprep.subr.mxu0 0.0
    %549 = vmatpush1.xpose.msra.mxu0 0.0
    %550 = vmatprep.subr.mxu0 0.0
    %551 = vmatpush1.xpose.msra.mxu0 0.0
    %552 = vmatprep.subr.mxu0 0.0
    %553 = vmatpush1.xpose.msra.mxu0 0.0
    %554 = vmatprep.subr.mxu0 0.0
    %555 = vmatpush1.xpose.msra.mxu0 0.0
    %556 = vmatprep.subr.mxu0 0.0
    %557 = vmatpush1.xpose.msra.mxu0 0.0
    %558 = vmatprep.subr.mxu0 0.0
    %559 = vmatpush1.xpose.msra.mxu0 0.0
    %560 = vmatprep.subr.mxu0 0.0
    %561 = vmatpush1.xpose.msra.mxu0 0.0
    %562 = vmatprep.subr.mxu0 0.0
    %563 = vmatpush1.xpose.msra.mxu0 0.0
    %564 = vmatprep.subr.mxu0 0.0
    %565 = vmatpush1.xpose.msra.mxu0 0.0
    %566 = vmatprep.subr.mxu0 0.0
    %567 = vmatpush1.xpose.msra.mxu0 0.0
    %568 = vmatprep.subr.mxu0 0.0
    %569 = vmatpush1.xpose.msra.mxu0 0.0
    %570 = vmatprep.subr.mxu0 0.0
    %571 = vmatpush1.xpose.msra.mxu0 0.0
    %572 = vmatprep.subr.mxu0 0.0
    %573 = vmatpush1.xpose.msra.mxu0 0.0
    %574 = vmatprep.subr.mxu0 0.0
    %575 = vmatpush1.xpose.msra.mxu0 0.0
    %576 = vmatprep.mubr.f32.mxu0 0.0
    %577 = vmatmul.mubr.f32.gmra.mrb[0].mxu0 %v462
    %v578 = vpop.f32.mrb[0].mxu0
    %v579 = vadd.f32 %v174, %v578
    %v580 = vpop.f32.mrb[0].mxu0
    %581 = vmatprep.mubr.f32.mxu0 0.0
    %582 = vmatmul.mubr.f32.gmra.mrb[0].mxu0 %v465
    %v583 = vpop.f32.mrb[0].mxu0
    %v584 = vadd.f32 %v175, %v583
    %v585 = vpop.f32.mrb[0].mxu0
    %586 = vmatprep.mubr.f32.mxu0 0.0
    %587 = vmatmul.mubr.f32.gmra.mrb[0].mxu0 %v468
    %v588 = vpop.f32.mrb[0].mxu0
    %v589 = vadd.f32 %v176, %v588
    %v590 = vpop.f32.mrb[0].mxu0
    %591 = vmatprep.mubr.f32.mxu0 0.0
    %592 = vmatmul.mubr.f32.gmra.mrb[0].mxu0 %v471
    %v593 = vpop.f32.mrb[0].mxu0
    %v594 = vadd.f32 %v177, %v593
    %v595 = vpop.f32.mrb[0].mxu0
    %596 = vmatprep.mubr.f32.mxu0 0.0
    %597 = vmatmul.mubr.f32.gmra.mrb[0].mxu0 %v474
    %v598 = vpop.f32.mrb[0].mxu0
    %v599 = vadd.f32 %v178, %v598
    %v600 = vpop.f32.mrb[0].mxu0
    %601 = vmatprep.mubr.f32.mxu0 0.0
    %602 = vmatmul.mubr.f32.gmra.mrb[0].mxu0 %v476
    %v603 = vpop.f32.mrb[0].mxu0
    %v604 = vadd.f32 %v179, %v603
    %v605 = vpop.f32.mrb[0].mxu0
    %606 = vmatprep.mubr.f32.mxu0 0.0
    %607 = vmatmul.mubr.f32.gmra.mrb[0].mxu0 %v478
    %v608 = vpop.f32.mrb[0].mxu0
    %v609 = vadd.f32 %v180, %v608
    %v610 = vpop.f32.mrb[0].mxu0
    %611 = vmatprep.mubr.f32.mxu0 0.0
    %612 = vmatmul.mubr.f32.gmra.mrb[0].mxu0 %v480
    %v613 = vpop.f32.mrb[0].mxu0
    %v614 = vadd.f32 %v181, %v613
    %v615 = vpop.f32.mrb[0].mxu0
    %616 = vmatprep.mubr.f32.mxu0 0.0
    %617 = vmatmul.mubr.f32.gmra.mrb[0].mxu0 %v483
    %v618 = vpop.f32.mrb[0].mxu0
    %v619 = vadd.f32 %v182, %v618
    %v620 = vpop.f32.mrb[0].mxu0
    %621 = vmatprep.mubr.f32.mxu0 0.0
    %622 = vmatmul.mubr.f32.gmra.mrb[0].mxu0 %v485
    %v623 = vpop.f32.mrb[0].mxu0
    %v624 = vadd.f32 %v183, %v623
    %v625 = vpop.f32.mrb[0].mxu0
    %626 = vmatprep.mubr.f32.mxu0 0.0
    %627 = vmatmul.mubr.f32.gmra.mrb[0].mxu0 %v487
    %v628 = vpop.f32.mrb[0].mxu0
    %v629 = vadd.f32 %v184, %v628
    %v630 = vpop.f32.mrb[0].mxu0
    %631 = vmatprep.mubr.f32.mxu0 0.0
    %632 = vmatmul.mubr.f32.gmra.mrb[0].mxu0 %v489
    %v633 = vpop.f32.mrb[0].mxu0
    %v634 = vadd.f32 %v185, %v633
    %v635 = vpop.f32.mrb[0].mxu0
    %636 = vmatprep.mubr.f32.mxu0 0.0
    %637 = vmatmul.mubr.f32.gmra.mrb[0].mxu0 %v492
    %v638 = vpop.f32.mrb[0].mxu0
    %v639 = vadd.f32 %v186, %v638
    %v640 = vpop.f32.mrb[0].mxu0
    %641 = vmatprep.mubr.f32.mxu0 0.0
    %642 = vmatmul.mubr.f32.gmra.mrb[0].mxu0 %v494
    %v643 = vpop.f32.mrb[0].mxu0
    %v644 = vadd.f32 %v187, %v643
    %v645 = vpop.f32.mrb[0].mxu0
    %646 = vmatprep.mubr.f32.mxu0 0.0
    %647 = vmatmul.mubr.f32.gmra.mrb[0].mxu0 %v496
    %v648 = vpop.f32.mrb[0].mxu0
    %v649 = vadd.f32 %v188, %v648
    %v650 = vpop.f32.mrb[0].mxu0
    %651 = vmatprep.mubr.f32.mxu0 0.0
    %652 = vmatmul.mubr.f32.gmra.mrb[0].mxu0 %v498
    %v653 = vpop.f32.mrb[0].mxu0
    %v654 = vadd.f32 %v189, %v653
    %v655 = vpop.f32.mrb[0].mxu0
    %656 = vmatprep.mubr.f32.mxu0 0.0
    %657 = vmatmul.mubr.f32.gmra.mrb[0].mxu0 %v500
    %v658 = vpop.f32.mrb[0].mxu0
    %v659 = vadd.f32 %v190, %v658
    %v660 = vpop.f32.mrb[0].mxu0
    %661 = vdwg.mxu0
    %vm662 = vcmask 277504
    %v663 = vsel %vm662, %v579, -inf
    %664 = vmax.xlane.f32.xlu0 %v663
    %v665 = vpop.xlane.xlu0 %664
    %v666 = vsel %vm662, %v584, -inf
    %667 = vmax.xlane.f32.xlu0 %v666
    %v668 = vpop.xlane.xlu0 %667
    %v669 = vsel %vm662, %v589, -inf
    %670 = vmax.xlane.f32.xlu0 %v669
    %v671 = vpop.xlane.xlu0 %670
    %v672 = vsel %vm662, %v594, -inf
    %673 = vmax.xlane.f32.xlu0 %v672
    %v674 = vpop.xlane.xlu0 %673
    %v675 = vsel %vm662, %v599, -inf
    %676 = vmax.xlane.f32.xlu0 %v675
    %v677 = vpop.xlane.xlu0 %676
    %v678 = vsel %vm662, %v604, -inf
    %679 = vmax.xlane.f32.xlu0 %v678
    %v680 = vpop.xlane.xlu0 %679
    %v681 = vsel %vm662, %v609, -inf
    %682 = vmax.xlane.f32.xlu0 %v681
    %v683 = vpop.xlane.xlu0 %682
    %v684 = vsel %vm662, %v614, -inf
    %685 = vmax.xlane.f32.xlu0 %v684
    %v686 = vpop.xlane.xlu0 %685
    %v687 = vsel %vm662, %v619, -inf
    %688 = vmax.xlane.f32.xlu0 %v687
    %v689 = vpop.xlane.xlu0 %688
    %v690 = vsel %vm662, %v624, -inf
    %691 = vmax.xlane.f32.xlu0 %v690
    %v692 = vpop.xlane.xlu0 %691
    %v693 = vsel %vm662, %v629, -inf
    %694 = vmax.xlane.f32.xlu0 %v693
    %v695 = vpop.xlane.xlu0 %694
    %v696 = vsel %vm662, %v634, -inf
    %697 = vmax.xlane.f32.xlu0 %v696
    %v698 = vpop.xlane.xlu0 %697
    %v699 = vsel %vm662, %v639, -inf
    %700 = vmax.xlane.f32.xlu0 %v699
    %v701 = vpop.xlane.xlu0 %700
    %v702 = vsel %vm662, %v644, -inf
    %703 = vmax.xlane.f32.xlu0 %v702
    %v704 = vpop.xlane.xlu0 %703
    %v705 = vsel %vm662, %v649, -inf
    %706 = vmax.xlane.f32.xlu0 %v705
    %v707 = vpop.xlane.xlu0 %706
    %v708 = vsel %vm662, %v654, -inf
    %709 = vmax.xlane.f32.xlu0 %v708
    %v710 = vpop.xlane.xlu0 %709
    %v711 = vsel %vm662, %v659, -inf
    %712 = vmax.xlane.f32.xlu0 %v711
    %v713 = vpop.xlane.xlu0 %712
    %v714 = vsub.f32 %v579, %v665
    %v715 = vsub.f32 %v584, %v668
    %v716 = vsub.f32 %v589, %v671
    %v717 = vsub.f32 %v594, %v674
    %v718 = vsub.f32 %v599, %v677
    %v719 = vsub.f32 %v604, %v680
    %v720 = vsub.f32 %v609, %v683
    %v721 = vsub.f32 %v614, %v686
    %v722 = vsub.f32 %v619, %v689
    %v723 = vsub.f32 %v624, %v692
    %v724 = vsub.f32 %v629, %v695
    %v725 = vsub.f32 %v634, %v698
    %v726 = vsub.f32 %v639, %v701
    %v727 = vsub.f32 %v644, %v704
    %v728 = vsub.f32 %v649, %v707
    %v729 = vsub.f32 %v654, %v710
    %v730 = vsub.f32 %v659, %v713
    %v731 = vmul.f32 %v714, 1.442695
    %v732 = vpow.pop %v731
    %v733 = vmul.f32 %v715, 1.442695
    %v734 = vpow.pop %v733
    %v735 = vmul.f32 %v716, 1.442695
    %v736 = vpow.pop %v735
    %v737 = vmul.f32 %v717, 1.442695
    %v738 = vpow.pop %v737
    %v739 = vmul.f32 %v718, 1.442695
    %v740 = vpow.pop %v739
    %v741 = vmul.f32 %v719, 1.442695
    %v742 = vpow.pop %v741
    %v743 = vmul.f32 %v720, 1.442695
    %v744 = vpow.pop %v743
    %v745 = vmul.f32 %v721, 1.442695
    %v746 = vpow.pop %v745
    %v747 = vmul.f32 %v722, 1.442695
    %v748 = vpow.pop %v747
    %v749 = vmul.f32 %v723, 1.442695
    %v750 = vpow.pop %v749
    %v751 = vmul.f32 %v724, 1.442695
    %v752 = vpow.pop %v751
    %v753 = vmul.f32 %v725, 1.442695
    %v754 = vpow.pop %v753
    %v755 = vmul.f32 %v726, 1.442695
    %v756 = vpow.pop %v755
    %v757 = vmul.f32 %v727, 1.442695
    %v758 = vpow.pop %v757
    %v759 = vmul.f32 %v728, 1.442695
    %v760 = vpow.pop %v759
    %v761 = vmul.f32 %v729, 1.442695
    %v762 = vpow.pop %v761
    %v763 = vmul.f32 %v730, 1.442695
    %v764 = vpow.pop %v763
    %v765 = vsel %vm662, %v732, 0.0
    %766 = vadd.xlane.f32.xlu0 %v765
    %v767 = vpop.xlane.xlu0 %766
    %v768 = vsel %vm662, %v734, 0.0
    %769 = vadd.xlane.f32.xlu0 %v768
    %v770 = vpop.xlane.xlu0 %769
    %v771 = vsel %vm662, %v736, 0.0
    %772 = vadd.xlane.f32.xlu0 %v771
    %v773 = vpop.xlane.xlu0 %772
    %v774 = vsel %vm662, %v738, 0.0
    %775 = vadd.xlane.f32.xlu0 %v774
    %v776 = vpop.xlane.xlu0 %775
    %v777 = vsel %vm662, %v740, 0.0
    %778 = vadd.xlane.f32.xlu0 %v777
    %v779 = vpop.xlane.xlu0 %778
    %v780 = vsel %vm662, %v742, 0.0
    %781 = vadd.xlane.f32.xlu0 %v780
    %v782 = vpop.xlane.xlu0 %781
    %v783 = vsel %vm662, %v744, 0.0
    %784 = vadd.xlane.f32.xlu0 %v783
    %v785 = vpop.xlane.xlu0 %784
    %v786 = vsel %vm662, %v746, 0.0
    %787 = vadd.xlane.f32.xlu0 %v786
    %v788 = vpop.xlane.xlu0 %787
    %v789 = vsel %vm662, %v748, 0.0
    %790 = vadd.xlane.f32.xlu0 %v789
    %v791 = vpop.xlane.xlu0 %790
    %v792 = vsel %vm662, %v750, 0.0
    %793 = vadd.xlane.f32.xlu0 %v792
    %v794 = vpop.xlane.xlu0 %793
    %v795 = vsel %vm662, %v752, 0.0
    %796 = vadd.xlane.f32.xlu0 %v795
    %v797 = vpop.xlane.xlu0 %796
    %v798 = vsel %vm662, %v754, 0.0
    %799 = vadd.xlane.f32.xlu0 %v798
    %v800 = vpop.xlane.xlu0 %799
    %v801 = vsel %vm662, %v756, 0.0
    %802 = vadd.xlane.f32.xlu0 %v801
    %v803 = vpop.xlane.xlu0 %802
    %v804 = vsel %vm662, %v758, 0.0
    %805 = vadd.xlane.f32.xlu0 %v804
    %v806 = vpop.xlane.xlu0 %805
    %v807 = vsel %vm662, %v760, 0.0
    %808 = vadd.xlane.f32.xlu0 %v807
    %v809 = vpop.xlane.xlu0 %808
    %v810 = vsel %vm662, %v762, 0.0
    %811 = vadd.xlane.f32.xlu0 %v810
    %v812 = vpop.xlane.xlu0 %811
    %v813 = vsel %vm662, %v764, 0.0
    %814 = vadd.xlane.f32.xlu0 %v813
    %v815 = vpop.xlane.xlu0 %814
    %v816 = vrcp.pop %v767
    %v817 = vrcp.pop %v770
    %v818 = vrcp.pop %v773
    %v819 = vrcp.pop %v776
    %v820 = vrcp.pop %v779
    %v821 = vrcp.pop %v782
    %v822 = vrcp.pop %v785
    %v823 = vrcp.pop %v788
    %v824 = vrcp.pop %v791
    %v825 = vrcp.pop %v794
    %v826 = vrcp.pop %v797
    %v827 = vrcp.pop %v800
    %v828 = vrcp.pop %v803
    %v829 = vrcp.pop %v806
    %v830 = vrcp.pop %v809
    %v831 = vrcp.pop %v812
    %v832 = vrcp.pop %v815
    %v833 = vmul.f32 %v732, %v816
    %v834 = vmul.f32 %v734, %v817
    %v835 = vmul.f32 %v736, %v818
    %v836 = vmul.f32 %v738, %v819
    %v837 = vmul.f32 %v740, %v820
    %v838 = vmul.f32 %v742, %v821
    %v839 = vmul.f32 %v744, %v822
    %v840 = vmul.f32 %v746, %v823
    %v841 = vmul.f32 %v748, %v824
    %v842 = vmul.f32 %v750, %v825
    %v843 = vmul.f32 %v752, %v826
    %v844 = vmul.f32 %v754, %v827
    %v845 = vmul.f32 %v756, %v828
    %v846 = vmul.f32 %v758, %v829
    %v847 = vmul.f32 %v760, %v830
    %v848 = vmul.f32 %v762, %v831
    %v849 = vmul.f32 %v764, %v832
    %850 = vrot.lane.b32.xlu0 %v350, 64
    %v851 = vpop.permute.xlu0 %850
    %852 = vrot.lane.b32.xlu0 %v355, 64
    %v853 = vpop.permute.xlu0 %852
    %854 = vrot.lane.b32.xlu0 %v360, 64
    %v855 = vpop.permute.xlu0 %854
    %856 = vrot.lane.b32.xlu0 %v365, 64
    %v857 = vpop.permute.xlu0 %856
    %858 = vrot.lane.b32.xlu0 %v370, 64
    %v859 = vpop.permute.xlu0 %858
    %v865 = vsel %vm662, %v833, 0
    %v868 = vsel %vm662, %v834, 0
    %v871 = vsel %vm662, %v835, 0
    %v874 = vsel %vm662, %v836, 0
    %v877 = vsel %vm662, %v837, 0
    %v880 = vsel %vm662, %v838, 0
    %v883 = vsel %vm662, %v839, 0
    %v886 = vsel %vm662, %v840, 0
    %v889 = vsel %vm662, %v841, 0
    %v892 = vsel %vm662, %v842, 0
    %v895 = vsel %vm662, %v843, 0
    %v898 = vsel %vm662, %v844, 0
    %v901 = vsel %vm662, %v845, 0
    %v904 = vsel %vm662, %v846, 0
    %v907 = vsel %vm662, %v847, 0
    %v910 = vsel %vm662, %v848, 0
    %v913 = vsel %vm662, %v849, 0
    %v915 = vsel %vm398, %v859, 0
    %917 = vmatprep.subr.mxu0 0.0
    %918 = vmatpush1.msra.mxu0 %v851
    %919 = vmatprep.subr.mxu0 0.0
    %920 = vmatpush1.msra.mxu0 %v853
    %921 = vmatprep.subr.mxu0 0.0
    %922 = vmatpush1.msra.mxu0 %v855
    %923 = vmatprep.subr.mxu0 0.0
    %924 = vmatpush1.msra.mxu0 %v857
    %925 = vmatprep.subr.mxu0 0.0
    %926 = vmatpush1.msra.mxu0 %v915
    %927 = vmatprep.subr.mxu0 0.0
    %928 = vmatpush1.msra.mxu0 0.0
    %929 = vmatprep.subr.mxu0 0.0
    %930 = vmatpush1.msra.mxu0 0.0
    %931 = vmatprep.subr.mxu0 0.0
    %932 = vmatpush1.msra.mxu0 0.0
    %933 = vmatprep.subr.mxu0 0.0
    %934 = vmatpush1.msra.mxu0 0.0
    %935 = vmatprep.subr.mxu0 0.0
    %936 = vmatpush1.msra.mxu0 0.0
    %937 = vmatprep.subr.mxu0 0.0
    %938 = vmatpush1.msra.mxu0 0.0
    %939 = vmatprep.subr.mxu0 0.0
    %940 = vmatpush1.msra.mxu0 0.0
    %941 = vmatprep.subr.mxu0 0.0
    %942 = vmatpush1.msra.mxu0 0.0
    %943 = vmatprep.subr.mxu0 0.0
    %944 = vmatpush1.msra.mxu0 0.0
    %945 = vmatprep.subr.mxu0 0.0
    %946 = vmatpush1.msra.mxu0 0.0
    %947 = vmatprep.subr.mxu0 0.0
    %948 = vmatpush1.msra.mxu0 0.0
    %949 = vmatprep.subr.mxu0 0.0
    %950 = vmatpush1.msra.mxu0 0.0
    %951 = vmatprep.subr.mxu0 0.0
    %952 = vmatpush1.msra.mxu0 0.0
    %953 = vmatprep.subr.mxu0 0.0
    %954 = vmatpush1.msra.mxu0 0.0
    %955 = vmatprep.subr.mxu0 0.0
    %956 = vmatpush1.msra.mxu0 0.0
    %957 = vmatprep.subr.mxu0 0.0
    %958 = vmatpush1.msra.mxu0 0.0
    %959 = vmatprep.subr.mxu0 0.0
    %960 = vmatpush1.msra.mxu0 0.0
    %961 = vmatprep.subr.mxu0 0.0
    %962 = vmatpush1.msra.mxu0 0.0
    %963 = vmatprep.subr.mxu0 0.0
    %964 = vmatpush1.msra.mxu0 0.0
    %965 = vmatprep.subr.mxu0 0.0
    %966 = vmatpush1.msra.mxu0 0.0
    %967 = vmatprep.subr.mxu0 0.0
    %968 = vmatpush1.msra.mxu0 0.0
    %969 = vmatprep.subr.mxu0 0.0
    %970 = vmatpush1.msra.mxu0 0.0
    %971 = vmatprep.subr.mxu0 0.0
    %972 = vmatpush1.msra.mxu0 0.0
    %973 = vmatprep.subr.mxu0 0.0
    %974 = vmatpush1.msra.mxu0 0.0
    %975 = vmatprep.subr.mxu0 0.0
    %976 = vmatpush1.msra.mxu0 0.0
    %977 = vmatprep.subr.mxu0 0.0
    %978 = vmatpush1.msra.mxu0 0.0
    %979 = vmatprep.subr.mxu0 0.0
    %980 = vmatpush1.msra.mxu0 0.0
    %981 = vmatprep.mubr.f32.mxu0 0.0
    %982 = vmatmul.mubr.f32.gmra.mrb[0].mxu0 %v865
    %v983 = vpop.f32.mrb[0].mxu0
    %v984 = vadd.f32 0.0, %v983
    %v985 = vpop.f32.mrb[0].mxu0
    %986 = vmatprep.mubr.f32.mxu0 0.0
    %987 = vmatmul.mubr.f32.gmra.mrb[0].mxu0 %v868
    %v988 = vpop.f32.mrb[0].mxu0
    %v989 = vadd.f32 0.0, %v988
    %v990 = vpop.f32.mrb[0].mxu0
    %991 = vmatprep.mubr.f32.mxu0 0.0
    %992 = vmatmul.mubr.f32.gmra.mrb[0].mxu0 %v871
    %v993 = vpop.f32.mrb[0].mxu0
    %v994 = vadd.f32 0.0, %v993
    %v995 = vpop.f32.mrb[0].mxu0
    %996 = vmatprep.mubr.f32.mxu0 0.0
    %997 = vmatmul.mubr.f32.gmra.mrb[0].mxu0 %v874
    %v998 = vpop.f32.mrb[0].mxu0
    %v999 = vadd.f32 0.0, %v998
    %v1000 = vpop.f32.mrb[0].mxu0
    %1001 = vmatprep.mubr.f32.mxu0 0.0
    %1002 = vmatmul.mubr.f32.gmra.mrb[0].mxu0 %v877
    %v1003 = vpop.f32.mrb[0].mxu0
    %v1004 = vadd.f32 0.0, %v1003
    %v1005 = vpop.f32.mrb[0].mxu0
    %1006 = vmatprep.mubr.f32.mxu0 0.0
    %1007 = vmatmul.mubr.f32.gmra.mrb[0].mxu0 %v880
    %v1008 = vpop.f32.mrb[0].mxu0
    %v1009 = vadd.f32 0.0, %v1008
    %v1010 = vpop.f32.mrb[0].mxu0
    %1011 = vmatprep.mubr.f32.mxu0 0.0
    %1012 = vmatmul.mubr.f32.gmra.mrb[0].mxu0 %v883
    %v1013 = vpop.f32.mrb[0].mxu0
    %v1014 = vadd.f32 0.0, %v1013
    %v1015 = vpop.f32.mrb[0].mxu0
    %1016 = vmatprep.mubr.f32.mxu0 0.0
    %1017 = vmatmul.mubr.f32.gmra.mrb[0].mxu0 %v886
    %v1018 = vpop.f32.mrb[0].mxu0
    %v1019 = vadd.f32 0.0, %v1018
    %v1020 = vpop.f32.mrb[0].mxu0
    %1021 = vmatprep.mubr.f32.mxu0 0.0
    %1022 = vmatmul.mubr.f32.gmra.mrb[0].mxu0 %v889
    %v1023 = vpop.f32.mrb[0].mxu0
    %v1024 = vadd.f32 0.0, %v1023
    %v1025 = vpop.f32.mrb[0].mxu0
    %1026 = vmatprep.mubr.f32.mxu0 0.0
    %1027 = vmatmul.mubr.f32.gmra.mrb[0].mxu0 %v892
    %v1028 = vpop.f32.mrb[0].mxu0
    %v1029 = vadd.f32 0.0, %v1028
    %v1030 = vpop.f32.mrb[0].mxu0
    %1031 = vmatprep.mubr.f32.mxu0 0.0
    %1032 = vmatmul.mubr.f32.gmra.mrb[0].mxu0 %v895
    %v1033 = vpop.f32.mrb[0].mxu0
    %v1034 = vadd.f32 0.0, %v1033
    %v1035 = vpop.f32.mrb[0].mxu0
    %1036 = vmatprep.mubr.f32.mxu0 0.0
    %1037 = vmatmul.mubr.f32.gmra.mrb[0].mxu0 %v898
    %v1038 = vpop.f32.mrb[0].mxu0
    %v1039 = vadd.f32 0.0, %v1038
    %v1040 = vpop.f32.mrb[0].mxu0
    %1041 = vmatprep.mubr.f32.mxu0 0.0
    %1042 = vmatmul.mubr.f32.gmra.mrb[0].mxu0 %v901
    %v1043 = vpop.f32.mrb[0].mxu0
    %v1044 = vadd.f32 0.0, %v1043
    %v1045 = vpop.f32.mrb[0].mxu0
    %1046 = vmatprep.mubr.f32.mxu0 0.0
    %1047 = vmatmul.mubr.f32.gmra.mrb[0].mxu0 %v904
    %v1048 = vpop.f32.mrb[0].mxu0
    %v1049 = vadd.f32 0.0, %v1048
    %v1050 = vpop.f32.mrb[0].mxu0
    %1051 = vmatprep.mubr.f32.mxu0 0.0
    %1052 = vmatmul.mubr.f32.gmra.mrb[0].mxu0 %v907
    %v1053 = vpop.f32.mrb[0].mxu0
    %v1054 = vadd.f32 0.0, %v1053
    %v1055 = vpop.f32.mrb[0].mxu0
    %1056 = vmatprep.mubr.f32.mxu0 0.0
    %1057 = vmatmul.mubr.f32.gmra.mrb[0].mxu0 %v910
    %v1058 = vpop.f32.mrb[0].mxu0
    %v1059 = vadd.f32 0.0, %v1058
    %v1060 = vpop.f32.mrb[0].mxu0
    %1061 = vmatprep.mubr.f32.mxu0 0.0
    %1062 = vmatmul.mubr.f32.gmra.mrb[0].mxu0 %v913
    %v1063 = vpop.f32.mrb[0].mxu0
    %v1064 = vadd.f32 0.0, %v1063
    %v1065 = vpop.f32.mrb[0].mxu0
    %1066 = vdwg.mxu0
    %v1067 = vsel %vm164, %v984, 0.0
    %v1068 = vsel %vm164, %v989, 0.0
    %v1069 = vsel %vm164, %v994, 0.0
    %v1070 = vsel %vm164, %v999, 0.0
    %v1071 = vsel %vm164, %v1004, 0.0
    %v1072 = vadd.f32 %v1067, 0.0
    %v1073 = vadd.f32 %v1068, 0.0
    %v1074 = vadd.f32 %v1069, 0.0
    %v1075 = vadd.f32 %v1070, 0.0
    %v1076 = vadd.f32 %v1071, 0.0
    %v1077 = vsel %vm167, %v1004, 0.0
    %v1078 = vsel %vm167, %v1009, 0.0
    %v1079 = vsel %vm167, %v1014, 0.0
    %v1080 = vsel %vm167, %v1019, 0.0
    %v1081 = vsel %vm167, %v1024, 0.0
    %v1087 = vrot.slane %v1077, 2
    %v1088 = vrot.slane %v1078, 2
    %v1089 = vsel %vm432, %v1087, %v1088
    %v1090 = vrot.slane %v1079, 2
    %v1091 = vsel %vm432, %v1088, %v1090
    %v1092 = vrot.slane %v1080, 2
    %v1093 = vsel %vm432, %v1090, %v1092
    %v1094 = vrot.slane %v1081, 2
    %v1095 = vsel %vm432, %v1092, %v1094
    %v1101 = vadd.f32 %v1072, %v1089
    %v1102 = vadd.f32 %v1073, %v1091
    %v1103 = vadd.f32 %v1074, %v1093
    %v1104 = vadd.f32 %v1075, %v1095
    %v1105 = vadd.f32 %v1076, %v1094
    %v1106 = vsel %vm170, %v1024, 0.0
    %v1107 = vsel %vm170, %v1029, 0.0
    %v1108 = vsel %vm170, %v1034, 0.0
    %v1109 = vsel %vm170, %v1039, 0.0
    %v1110 = vsel %vm170, %v1044, 0.0
    %v1116 = vrot.slane %v1106, 4
    %v1117 = vrot.slane %v1107, 4
    %v1118 = vsel %vm415, %v1116, %v1117
    %v1119 = vrot.slane %v1108, 4
    %v1120 = vsel %vm415, %v1117, %v1119
    %v1121 = vrot.slane %v1109, 4
    %v1122 = vsel %vm415, %v1119, %v1121
    %v1123 = vrot.slane %v1110, 4
    %v1124 = vsel %vm415, %v1121, %v1123
    %v1130 = vadd.f32 %v1101, %v1118
    %v1131 = vadd.f32 %v1102, %v1120
    %v1132 = vadd.f32 %v1103, %v1122
    %v1133 = vadd.f32 %v1104, %v1124
    %v1134 = vadd.f32 %v1105, %v1123
    %v1135 = vsel %vm173, %v1044, 0.0
    %v1136 = vsel %vm173, %v1049, 0.0
    %v1137 = vsel %vm173, %v1054, 0.0
    %v1138 = vsel %vm173, %v1059, 0.0
    %v1139 = vsel %vm173, %v1064, 0.0
    %v1145 = vrot.slane %v1135, 6
    %v1146 = vrot.slane %v1136, 6
    %v1147 = vsel %vm398, %v1145, %v1146
    %v1148 = vrot.slane %v1137, 6
    %v1149 = vsel %vm398, %v1146, %v1148
    %v1150 = vrot.slane %v1138, 6
    %v1151 = vsel %vm398, %v1148, %v1150
    %v1152 = vrot.slane %v1139, 6
    %v1153 = vsel %vm398, %v1150, %v1152
    %v1159 = vadd.f32 %v1130, %v1147
    %v1160 = vadd.f32 %v1131, %v1149
    %v1161 = vadd.f32 %v1132, %v1151
    %v1162 = vadd.f32 %v1133, %v1153
    %v1163 = vadd.f32 %v1134, %v1152
    %v1164 = vld [vmem:[%s5] sm:$0xff]
    %v1165 = vld [vmem:[%s5 + $0x8] sm:$0xff]
    %v1166 = vld [vmem:[%s5 + $0x10] sm:$0xff]
    %v1167 = vld [vmem:[%s5 + $0x18] sm:$0xff]
    %v1169 = vsel %vm192, %v1159, 0
    %v1172 = vsel %vm192, %v1160, 0
    %v1175 = vsel %vm192, %v1161, 0
    %v1178 = vsel %vm192, %v1162, 0
    %v1181 = vsel %vm192, %v1163, 0
    %1183 = vmatprep.subr.mxu0 0.0
    %1184 = vmatpush1.msra.mxu0 %v1164
    %1185 = vmatprep.subr.mxu0 0.0
    %1186 = vmatpush1.msra.mxu0 %v1165
    %1187 = vmatprep.subr.mxu0 0.0
    %1188 = vmatpush1.msra.mxu0 %v1166
    %1189 = vmatprep.subr.mxu0 0.0
    %1190 = vmatpush1.msra.mxu0 %v1167
    %1191 = vmatprep.subr.mxu0 0.0
    %1192 = vmatpush1.msra.mxu0 0.0
    %1193 = vmatprep.subr.mxu0 0.0
    %1194 = vmatpush1.msra.mxu0 0.0
    %1195 = vmatprep.subr.mxu0 0.0
    %1196 = vmatpush1.msra.mxu0 0.0
    %1197 = vmatprep.subr.mxu0 0.0
    %1198 = vmatpush1.msra.mxu0 0.0
    %1199 = vmatprep.subr.mxu0 0.0
    %1200 = vmatpush1.msra.mxu0 0.0
    %1201 = vmatprep.subr.mxu0 0.0
    %1202 = vmatpush1.msra.mxu0 0.0
    %1203 = vmatprep.subr.mxu0 0.0
    %1204 = vmatpush1.msra.mxu0 0.0
    %1205 = vmatprep.subr.mxu0 0.0
    %1206 = vmatpush1.msra.mxu0 0.0
    %1207 = vmatprep.subr.mxu0 0.0
    %1208 = vmatpush1.msra.mxu0 0.0
    %1209 = vmatprep.subr.mxu0 0.0
    %1210 = vmatpush1.msra.mxu0 0.0
    %1211 = vmatprep.subr.mxu0 0.0
    %1212 = vmatpush1.msra.mxu0 0.0
    %1213 = vmatprep.subr.mxu0 0.0
    %1214 = vmatpush1.msra.mxu0 0.0
    %1215 = vmatprep.subr.mxu0 0.0
    %1216 = vmatpush1.msra.mxu0 0.0
    %1217 = vmatprep.subr.mxu0 0.0
    %1218 = vmatpush1.msra.mxu0 0.0
    %1219 = vmatprep.subr.mxu0 0.0
    %1220 = vmatpush1.msra.mxu0 0.0
    %1221 = vmatprep.subr.mxu0 0.0
    %1222 = vmatpush1.msra.mxu0 0.0
    %1223 = vmatprep.subr.mxu0 0.0
    %1224 = vmatpush1.msra.mxu0 0.0
    %1225 = vmatprep.subr.mxu0 0.0
    %1226 = vmatpush1.msra.mxu0 0.0
    %1227 = vmatprep.subr.mxu0 0.0
    %1228 = vmatpush1.msra.mxu0 0.0
    %1229 = vmatprep.subr.mxu0 0.0
    %1230 = vmatpush1.msra.mxu0 0.0
    %1231 = vmatprep.subr.mxu0 0.0
    %1232 = vmatpush1.msra.mxu0 0.0
    %1233 = vmatprep.subr.mxu0 0.0
    %1234 = vmatpush1.msra.mxu0 0.0
    %1235 = vmatprep.subr.mxu0 0.0
    %1236 = vmatpush1.msra.mxu0 0.0
    %1237 = vmatprep.subr.mxu0 0.0
    %1238 = vmatpush1.msra.mxu0 0.0
    %1239 = vmatprep.subr.mxu0 0.0
    %1240 = vmatpush1.msra.mxu0 0.0
    %1241 = vmatprep.subr.mxu0 0.0
    %1242 = vmatpush1.msra.mxu0 0.0
    %1243 = vmatprep.subr.mxu0 0.0
    %1244 = vmatpush1.msra.mxu0 0.0
    %1245 = vmatprep.subr.mxu0 0.0
    %1246 = vmatpush1.msra.mxu0 0.0
    %1247 = vmatprep.mubr.f32.mxu0 0.0
    %1248 = vmatmul.mubr.f32.gmra.mrb[0].mxu0 %v1169
    %v1249 = vpop.f32.mrb[0].mxu0
    %v1250 = vadd.f32 0.0, %v1249
    %v1251 = vpop.f32.mrb[0].mxu0
    %1252 = vmatprep.mubr.f32.mxu0 0.0
    %1253 = vmatmul.mubr.f32.gmra.mrb[0].mxu0 %v1172
    %v1254 = vpop.f32.mrb[0].mxu0
    %v1255 = vadd.f32 0.0, %v1254
    %v1256 = vpop.f32.mrb[0].mxu0
    %1257 = vmatprep.mubr.f32.mxu0 0.0
    %1258 = vmatmul.mubr.f32.gmra.mrb[0].mxu0 %v1175
    %v1259 = vpop.f32.mrb[0].mxu0
    %v1260 = vadd.f32 0.0, %v1259
    %v1261 = vpop.f32.mrb[0].mxu0
    %1262 = vmatprep.mubr.f32.mxu0 0.0
    %1263 = vmatmul.mubr.f32.gmra.mrb[0].mxu0 %v1178
    %v1264 = vpop.f32.mrb[0].mxu0
    %v1265 = vadd.f32 0.0, %v1264
    %v1266 = vpop.f32.mrb[0].mxu0
    %1267 = vmatprep.mubr.f32.mxu0 0.0
    %1268 = vmatmul.mubr.f32.gmra.mrb[0].mxu0 %v1181
    %v1269 = vpop.f32.mrb[0].mxu0
    %v1270 = vadd.f32 0.0, %v1269
    %v1271 = vpop.f32.mrb[0].mxu0
    %1272 = vdwg.mxu0
    %v1273 = vadd.f32 %v137, %v1250
    %v1274 = vadd.f32 %v142, %v1255
    %v1275 = vadd.f32 %v147, %v1260
    %v1276 = vadd.f32 %v152, %v1265
    %v1277 = vadd.f32 %v157, %v1270
    %v1278 = vlaneseq
    %v1279 = vshrl.u32 %v1278, 7
    %v1280 = vsub.s32 1, %v1279
    %v1281 = vrot.slane %v191, %v1280
    %v1282 = vadd.f32 %v1273, %v1281
    %v1283 = vadd.f32 %v1274, %v1281
    %v1284 = vadd.f32 %v1275, %v1281
    %v1285 = vadd.f32 %v1276, %v1281
    %v1286 = vadd.f32 %v1277, %v1281
    %v1287 = vsel %vm192, %v1282, 0.0
    %1288 = vadd.xlane.f32.xlu0 %v1287
    %v1289 = vpop.xlane.xlu0 %1288
    %v1290 = vsel %vm192, %v1283, 0.0
    %1291 = vadd.xlane.f32.xlu0 %v1290
    %v1292 = vpop.xlane.xlu0 %1291
    %v1293 = vsel %vm192, %v1284, 0.0
    %1294 = vadd.xlane.f32.xlu0 %v1293
    %v1295 = vpop.xlane.xlu0 %1294
    %v1296 = vsel %vm192, %v1285, 0.0
    %1297 = vadd.xlane.f32.xlu0 %v1296
    %v1298 = vpop.xlane.xlu0 %1297
    %v1299 = vsel %vm205, %v1286, 0.0
    %1300 = vadd.xlane.f32.xlu0 %v1299
    %v1301 = vpop.xlane.xlu0 %1300
    %v1302 = vmul.f32 %v1289, %v209
    %v1303 = vmul.f32 %v1292, %v209
    %v1304 = vmul.f32 %v1295, %v209
    %v1305 = vmul.f32 %v1298, %v209
    %v1306 = vmul.f32 %v1301, %v209
    %v1307 = vsub.f32 %v1282, %v1302
    %v1308 = vsub.f32 %v1283, %v1303
    %v1309 = vsub.f32 %v1284, %v1304
    %v1310 = vsub.f32 %v1285, %v1305
    %v1311 = vsub.f32 %v1286, %v1306
    %v1312 = vmul.f32 %v1307, %v1307
    %v1313 = vmul.f32 %v1308, %v1308
    %v1314 = vmul.f32 %v1309, %v1309
    %v1315 = vmul.f32 %v1310, %v1310
    %v1316 = vmul.f32 %v1311, %v1311
    %v1317 = vsel %vm192, %v1312, 0.0
    %1318 = vadd.xlane.f32.xlu0 %v1317
    %v1319 = vpop.xlane.xlu0 %1318
    %v1320 = vsel %vm192, %v1313, 0.0
    %1321 = vadd.xlane.f32.xlu0 %v1320
    %v1322 = vpop.xlane.xlu0 %1321
    %v1323 = vsel %vm192, %v1314, 0.0
    %1324 = vadd.xlane.f32.xlu0 %v1323
    %v1325 = vpop.xlane.xlu0 %1324
    %v1326 = vsel %vm192, %v1315, 0.0
    %1327 = vadd.xlane.f32.xlu0 %v1326
    %v1328 = vpop.xlane.xlu0 %1327
    %v1329 = vsel %vm205, %v1316, 0.0
    %1330 = vadd.xlane.f32.xlu0 %v1329
    %v1331 = vpop.xlane.xlu0 %1330
    %v1332 = vmul.f32 %v1319, %v209
    %v1333 = vmul.f32 %v1322, %v209
    %v1334 = vmul.f32 %v1325, %v209
    %v1335 = vmul.f32 %v1328, %v209
    %v1336 = vmul.f32 %v1331, %v209
    %v1337 = vadd.f32 %v1332, 1e-05
    %v1338 = vadd.f32 %v1333, 1e-05
    %v1339 = vadd.f32 %v1334, 1e-05
    %v1340 = vadd.f32 %v1335, 1e-05
    %v1341 = vadd.f32 %v1336, 1e-05
    %v1342 = vrsqrt.pop %v1337
    %v1343 = vrsqrt.pop %v1338
    %v1344 = vrsqrt.pop %v1339
    %v1345 = vrsqrt.pop %v1340
    %v1346 = vrsqrt.pop %v1341
    %v1347 = vmul.f32 %v1307, %v1342
    %v1348 = vmul.f32 %v1308, %v1343
    %v1349 = vmul.f32 %v1309, %v1344
    %v1350 = vmul.f32 %v1310, %v1345
    %v1351 = vmul.f32 %v1311, %v1346
    %v1352 = vld [vmem:[%s6] sm:$0xff]
    %v1353 = vld [vmem:[%s6 + $0x8] sm:$0xff]
    %v1354 = vld [vmem:[%s6 + $0x10] sm:$0xff]
    %v1355 = vld [vmem:[%s6 + $0x18] sm:$0xff]
    %v1356 = vlaneseq
    %v1357 = vshrl.u32 %v1356, 7
    %v1358 = vsub.s32 2, %v1357
    %v1359 = vrot.slane %v191, %v1358
    %v1361 = vsel %vm192, %v1347, 0
    %v1364 = vsel %vm192, %v1348, 0
    %v1367 = vsel %vm192, %v1349, 0
    %v1370 = vsel %vm192, %v1350, 0
    %v1373 = vsel %vm192, %v1351, 0
    %1375 = vmatprep.subr.mxu0 0.0
    %1376 = vmatpush1.msra.mxu0 %v1352
    %1377 = vmatprep.subr.mxu0 0.0
    %1378 = vmatpush1.msra.mxu0 %v1353
    %1379 = vmatprep.subr.mxu0 0.0
    %1380 = vmatpush1.msra.mxu0 %v1354
    %1381 = vmatprep.subr.mxu0 0.0
    %1382 = vmatpush1.msra.mxu0 %v1355
    %1383 = vmatprep.subr.mxu0 0.0
    %1384 = vmatpush1.msra.mxu0 0.0
    %1385 = vmatprep.subr.mxu0 0.0
    %1386 = vmatpush1.msra.mxu0 0.0
    %1387 = vmatprep.subr.mxu0 0.0
    %1388 = vmatpush1.msra.mxu0 0.0
    %1389 = vmatprep.subr.mxu0 0.0
    %1390 = vmatpush1.msra.mxu0 0.0
    %1391 = vmatprep.subr.mxu0 0.0
    %1392 = vmatpush1.msra.mxu0 0.0
    %1393 = vmatprep.subr.mxu0 0.0
    %1394 = vmatpush1.msra.mxu0 0.0
    %1395 = vmatprep.subr.mxu0 0.0
    %1396 = vmatpush1.msra.mxu0 0.0
    %1397 = vmatprep.subr.mxu0 0.0
    %1398 = vmatpush1.msra.mxu0 0.0
    %1399 = vmatprep.subr.mxu0 0.0
    %1400 = vmatpush1.msra.mxu0 0.0
    %1401 = vmatprep.subr.mxu0 0.0
    %1402 = vmatpush1.msra.mxu0 0.0
    %1403 = vmatprep.subr.mxu0 0.0
    %1404 = vmatpush1.msra.mxu0 0.0
    %1405 = vmatprep.subr.mxu0 0.0
    %1406 = vmatpush1.msra.mxu0 0.0
    %1407 = vmatprep.subr.mxu0 0.0
    %1408 = vmatpush1.msra.mxu0 0.0
    %1409 = vmatprep.subr.mxu0 0.0
    %1410 = vmatpush1.msra.mxu0 0.0
    %1411 = vmatprep.subr.mxu0 0.0
    %1412 = vmatpush1.msra.mxu0 0.0
    %1413 = vmatprep.subr.mxu0 0.0
    %1414 = vmatpush1.msra.mxu0 0.0
    %1415 = vmatprep.subr.mxu0 0.0
    %1416 = vmatpush1.msra.mxu0 0.0
    %1417 = vmatprep.subr.mxu0 0.0
    %1418 = vmatpush1.msra.mxu0 0.0
    %1419 = vmatprep.subr.mxu0 0.0
    %1420 = vmatpush1.msra.mxu0 0.0
    %1421 = vmatprep.subr.mxu0 0.0
    %1422 = vmatpush1.msra.mxu0 0.0
    %1423 = vmatprep.subr.mxu0 0.0
    %1424 = vmatpush1.msra.mxu0 0.0
    %1425 = vmatprep.subr.mxu0 0.0
    %1426 = vmatpush1.msra.mxu0 0.0
    %1427 = vmatprep.subr.mxu0 0.0
    %1428 = vmatpush1.msra.mxu0 0.0
    %1429 = vmatprep.subr.mxu0 0.0
    %1430 = vmatpush1.msra.mxu0 0.0
    %1431 = vmatprep.subr.mxu0 0.0
    %1432 = vmatpush1.msra.mxu0 0.0
    %1433 = vmatprep.subr.mxu0 0.0
    %1434 = vmatpush1.msra.mxu0 0.0
    %1435 = vmatprep.subr.mxu0 0.0
    %1436 = vmatpush1.msra.mxu0 0.0
    %1437 = vmatprep.subr.mxu0 0.0
    %1438 = vmatpush1.msra.mxu0 0.0
    %1439 = vmatprep.mubr.f32.mxu0 0.0
    %1440 = vmatmul.mubr.f32.gmra.mrb[0].mxu0 %v1361
    %v1441 = vpop.f32.mrb[0].mxu0
    %v1442 = vadd.f32 %v1359, %v1441
    %v1443 = vpop.f32.mrb[0].mxu0
    %1444 = vmatprep.mubr.f32.mxu0 0.0
    %1445 = vmatmul.mubr.f32.gmra.mrb[0].mxu0 %v1364
    %v1446 = vpop.f32.mrb[0].mxu0
    %v1447 = vadd.f32 %v1359, %v1446
    %v1448 = vpop.f32.mrb[0].mxu0
    %1449 = vmatprep.mubr.f32.mxu0 0.0
    %1450 = vmatmul.mubr.f32.gmra.mrb[0].mxu0 %v1367
    %v1451 = vpop.f32.mrb[0].mxu0
    %v1452 = vadd.f32 %v1359, %v1451
    %v1453 = vpop.f32.mrb[0].mxu0
    %1454 = vmatprep.mubr.f32.mxu0 0.0
    %1455 = vmatmul.mubr.f32.gmra.mrb[0].mxu0 %v1370
    %v1456 = vpop.f32.mrb[0].mxu0
    %v1457 = vadd.f32 %v1359, %v1456
    %v1458 = vpop.f32.mrb[0].mxu0
    %1459 = vmatprep.mubr.f32.mxu0 0.0
    %1460 = vmatmul.mubr.f32.gmra.mrb[0].mxu0 %v1373
    %v1461 = vpop.f32.mrb[0].mxu0
    %v1462 = vadd.f32 %v1359, %v1461
    %v1463 = vpop.f32.mrb[0].mxu0
    %1464 = vdwg.mxu0
    %v1465 = vmax.f32 %v1442, 0.0
    %v1466 = vmax.f32 %v1447, 0.0
    %v1467 = vmax.f32 %v1452, 0.0
    %v1468 = vmax.f32 %v1457, 0.0
    %v1469 = vmax.f32 %v1462, 0.0
    %v1470 = vld [vmem:[%s7] sm:$0xff]
    %v1471 = vld [vmem:[%s7 + $0x8] sm:$0xff]
    %v1472 = vld [vmem:[%s7 + $0x10] sm:$0xff]
    %v1473 = vld [vmem:[%s7 + $0x18] sm:$0xff]
    %v1474 = vld [vmem:[%s7 + $0x20] sm:$0xff]
    %v1475 = vld [vmem:[%s7 + $0x28] sm:$0xff]
    %v1476 = vld [vmem:[%s7 + $0x30] sm:$0xff]
    %v1477 = vld [vmem:[%s7 + $0x38] sm:$0xff]
    %v1479 = vsel %vm54, %v1465, 0
    %v1482 = vsel %vm54, %v1466, 0
    %v1485 = vsel %vm54, %v1467, 0
    %v1488 = vsel %vm54, %v1468, 0
    %v1491 = vsel %vm54, %v1469, 0
    %1493 = vmatprep.subr.mxu0 0.0
    %1494 = vmatpush1.msra.mxu0 %v1470
    %1495 = vmatprep.subr.mxu0 0.0
    %1496 = vmatpush1.msra.mxu0 %v1471
    %1497 = vmatprep.subr.mxu0 0.0
    %1498 = vmatpush1.msra.mxu0 %v1472
    %1499 = vmatprep.subr.mxu0 0.0
    %1500 = vmatpush1.msra.mxu0 %v1473
    %1501 = vmatprep.subr.mxu0 0.0
    %1502 = vmatpush1.msra.mxu0 %v1474
    %1503 = vmatprep.subr.mxu0 0.0
    %1504 = vmatpush1.msra.mxu0 %v1475
    %1505 = vmatprep.subr.mxu0 0.0
    %1506 = vmatpush1.msra.mxu0 %v1476
    %1507 = vmatprep.subr.mxu0 0.0
    %1508 = vmatpush1.msra.mxu0 %v1477
    %1509 = vmatprep.subr.mxu0 0.0
    %1510 = vmatpush1.msra.mxu0 0.0
    %1511 = vmatprep.subr.mxu0 0.0
    %1512 = vmatpush1.msra.mxu0 0.0
    %1513 = vmatprep.subr.mxu0 0.0
    %1514 = vmatpush1.msra.mxu0 0.0
    %1515 = vmatprep.subr.mxu0 0.0
    %1516 = vmatpush1.msra.mxu0 0.0
    %1517 = vmatprep.subr.mxu0 0.0
    %1518 = vmatpush1.msra.mxu0 0.0
    %1519 = vmatprep.subr.mxu0 0.0
    %1520 = vmatpush1.msra.mxu0 0.0
    %1521 = vmatprep.subr.mxu0 0.0
    %1522 = vmatpush1.msra.mxu0 0.0
    %1523 = vmatprep.subr.mxu0 0.0
    %1524 = vmatpush1.msra.mxu0 0.0
    %1525 = vmatprep.subr.mxu0 0.0
    %1526 = vmatpush1.msra.mxu0 0.0
    %1527 = vmatprep.subr.mxu0 0.0
    %1528 = vmatpush1.msra.mxu0 0.0
    %1529 = vmatprep.subr.mxu0 0.0
    %1530 = vmatpush1.msra.mxu0 0.0
    %1531 = vmatprep.subr.mxu0 0.0
    %1532 = vmatpush1.msra.mxu0 0.0
    %1533 = vmatprep.subr.mxu0 0.0
    %1534 = vmatpush1.msra.mxu0 0.0
    %1535 = vmatprep.subr.mxu0 0.0
    %1536 = vmatpush1.msra.mxu0 0.0
    %1537 = vmatprep.subr.mxu0 0.0
    %1538 = vmatpush1.msra.mxu0 0.0
    %1539 = vmatprep.subr.mxu0 0.0
    %1540 = vmatpush1.msra.mxu0 0.0
    %1541 = vmatprep.subr.mxu0 0.0
    %1542 = vmatpush1.msra.mxu0 0.0
    %1543 = vmatprep.subr.mxu0 0.0
    %1544 = vmatpush1.msra.mxu0 0.0
    %1545 = vmatprep.subr.mxu0 0.0
    %1546 = vmatpush1.msra.mxu0 0.0
    %1547 = vmatprep.subr.mxu0 0.0
    %1548 = vmatpush1.msra.mxu0 0.0
    %1549 = vmatprep.subr.mxu0 0.0
    %1550 = vmatpush1.msra.mxu0 0.0
    %1551 = vmatprep.subr.mxu0 0.0
    %1552 = vmatpush1.msra.mxu0 0.0
    %1553 = vmatprep.subr.mxu0 0.0
    %1554 = vmatpush1.msra.mxu0 0.0
    %1555 = vmatprep.subr.mxu0 0.0
    %1556 = vmatpush1.msra.mxu0 0.0
    %1557 = vmatprep.mubr.f32.mxu0 0.0
    %1558 = vmatmul.mubr.f32.gmra.mrb[0].mxu0 %v1479
    %v1559 = vpop.f32.mrb[0].mxu0
    %v1560 = vadd.f32 0.0, %v1559
    %v1561 = vpop.f32.mrb[0].mxu0
    %1562 = vmatprep.mubr.f32.mxu0 0.0
    %1563 = vmatmul.mubr.f32.gmra.mrb[0].mxu0 %v1482
    %v1564 = vpop.f32.mrb[0].mxu0
    %v1565 = vadd.f32 0.0, %v1564
    %v1566 = vpop.f32.mrb[0].mxu0
    %1567 = vmatprep.mubr.f32.mxu0 0.0
    %1568 = vmatmul.mubr.f32.gmra.mrb[0].mxu0 %v1485
    %v1569 = vpop.f32.mrb[0].mxu0
    %v1570 = vadd.f32 0.0, %v1569
    %v1571 = vpop.f32.mrb[0].mxu0
    %1572 = vmatprep.mubr.f32.mxu0 0.0
    %1573 = vmatmul.mubr.f32.gmra.mrb[0].mxu0 %v1488
    %v1574 = vpop.f32.mrb[0].mxu0
    %v1575 = vadd.f32 0.0, %v1574
    %v1576 = vpop.f32.mrb[0].mxu0
    %1577 = vmatprep.mubr.f32.mxu0 0.0
    %1578 = vmatmul.mubr.f32.gmra.mrb[0].mxu0 %v1491
    %v1579 = vpop.f32.mrb[0].mxu0
    %v1580 = vadd.f32 0.0, %v1579
    %v1581 = vpop.f32.mrb[0].mxu0
    %1582 = vdwg.mxu0
    %v1583 = vadd.f32 %v1282, %v1560
    %v1584 = vadd.f32 %v1283, %v1565
    %v1585 = vadd.f32 %v1284, %v1570
    %v1586 = vadd.f32 %v1285, %v1575
    %v1587 = vadd.f32 %v1286, %v1580
    %v1588 = vlaneseq
    %v1589 = vshrl.u32 %v1588, 7
    %v1590 = vsub.s32 3, %v1589
    %v1591 = vrot.slane %v191, %v1590
    %v1592 = vadd.f32 %v1583, %v1591
    %v1593 = vadd.f32 %v1584, %v1591
    %v1594 = vadd.f32 %v1585, %v1591
    %v1595 = vadd.f32 %v1586, %v1591
    %v1596 = vadd.f32 %v1587, %v1591
    %s1597 = scalar_lea.vmem %s8, 4
    %v1598 = vld [vmem:[%s1597] sm:$0xf]
    %v1599 = vsel %vm192, %v1592, 0.0
    %1600 = vadd.xlane.f32.xlu0 %v1599
    %v1601 = vpop.xlane.xlu0 %1600
    %v1602 = vsel %vm192, %v1593, 0.0
    %1603 = vadd.xlane.f32.xlu0 %v1602
    %v1604 = vpop.xlane.xlu0 %1603
    %v1605 = vsel %vm192, %v1594, 0.0
    %1606 = vadd.xlane.f32.xlu0 %v1605
    %v1607 = vpop.xlane.xlu0 %1606
    %v1608 = vsel %vm192, %v1595, 0.0
    %1609 = vadd.xlane.f32.xlu0 %v1608
    %v1610 = vpop.xlane.xlu0 %1609
    %v1611 = vsel %vm205, %v1596, 0.0
    %1612 = vadd.xlane.f32.xlu0 %v1611
    %v1613 = vpop.xlane.xlu0 %1612
    %v1614 = vmul.f32 %v1601, %v209
    %v1615 = vmul.f32 %v1604, %v209
    %v1616 = vmul.f32 %v1607, %v209
    %v1617 = vmul.f32 %v1610, %v209
    %v1618 = vmul.f32 %v1613, %v209
    %v1619 = vsub.f32 %v1592, %v1614
    %v1620 = vsub.f32 %v1593, %v1615
    %v1621 = vsub.f32 %v1594, %v1616
    %v1622 = vsub.f32 %v1595, %v1617
    %v1623 = vsub.f32 %v1596, %v1618
    %v1624 = vmul.f32 %v1619, %v1619
    %v1625 = vmul.f32 %v1620, %v1620
    %v1626 = vmul.f32 %v1621, %v1621
    %v1627 = vmul.f32 %v1622, %v1622
    %v1628 = vmul.f32 %v1623, %v1623
    %v1629 = vsel %vm192, %v1624, 0.0
    %1630 = vadd.xlane.f32.xlu0 %v1629
    %v1631 = vpop.xlane.xlu0 %1630
    %v1632 = vsel %vm192, %v1625, 0.0
    %1633 = vadd.xlane.f32.xlu0 %v1632
    %v1634 = vpop.xlane.xlu0 %1633
    %v1635 = vsel %vm192, %v1626, 0.0
    %1636 = vadd.xlane.f32.xlu0 %v1635
    %v1637 = vpop.xlane.xlu0 %1636
    %v1638 = vsel %vm192, %v1627, 0.0
    %1639 = vadd.xlane.f32.xlu0 %v1638
    %v1640 = vpop.xlane.xlu0 %1639
    %v1641 = vsel %vm205, %v1628, 0.0
    %1642 = vadd.xlane.f32.xlu0 %v1641
    %v1643 = vpop.xlane.xlu0 %1642
    %v1644 = vmul.f32 %v1631, %v209
    %v1645 = vmul.f32 %v1634, %v209
    %v1646 = vmul.f32 %v1637, %v209
    %v1647 = vmul.f32 %v1640, %v209
    %v1648 = vmul.f32 %v1643, %v209
    %v1649 = vadd.f32 %v1644, 1e-05
    %v1650 = vadd.f32 %v1645, 1e-05
    %v1651 = vadd.f32 %v1646, 1e-05
    %v1652 = vadd.f32 %v1647, 1e-05
    %v1653 = vadd.f32 %v1648, 1e-05
    %v1654 = vrsqrt.pop %v1649
    %v1655 = vrsqrt.pop %v1650
    %v1656 = vrsqrt.pop %v1651
    %v1657 = vrsqrt.pop %v1652
    %v1658 = vrsqrt.pop %v1653
    %v1659 = vmul.f32 %v1619, %v1654
    %v1660 = vmul.f32 %v1620, %v1655
    %v1661 = vmul.f32 %v1621, %v1656
    %v1662 = vmul.f32 %v1622, %v1657
    %v1663 = vmul.f32 %v1623, %v1658
    %s1664 = scalar_lea.vmem %s4, 32
    %v1665 = vld [vmem:[%s1664] sm:$0xff]
    %v1666 = vld [vmem:[%s1664 + $0x8] sm:$0xff]
    %v1667 = vld [vmem:[%s1664 + $0x10] sm:$0xff]
    %v1668 = vld [vmem:[%s1664 + $0x18] sm:$0xff]
    %v1669 = vlaneseq
    %v1670 = vshrl.u32 %v1669, 7
    %v1671 = vsub.s32 0, %v1670
    %v1672 = vrot.slane %v1598, %v1671
    %v1674 = vsel %vm192, %v1659, 0
    %v1677 = vsel %vm192, %v1660, 0
    %v1680 = vsel %vm192, %v1661, 0
    %v1683 = vsel %vm192, %v1662, 0
    %v1686 = vsel %vm192, %v1663, 0
    %1688 = vmatprep.subr.mxu0 0.0
    %1689 = vmatpush1.msra.mxu0 %v1665
    %1690 = vmatprep.subr.mxu0 0.0
    %1691 = vmatpush1.msra.mxu0 %v1666
    %1692 = vmatprep.subr.mxu0 0.0
    %1693 = vmatpush1.msra.mxu0 %v1667
    %1694 = vmatprep.subr.mxu0 0.0
    %1695 = vmatpush1.msra.mxu0 %v1668
    %1696 = vmatprep.subr.mxu0 0.0
    %1697 = vmatpush1.msra.mxu0 0.0
    %1698 = vmatprep.subr.mxu0 0.0
    %1699 = vmatpush1.msra.mxu0 0.0
    %1700 = vmatprep.subr.mxu0 0.0
    %1701 = vmatpush1.msra.mxu0 0.0
    %1702 = vmatprep.subr.mxu0 0.0
    %1703 = vmatpush1.msra.mxu0 0.0
    %1704 = vmatprep.subr.mxu0 0.0
    %1705 = vmatpush1.msra.mxu0 0.0
    %1706 = vmatprep.subr.mxu0 0.0
    %1707 = vmatpush1.msra.mxu0 0.0
    %1708 = vmatprep.subr.mxu0 0.0
    %1709 = vmatpush1.msra.mxu0 0.0
    %1710 = vmatprep.subr.mxu0 0.0
    %1711 = vmatpush1.msra.mxu0 0.0
    %1712 = vmatprep.subr.mxu0 0.0
    %1713 = vmatpush1.msra.mxu0 0.0
    %1714 = vmatprep.subr.mxu0 0.0
    %1715 = vmatpush1.msra.mxu0 0.0
    %1716 = vmatprep.subr.mxu0 0.0
    %1717 = vmatpush1.msra.mxu0 0.0
    %1718 = vmatprep.subr.mxu0 0.0
    %1719 = vmatpush1.msra.mxu0 0.0
    %1720 = vmatprep.subr.mxu0 0.0
    %1721 = vmatpush1.msra.mxu0 0.0
    %1722 = vmatprep.subr.mxu0 0.0
    %1723 = vmatpush1.msra.mxu0 0.0
    %1724 = vmatprep.subr.mxu0 0.0
    %1725 = vmatpush1.msra.mxu0 0.0
    %1726 = vmatprep.subr.mxu0 0.0
    %1727 = vmatpush1.msra.mxu0 0.0
    %1728 = vmatprep.subr.mxu0 0.0
    %1729 = vmatpush1.msra.mxu0 0.0
    %1730 = vmatprep.subr.mxu0 0.0
    %1731 = vmatpush1.msra.mxu0 0.0
    %1732 = vmatprep.subr.mxu0 0.0
    %1733 = vmatpush1.msra.mxu0 0.0
    %1734 = vmatprep.subr.mxu0 0.0
    %1735 = vmatpush1.msra.mxu0 0.0
    %1736 = vmatprep.subr.mxu0 0.0
    %1737 = vmatpush1.msra.mxu0 0.0
    %1738 = vmatprep.subr.mxu0 0.0
    %1739 = vmatpush1.msra.mxu0 0.0
    %1740 = vmatprep.subr.mxu0 0.0
    %1741 = vmatpush1.msra.mxu0 0.0
    %1742 = vmatprep.subr.mxu0 0.0
    %1743 = vmatpush1.msra.mxu0 0.0
    %1744 = vmatprep.subr.mxu0 0.0
    %1745 = vmatpush1.msra.mxu0 0.0
    %1746 = vmatprep.subr.mxu0 0.0
    %1747 = vmatpush1.msra.mxu0 0.0
    %1748 = vmatprep.subr.mxu0 0.0
    %1749 = vmatpush1.msra.mxu0 0.0
    %1750 = vmatprep.subr.mxu0 0.0
    %1751 = vmatpush1.msra.mxu0 0.0
    %1752 = vmatprep.mubr.f32.mxu0 0.0
    %1753 = vmatmul.mubr.f32.gmra.mrb[0].mxu0 %v1674
    %v1754 = vpop.f32.mrb[0].mxu0
    %v1755 = vadd.f32 %v1672, %v1754
    %v1756 = vpop.f32.mrb[0].mxu0
    %1757 = vmatprep.mubr.f32.mxu0 0.0
    %1758 = vmatmul.mubr.f32.gmra.mrb[0].mxu0 %v1677
    %v1759 = vpop.f32.mrb[0].mxu0
    %v1760 = vadd.f32 %v1672, %v1759
    %v1761 = vpop.f32.mrb[0].mxu0
    %1762 = vmatprep.mubr.f32.mxu0 0.0
    %1763 = vmatmul.mubr.f32.gmra.mrb[0].mxu0 %v1680
    %v1764 = vpop.f32.mrb[0].mxu0
    %v1765 = vadd.f32 %v1672, %v1764
    %v1766 = vpop.f32.mrb[0].mxu0
    %1767 = vmatprep.mubr.f32.mxu0 0.0
    %1768 = vmatmul.mubr.f32.gmra.mrb[0].mxu0 %v1683
    %v1769 = vpop.f32.mrb[0].mxu0
    %v1770 = vadd.f32 %v1672, %v1769
    %v1771 = vpop.f32.mrb[0].mxu0
    %1772 = vmatprep.mubr.f32.mxu0 0.0
    %1773 = vmatmul.mubr.f32.gmra.mrb[0].mxu0 %v1686
    %v1774 = vpop.f32.mrb[0].mxu0
    %v1775 = vadd.f32 %v1672, %v1774
    %v1776 = vpop.f32.mrb[0].mxu0
    %1777 = vdwg.mxu0
    %v1778 = vsel %vm164, %v1755, 0.0
    %v1779 = vsel %vm164, %v1760, 0.0
    %v1780 = vsel %vm164, %v1765, 0.0
    %v1781 = vsel %vm164, %v1770, 0.0
    %v1782 = vsel %vm164, %v1775, 0.0
    %v1783 = vsel %vm167, %v1755, 0.0
    %v1784 = vsel %vm167, %v1760, 0.0
    %v1785 = vsel %vm167, %v1765, 0.0
    %v1786 = vsel %vm167, %v1770, 0.0
    %v1787 = vsel %vm167, %v1775, 0.0
    %v1788 = vsel %vm170, %v1755, 0.0
    %v1789 = vsel %vm170, %v1760, 0.0
    %v1790 = vsel %vm170, %v1765, 0.0
    %v1791 = vsel %vm170, %v1770, 0.0
    %v1792 = vsel %vm170, %v1775, 0.0
    %v1793 = vsel %vm173, %v1755, 0.0
    %v1794 = vsel %vm173, %v1760, 0.0
    %v1795 = vsel %vm173, %v1765, 0.0
    %v1796 = vsel %vm173, %v1770, 0.0
    %v1797 = vsel %vm173, %v1775, 0.0
    %v1803 = vrot.slane %v1783, 6
    %v1804 = vrot.slane %v1784, 6
    %v1805 = vsel %vm398, %v1803, %v1804
    %v1806 = vrot.slane %v1785, 6
    %v1807 = vsel %vm398, %v1804, %v1806
    %v1808 = vrot.slane %v1786, 6
    %v1809 = vsel %vm398, %v1806, %v1808
    %v1810 = vrot.slane %v1787, 6
    %v1811 = vsel %vm398, %v1808, %v1810
    %v1819 = vrot.slane %v1788, 4
    %v1820 = vrot.slane %v1789, 4
    %v1821 = vsel %vm415, %v1819, %v1820
    %v1822 = vrot.slane %v1790, 4
    %v1823 = vsel %vm415, %v1820, %v1822
    %v1824 = vrot.slane %v1791, 4
    %v1825 = vsel %vm415, %v1822, %v1824
    %v1826 = vrot.slane %v1792, 4
    %v1827 = vsel %vm415, %v1824, %v1826
    %v1835 = vrot.slane %v1793, 2
    %v1836 = vrot.slane %v1794, 2
    %v1837 = vsel %vm432, %v1835, %v1836
    %v1838 = vrot.slane %v1795, 2
    %v1839 = vsel %vm432, %v1836, %v1838
    %v1840 = vrot.slane %v1796, 2
    %v1841 = vsel %vm432, %v1838, %v1840
    %v1842 = vrot.slane %v1797, 2
    %v1843 = vsel %vm432, %v1840, %v1842
    %v1845 = vsel %vm398, %v1782, %v1803
    %v1846 = vsel %vm415, %v1811, %v1819
    %v1847 = vsel %vm432, %v1827, %v1835
    %1853 = vrot.lane.b32.xlu0 %v1755, 96
    %v1854 = vpop.permute.xlu0 %1853
    %1855 = vrot.lane.b32.xlu0 %v1760, 96
    %v1856 = vpop.permute.xlu0 %1855
    %1857 = vrot.lane.b32.xlu0 %v1765, 96
    %v1858 = vpop.permute.xlu0 %1857
    %1859 = vrot.lane.b32.xlu0 %v1770, 96
    %v1860 = vpop.permute.xlu0 %1859
    %1861 = vrot.lane.b32.xlu0 %v1775, 96
    %v1862 = vpop.permute.xlu0 %1861
    %v1864 = vsel %vm192, %v1778, 0
    %v1867 = vsel %vm192, %v1779, 0
    %v1870 = vsel %vm192, %v1780, 0
    %v1873 = vsel %vm192, %v1781, 0
    %v1876 = vsel %vm192, %v1845, 0
    %v1878 = vsel %vm192, %v1805, 0
    %v1880 = vsel %vm192, %v1807, 0
    %v1882 = vsel %vm192, %v1809, 0
    %v1885 = vsel %vm192, %v1846, 0
    %v1887 = vsel %vm192, %v1821, 0
    %v1889 = vsel %vm192, %v1823, 0
    %v1891 = vsel %vm192, %v1825, 0
    %v1894 = vsel %vm192, %v1847, 0
    %v1896 = vsel %vm192, %v1837, 0
    %v1898 = vsel %vm192, %v1839, 0
    %v1900 = vsel %vm192, %v1841, 0
    %v1902 = vsel %vm192, %v1843, 0
    %v1904 = vsel %vm192, %v1854, 0
    %v1906 = vsel %vm192, %v1856, 0
    %v1908 = vsel %vm192, %v1858, 0
    %v1910 = vsel %vm192, %v1860, 0
    %v1912 = vsel %vm192, %v1862, 0
    %1914 = vmatprep.subr.mxu0 0.0
    %1915 = vmatpush1.xpose.msra.mxu0 %v1904
    %1916 = vmatprep.subr.mxu0 0.0
    %1917 = vmatpush1.xpose.msra.mxu0 %v1906
    %1918 = vmatprep.subr.mxu0 0.0
    %1919 = vmatpush1.xpose.msra.mxu0 %v1908
    %1920 = vmatprep.subr.mxu0 0.0
    %1921 = vmatpush1.xpose.msra.mxu0 %v1910
    %1922 = vmatprep.subr.mxu0 0.0
    %1923 = vmatpush1.xpose.msra.mxu0 %v1912
    %1924 = vmatprep.subr.mxu0 0.0
    %1925 = vmatpush1.xpose.msra.mxu0 0.0
    %1926 = vmatprep.subr.mxu0 0.0
    %1927 = vmatpush1.xpose.msra.mxu0 0.0
    %1928 = vmatprep.subr.mxu0 0.0
    %1929 = vmatpush1.xpose.msra.mxu0 0.0
    %1930 = vmatprep.subr.mxu0 0.0
    %1931 = vmatpush1.xpose.msra.mxu0 0.0
    %1932 = vmatprep.subr.mxu0 0.0
    %1933 = vmatpush1.xpose.msra.mxu0 0.0
    %1934 = vmatprep.subr.mxu0 0.0
    %1935 = vmatpush1.xpose.msra.mxu0 0.0
    %1936 = vmatprep.subr.mxu0 0.0
    %1937 = vmatpush1.xpose.msra.mxu0 0.0
    %1938 = vmatprep.subr.mxu0 0.0
    %1939 = vmatpush1.xpose.msra.mxu0 0.0
    %1940 = vmatprep.subr.mxu0 0.0
    %1941 = vmatpush1.xpose.msra.mxu0 0.0
    %1942 = vmatprep.subr.mxu0 0.0
    %1943 = vmatpush1.xpose.msra.mxu0 0.0
    %1944 = vmatprep.subr.mxu0 0.0
    %1945 = vmatpush1.xpose.msra.mxu0 0.0
    %1946 = vmatprep.subr.mxu0 0.0
    %1947 = vmatpush1.xpose.msra.mxu0 0.0
    %1948 = vmatprep.subr.mxu0 0.0
    %1949 = vmatpush1.xpose.msra.mxu0 0.0
    %1950 = vmatprep.subr.mxu0 0.0
    %1951 = vmatpush1.xpose.msra.mxu0 0.0
    %1952 = vmatprep.subr.mxu0 0.0
    %1953 = vmatpush1.xpose.msra.mxu0 0.0
    %1954 = vmatprep.subr.mxu0 0.0
    %1955 = vmatpush1.xpose.msra.mxu0 0.0
    %1956 = vmatprep.subr.mxu0 0.0
    %1957 = vmatpush1.xpose.msra.mxu0 0.0
    %1958 = vmatprep.subr.mxu0 0.0
    %1959 = vmatpush1.xpose.msra.mxu0 0.0
    %1960 = vmatprep.subr.mxu0 0.0
    %1961 = vmatpush1.xpose.msra.mxu0 0.0
    %1962 = vmatprep.subr.mxu0 0.0
    %1963 = vmatpush1.xpose.msra.mxu0 0.0
    %1964 = vmatprep.subr.mxu0 0.0
    %1965 = vmatpush1.xpose.msra.mxu0 0.0
    %1966 = vmatprep.subr.mxu0 0.0
    %1967 = vmatpush1.xpose.msra.mxu0 0.0
    %1968 = vmatprep.subr.mxu0 0.0
    %1969 = vmatpush1.xpose.msra.mxu0 0.0
    %1970 = vmatprep.subr.mxu0 0.0
    %1971 = vmatpush1.xpose.msra.mxu0 0.0
    %1972 = vmatprep.subr.mxu0 0.0
    %1973 = vmatpush1.xpose.msra.mxu0 0.0
    %1974 = vmatprep.subr.mxu0 0.0
    %1975 = vmatpush1.xpose.msra.mxu0 0.0
    %1976 = vmatprep.subr.mxu0 0.0
    %1977 = vmatpush1.xpose.msra.mxu0 0.0
    %1978 = vmatprep.mubr.f32.mxu0 0.0
    %1979 = vmatmul.mubr.f32.gmra.mrb[0].mxu0 %v1864
    %v1980 = vpop.f32.mrb[0].mxu0
    %v1981 = vadd.f32 %v174, %v1980
    %v1982 = vpop.f32.mrb[0].mxu0
    %1983 = vmatprep.mubr.f32.mxu0 0.0
    %1984 = vmatmul.mubr.f32.gmra.mrb[0].mxu0 %v1867
    %v1985 = vpop.f32.mrb[0].mxu0
    %v1986 = vadd.f32 %v175, %v1985
    %v1987 = vpop.f32.mrb[0].mxu0
    %1988 = vmatprep.mubr.f32.mxu0 0.0
    %1989 = vmatmul.mubr.f32.gmra.mrb[0].mxu0 %v1870
    %v1990 = vpop.f32.mrb[0].mxu0
    %v1991 = vadd.f32 %v176, %v1990
    %v1992 = vpop.f32.mrb[0].mxu0
    %1993 = vmatprep.mubr.f32.mxu0 0.0
    %1994 = vmatmul.mubr.f32.gmra.mrb[0].mxu0 %v1873
    %v1995 = vpop.f32.mrb[0].mxu0
    %v1996 = vadd.f32 %v177, %v1995
    %v1997 = vpop.f32.mrb[0].mxu0
    %1998 = vmatprep.mubr.f32.mxu0 0.0
    %1999 = vmatmul.mubr.f32.gmra.mrb[0].mxu0 %v1876
    %v2000 = vpop.f32.mrb[0].mxu0
    %v2001 = vadd.f32 %v178, %v2000
    %v2002 = vpop.f32.mrb[0].mxu0
    %2003 = vmatprep.mubr.f32.mxu0 0.0
    %2004 = vmatmul.mubr.f32.gmra.mrb[0].mxu0 %v1878
    %v2005 = vpop.f32.mrb[0].mxu0
    %v2006 = vadd.f32 %v179, %v2005
    %v2007 = vpop.f32.mrb[0].mxu0
    %2008 = vmatprep.mubr.f32.mxu0 0.0
    %2009 = vmatmul.mubr.f32.gmra.mrb[0].mxu0 %v1880
    %v2010 = vpop.f32.mrb[0].mxu0
    %v2011 = vadd.f32 %v180, %v2010
    %v2012 = vpop.f32.mrb[0].mxu0
    %2013 = vmatprep.mubr.f32.mxu0 0.0
    %2014 = vmatmul.mubr.f32.gmra.mrb[0].mxu0 %v1882
    %v2015 = vpop.f32.mrb[0].mxu0
    %v2016 = vadd.f32 %v181, %v2015
    %v2017 = vpop.f32.mrb[0].mxu0
    %2018 = vmatprep.mubr.f32.mxu0 0.0
    %2019 = vmatmul.mubr.f32.gmra.mrb[0].mxu0 %v1885
    %v2020 = vpop.f32.mrb[0].mxu0
    %v2021 = vadd.f32 %v182, %v2020
    %v2022 = vpop.f32.mrb[0].mxu0
    %2023 = vmatprep.mubr.f32.mxu0 0.0
    %2024 = vmatmul.mubr.f32.gmra.mrb[0].mxu0 %v1887
    %v2025 = vpop.f32.mrb[0].mxu0
    %v2026 = vadd.f32 %v183, %v2025
    %v2027 = vpop.f32.mrb[0].mxu0
    %2028 = vmatprep.mubr.f32.mxu0 0.0
    %2029 = vmatmul.mubr.f32.gmra.mrb[0].mxu0 %v1889
    %v2030 = vpop.f32.mrb[0].mxu0
    %v2031 = vadd.f32 %v184, %v2030
    %v2032 = vpop.f32.mrb[0].mxu0
    %2033 = vmatprep.mubr.f32.mxu0 0.0
    %2034 = vmatmul.mubr.f32.gmra.mrb[0].mxu0 %v1891
    %v2035 = vpop.f32.mrb[0].mxu0
    %v2036 = vadd.f32 %v185, %v2035
    %v2037 = vpop.f32.mrb[0].mxu0
    %2038 = vmatprep.mubr.f32.mxu0 0.0
    %2039 = vmatmul.mubr.f32.gmra.mrb[0].mxu0 %v1894
    %v2040 = vpop.f32.mrb[0].mxu0
    %v2041 = vadd.f32 %v186, %v2040
    %v2042 = vpop.f32.mrb[0].mxu0
    %2043 = vmatprep.mubr.f32.mxu0 0.0
    %2044 = vmatmul.mubr.f32.gmra.mrb[0].mxu0 %v1896
    %v2045 = vpop.f32.mrb[0].mxu0
    %v2046 = vadd.f32 %v187, %v2045
    %v2047 = vpop.f32.mrb[0].mxu0
    %2048 = vmatprep.mubr.f32.mxu0 0.0
    %2049 = vmatmul.mubr.f32.gmra.mrb[0].mxu0 %v1898
    %v2050 = vpop.f32.mrb[0].mxu0
    %v2051 = vadd.f32 %v188, %v2050
    %v2052 = vpop.f32.mrb[0].mxu0
    %2053 = vmatprep.mubr.f32.mxu0 0.0
    %2054 = vmatmul.mubr.f32.gmra.mrb[0].mxu0 %v1900
    %v2055 = vpop.f32.mrb[0].mxu0
    %v2056 = vadd.f32 %v189, %v2055
    %v2057 = vpop.f32.mrb[0].mxu0
    %2058 = vmatprep.mubr.f32.mxu0 0.0
    %2059 = vmatmul.mubr.f32.gmra.mrb[0].mxu0 %v1902
    %v2060 = vpop.f32.mrb[0].mxu0
    %v2061 = vadd.f32 %v190, %v2060
    %v2062 = vpop.f32.mrb[0].mxu0
    %2063 = vdwg.mxu0
    %v2064 = vsel %vm662, %v1981, -inf
    %2065 = vmax.xlane.f32.xlu0 %v2064
    %v2066 = vpop.xlane.xlu0 %2065
    %v2067 = vsel %vm662, %v1986, -inf
    %2068 = vmax.xlane.f32.xlu0 %v2067
    %v2069 = vpop.xlane.xlu0 %2068
    %v2070 = vsel %vm662, %v1991, -inf
    %2071 = vmax.xlane.f32.xlu0 %v2070
    %v2072 = vpop.xlane.xlu0 %2071
    %v2073 = vsel %vm662, %v1996, -inf
    %2074 = vmax.xlane.f32.xlu0 %v2073
    %v2075 = vpop.xlane.xlu0 %2074
    %v2076 = vsel %vm662, %v2001, -inf
    %2077 = vmax.xlane.f32.xlu0 %v2076
    %v2078 = vpop.xlane.xlu0 %2077
    %v2079 = vsel %vm662, %v2006, -inf
    %2080 = vmax.xlane.f32.xlu0 %v2079
    %v2081 = vpop.xlane.xlu0 %2080
    %v2082 = vsel %vm662, %v2011, -inf
    %2083 = vmax.xlane.f32.xlu0 %v2082
    %v2084 = vpop.xlane.xlu0 %2083
    %v2085 = vsel %vm662, %v2016, -inf
    %2086 = vmax.xlane.f32.xlu0 %v2085
    %v2087 = vpop.xlane.xlu0 %2086
    %v2088 = vsel %vm662, %v2021, -inf
    %2089 = vmax.xlane.f32.xlu0 %v2088
    %v2090 = vpop.xlane.xlu0 %2089
    %v2091 = vsel %vm662, %v2026, -inf
    %2092 = vmax.xlane.f32.xlu0 %v2091
    %v2093 = vpop.xlane.xlu0 %2092
    %v2094 = vsel %vm662, %v2031, -inf
    %2095 = vmax.xlane.f32.xlu0 %v2094
    %v2096 = vpop.xlane.xlu0 %2095
    %v2097 = vsel %vm662, %v2036, -inf
    %2098 = vmax.xlane.f32.xlu0 %v2097
    %v2099 = vpop.xlane.xlu0 %2098
    %v2100 = vsel %vm662, %v2041, -inf
    %2101 = vmax.xlane.f32.xlu0 %v2100
    %v2102 = vpop.xlane.xlu0 %2101
    %v2103 = vsel %vm662, %v2046, -inf
    %2104 = vmax.xlane.f32.xlu0 %v2103
    %v2105 = vpop.xlane.xlu0 %2104
    %v2106 = vsel %vm662, %v2051, -inf
    %2107 = vmax.xlane.f32.xlu0 %v2106
    %v2108 = vpop.xlane.xlu0 %2107
    %v2109 = vsel %vm662, %v2056, -inf
    %2110 = vmax.xlane.f32.xlu0 %v2109
    %v2111 = vpop.xlane.xlu0 %2110
    %v2112 = vsel %vm662, %v2061, -inf
    %2113 = vmax.xlane.f32.xlu0 %v2112
    %v2114 = vpop.xlane.xlu0 %2113
    %v2115 = vsub.f32 %v1981, %v2066
    %v2116 = vsub.f32 %v1986, %v2069
    %v2117 = vsub.f32 %v1991, %v2072
    %v2118 = vsub.f32 %v1996, %v2075
    %v2119 = vsub.f32 %v2001, %v2078
    %v2120 = vsub.f32 %v2006, %v2081
    %v2121 = vsub.f32 %v2011, %v2084
    %v2122 = vsub.f32 %v2016, %v2087
    %v2123 = vsub.f32 %v2021, %v2090
    %v2124 = vsub.f32 %v2026, %v2093
    %v2125 = vsub.f32 %v2031, %v2096
    %v2126 = vsub.f32 %v2036, %v2099
    %v2127 = vsub.f32 %v2041, %v2102
    %v2128 = vsub.f32 %v2046, %v2105
    %v2129 = vsub.f32 %v2051, %v2108
    %v2130 = vsub.f32 %v2056, %v2111
    %v2131 = vsub.f32 %v2061, %v2114
    %v2132 = vmul.f32 %v2115, 1.442695
    %v2133 = vpow.pop %v2132
    %v2134 = vmul.f32 %v2116, 1.442695
    %v2135 = vpow.pop %v2134
    %v2136 = vmul.f32 %v2117, 1.442695
    %v2137 = vpow.pop %v2136
    %v2138 = vmul.f32 %v2118, 1.442695
    %v2139 = vpow.pop %v2138
    %v2140 = vmul.f32 %v2119, 1.442695
    %v2141 = vpow.pop %v2140
    %v2142 = vmul.f32 %v2120, 1.442695
    %v2143 = vpow.pop %v2142
    %v2144 = vmul.f32 %v2121, 1.442695
    %v2145 = vpow.pop %v2144
    %v2146 = vmul.f32 %v2122, 1.442695
    %v2147 = vpow.pop %v2146
    %v2148 = vmul.f32 %v2123, 1.442695
    %v2149 = vpow.pop %v2148
    %v2150 = vmul.f32 %v2124, 1.442695
    %v2151 = vpow.pop %v2150
    %v2152 = vmul.f32 %v2125, 1.442695
    %v2153 = vpow.pop %v2152
    %v2154 = vmul.f32 %v2126, 1.442695
    %v2155 = vpow.pop %v2154
    %v2156 = vmul.f32 %v2127, 1.442695
    %v2157 = vpow.pop %v2156
    %v2158 = vmul.f32 %v2128, 1.442695
    %v2159 = vpow.pop %v2158
    %v2160 = vmul.f32 %v2129, 1.442695
    %v2161 = vpow.pop %v2160
    %v2162 = vmul.f32 %v2130, 1.442695
    %v2163 = vpow.pop %v2162
    %v2164 = vmul.f32 %v2131, 1.442695
    %v2165 = vpow.pop %v2164
    %v2166 = vsel %vm662, %v2133, 0.0
    %2167 = vadd.xlane.f32.xlu0 %v2166
    %v2168 = vpop.xlane.xlu0 %2167
    %v2169 = vsel %vm662, %v2135, 0.0
    %2170 = vadd.xlane.f32.xlu0 %v2169
    %v2171 = vpop.xlane.xlu0 %2170
    %v2172 = vsel %vm662, %v2137, 0.0
    %2173 = vadd.xlane.f32.xlu0 %v2172
    %v2174 = vpop.xlane.xlu0 %2173
    %v2175 = vsel %vm662, %v2139, 0.0
    %2176 = vadd.xlane.f32.xlu0 %v2175
    %v2177 = vpop.xlane.xlu0 %2176
    %v2178 = vsel %vm662, %v2141, 0.0
    %2179 = vadd.xlane.f32.xlu0 %v2178
    %v2180 = vpop.xlane.xlu0 %2179
    %v2181 = vsel %vm662, %v2143, 0.0
    %2182 = vadd.xlane.f32.xlu0 %v2181
    %v2183 = vpop.xlane.xlu0 %2182
    %v2184 = vsel %vm662, %v2145, 0.0
    %2185 = vadd.xlane.f32.xlu0 %v2184
    %v2186 = vpop.xlane.xlu0 %2185
    %v2187 = vsel %vm662, %v2147, 0.0
    %2188 = vadd.xlane.f32.xlu0 %v2187
    %v2189 = vpop.xlane.xlu0 %2188
    %v2190 = vsel %vm662, %v2149, 0.0
    %2191 = vadd.xlane.f32.xlu0 %v2190
    %v2192 = vpop.xlane.xlu0 %2191
    %v2193 = vsel %vm662, %v2151, 0.0
    %2194 = vadd.xlane.f32.xlu0 %v2193
    %v2195 = vpop.xlane.xlu0 %2194
    %v2196 = vsel %vm662, %v2153, 0.0
    %2197 = vadd.xlane.f32.xlu0 %v2196
    %v2198 = vpop.xlane.xlu0 %2197
    %v2199 = vsel %vm662, %v2155, 0.0
    %2200 = vadd.xlane.f32.xlu0 %v2199
    %v2201 = vpop.xlane.xlu0 %2200
    %v2202 = vsel %vm662, %v2157, 0.0
    %2203 = vadd.xlane.f32.xlu0 %v2202
    %v2204 = vpop.xlane.xlu0 %2203
    %v2205 = vsel %vm662, %v2159, 0.0
    %2206 = vadd.xlane.f32.xlu0 %v2205
    %v2207 = vpop.xlane.xlu0 %2206
    %v2208 = vsel %vm662, %v2161, 0.0
    %2209 = vadd.xlane.f32.xlu0 %v2208
    %v2210 = vpop.xlane.xlu0 %2209
    %v2211 = vsel %vm662, %v2163, 0.0
    %2212 = vadd.xlane.f32.xlu0 %v2211
    %v2213 = vpop.xlane.xlu0 %2212
    %v2214 = vsel %vm662, %v2165, 0.0
    %2215 = vadd.xlane.f32.xlu0 %v2214
    %v2216 = vpop.xlane.xlu0 %2215
    %v2217 = vrcp.pop %v2168
    %v2218 = vrcp.pop %v2171
    %v2219 = vrcp.pop %v2174
    %v2220 = vrcp.pop %v2177
    %v2221 = vrcp.pop %v2180
    %v2222 = vrcp.pop %v2183
    %v2223 = vrcp.pop %v2186
    %v2224 = vrcp.pop %v2189
    %v2225 = vrcp.pop %v2192
    %v2226 = vrcp.pop %v2195
    %v2227 = vrcp.pop %v2198
    %v2228 = vrcp.pop %v2201
    %v2229 = vrcp.pop %v2204
    %v2230 = vrcp.pop %v2207
    %v2231 = vrcp.pop %v2210
    %v2232 = vrcp.pop %v2213
    %v2233 = vrcp.pop %v2216
    %v2234 = vmul.f32 %v2133, %v2217
    %v2235 = vmul.f32 %v2135, %v2218
    %v2236 = vmul.f32 %v2137, %v2219
    %v2237 = vmul.f32 %v2139, %v2220
    %v2238 = vmul.f32 %v2141, %v2221
    %v2239 = vmul.f32 %v2143, %v2222
    %v2240 = vmul.f32 %v2145, %v2223
    %v2241 = vmul.f32 %v2147, %v2224
    %v2242 = vmul.f32 %v2149, %v2225
    %v2243 = vmul.f32 %v2151, %v2226
    %v2244 = vmul.f32 %v2153, %v2227
    %v2245 = vmul.f32 %v2155, %v2228
    %v2246 = vmul.f32 %v2157, %v2229
    %v2247 = vmul.f32 %v2159, %v2230
    %v2248 = vmul.f32 %v2161, %v2231
    %v2249 = vmul.f32 %v2163, %v2232
    %v2250 = vmul.f32 %v2165, %v2233
    %2251 = vrot.lane.b32.xlu0 %v1755, 64
    %v2252 = vpop.permute.xlu0 %2251
    %2253 = vrot.lane.b32.xlu0 %v1760, 64
    %v2254 = vpop.permute.xlu0 %2253
    %2255 = vrot.lane.b32.xlu0 %v1765, 64
    %v2256 = vpop.permute.xlu0 %2255
    %2257 = vrot.lane.b32.xlu0 %v1770, 64
    %v2258 = vpop.permute.xlu0 %2257
    %2259 = vrot.lane.b32.xlu0 %v1775, 64
    %v2260 = vpop.permute.xlu0 %2259
    %v2266 = vsel %vm662, %v2234, 0
    %v2269 = vsel %vm662, %v2235, 0
    %v2272 = vsel %vm662, %v2236, 0
    %v2275 = vsel %vm662, %v2237, 0
    %v2278 = vsel %vm662, %v2238, 0
    %v2281 = vsel %vm662, %v2239, 0
    %v2284 = vsel %vm662, %v2240, 0
    %v2287 = vsel %vm662, %v2241, 0
    %v2290 = vsel %vm662, %v2242, 0
    %v2293 = vsel %vm662, %v2243, 0
    %v2296 = vsel %vm662, %v2244, 0
    %v2299 = vsel %vm662, %v2245, 0
    %v2302 = vsel %vm662, %v2246, 0
    %v2305 = vsel %vm662, %v2247, 0
    %v2308 = vsel %vm662, %v2248, 0
    %v2311 = vsel %vm662, %v2249, 0
    %v2314 = vsel %vm662, %v2250, 0
    %v2316 = vsel %vm398, %v2260, 0
    %2318 = vmatprep.subr.mxu0 0.0
    %2319 = vmatpush1.msra.mxu0 %v2252
    %2320 = vmatprep.subr.mxu0 0.0
    %2321 = vmatpush1.msra.mxu0 %v2254
    %2322 = vmatprep.subr.mxu0 0.0
    %2323 = vmatpush1.msra.mxu0 %v2256
    %2324 = vmatprep.subr.mxu0 0.0
    %2325 = vmatpush1.msra.mxu0 %v2258
    %2326 = vmatprep.subr.mxu0 0.0
    %2327 = vmatpush1.msra.mxu0 %v2316
    %2328 = vmatprep.subr.mxu0 0.0
    %2329 = vmatpush1.msra.mxu0 0.0
    %2330 = vmatprep.subr.mxu0 0.0
    %2331 = vmatpush1.msra.mxu0 0.0
    %2332 = vmatprep.subr.mxu0 0.0
    %2333 = vmatpush1.msra.mxu0 0.0
    %2334 = vmatprep.subr.mxu0 0.0
    %2335 = vmatpush1.msra.mxu0 0.0
    %2336 = vmatprep.subr.mxu0 0.0
    %2337 = vmatpush1.msra.mxu0 0.0
    %2338 = vmatprep.subr.mxu0 0.0
    %2339 = vmatpush1.msra.mxu0 0.0
    %2340 = vmatprep.subr.mxu0 0.0
    %2341 = vmatpush1.msra.mxu0 0.0
    %2342 = vmatprep.subr.mxu0 0.0
    %2343 = vmatpush1.msra.mxu0 0.0
    %2344 = vmatprep.subr.mxu0 0.0
    %2345 = vmatpush1.msra.mxu0 0.0
    %2346 = vmatprep.subr.mxu0 0.0
    %2347 = vmatpush1.msra.mxu0 0.0
    %2348 = vmatprep.subr.mxu0 0.0
    %2349 = vmatpush1.msra.mxu0 0.0
    %2350 = vmatprep.subr.mxu0 0.0
    %2351 = vmatpush1.msra.mxu0 0.0
    %2352 = vmatprep.subr.mxu0 0.0
    %2353 = vmatpush1.msra.mxu0 0.0
    %2354 = vmatprep.subr.mxu0 0.0
    %2355 = vmatpush1.msra.mxu0 0.0
    %2356 = vmatprep.subr.mxu0 0.0
    %2357 = vmatpush1.msra.mxu0 0.0
    %2358 = vmatprep.subr.mxu0 0.0
    %2359 = vmatpush1.msra.mxu0 0.0
    %2360 = vmatprep.subr.mxu0 0.0
    %2361 = vmatpush1.msra.mxu0 0.0
    %2362 = vmatprep.subr.mxu0 0.0
    %2363 = vmatpush1.msra.mxu0 0.0
    %2364 = vmatprep.subr.mxu0 0.0
    %2365 = vmatpush1.msra.mxu0 0.0
    %2366 = vmatprep.subr.mxu0 0.0
    %2367 = vmatpush1.msra.mxu0 0.0
    %2368 = vmatprep.subr.mxu0 0.0
    %2369 = vmatpush1.msra.mxu0 0.0
    %2370 = vmatprep.subr.mxu0 0.0
    %2371 = vmatpush1.msra.mxu0 0.0
    %2372 = vmatprep.subr.mxu0 0.0
    %2373 = vmatpush1.msra.mxu0 0.0
    %2374 = vmatprep.subr.mxu0 0.0
    %2375 = vmatpush1.msra.mxu0 0.0
    %2376 = vmatprep.subr.mxu0 0.0
    %2377 = vmatpush1.msra.mxu0 0.0
    %2378 = vmatprep.subr.mxu0 0.0
    %2379 = vmatpush1.msra.mxu0 0.0
    %2380 = vmatprep.subr.mxu0 0.0
    %2381 = vmatpush1.msra.mxu0 0.0
    %2382 = vmatprep.mubr.f32.mxu0 0.0
    %2383 = vmatmul.mubr.f32.gmra.mrb[0].mxu0 %v2266
    %v2384 = vpop.f32.mrb[0].mxu0
    %v2385 = vadd.f32 0.0, %v2384
    %v2386 = vpop.f32.mrb[0].mxu0
    %2387 = vmatprep.mubr.f32.mxu0 0.0
    %2388 = vmatmul.mubr.f32.gmra.mrb[0].mxu0 %v2269
    %v2389 = vpop.f32.mrb[0].mxu0
    %v2390 = vadd.f32 0.0, %v2389
    %v2391 = vpop.f32.mrb[0].mxu0
    %2392 = vmatprep.mubr.f32.mxu0 0.0
    %2393 = vmatmul.mubr.f32.gmra.mrb[0].mxu0 %v2272
    %v2394 = vpop.f32.mrb[0].mxu0
    %v2395 = vadd.f32 0.0, %v2394
    %v2396 = vpop.f32.mrb[0].mxu0
    %2397 = vmatprep.mubr.f32.mxu0 0.0
    %2398 = vmatmul.mubr.f32.gmra.mrb[0].mxu0 %v2275
    %v2399 = vpop.f32.mrb[0].mxu0
    %v2400 = vadd.f32 0.0, %v2399
    %v2401 = vpop.f32.mrb[0].mxu0
    %2402 = vmatprep.mubr.f32.mxu0 0.0
    %2403 = vmatmul.mubr.f32.gmra.mrb[0].mxu0 %v2278
    %v2404 = vpop.f32.mrb[0].mxu0
    %v2405 = vadd.f32 0.0, %v2404
    %v2406 = vpop.f32.mrb[0].mxu0
    %2407 = vmatprep.mubr.f32.mxu0 0.0
    %2408 = vmatmul.mubr.f32.gmra.mrb[0].mxu0 %v2281
    %v2409 = vpop.f32.mrb[0].mxu0
    %v2410 = vadd.f32 0.0, %v2409
    %v2411 = vpop.f32.mrb[0].mxu0
    %2412 = vmatprep.mubr.f32.mxu0 0.0
    %2413 = vmatmul.mubr.f32.gmra.mrb[0].mxu0 %v2284
    %v2414 = vpop.f32.mrb[0].mxu0
    %v2415 = vadd.f32 0.0, %v2414
    %v2416 = vpop.f32.mrb[0].mxu0
    %2417 = vmatprep.mubr.f32.mxu0 0.0
    %2418 = vmatmul.mubr.f32.gmra.mrb[0].mxu0 %v2287
    %v2419 = vpop.f32.mrb[0].mxu0
    %v2420 = vadd.f32 0.0, %v2419
    %v2421 = vpop.f32.mrb[0].mxu0
    %2422 = vmatprep.mubr.f32.mxu0 0.0
    %2423 = vmatmul.mubr.f32.gmra.mrb[0].mxu0 %v2290
    %v2424 = vpop.f32.mrb[0].mxu0
    %v2425 = vadd.f32 0.0, %v2424
    %v2426 = vpop.f32.mrb[0].mxu0
    %2427 = vmatprep.mubr.f32.mxu0 0.0
    %2428 = vmatmul.mubr.f32.gmra.mrb[0].mxu0 %v2293
    %v2429 = vpop.f32.mrb[0].mxu0
    %v2430 = vadd.f32 0.0, %v2429
    %v2431 = vpop.f32.mrb[0].mxu0
    %2432 = vmatprep.mubr.f32.mxu0 0.0
    %2433 = vmatmul.mubr.f32.gmra.mrb[0].mxu0 %v2296
    %v2434 = vpop.f32.mrb[0].mxu0
    %v2435 = vadd.f32 0.0, %v2434
    %v2436 = vpop.f32.mrb[0].mxu0
    %2437 = vmatprep.mubr.f32.mxu0 0.0
    %2438 = vmatmul.mubr.f32.gmra.mrb[0].mxu0 %v2299
    %v2439 = vpop.f32.mrb[0].mxu0
    %v2440 = vadd.f32 0.0, %v2439
    %v2441 = vpop.f32.mrb[0].mxu0
    %2442 = vmatprep.mubr.f32.mxu0 0.0
    %2443 = vmatmul.mubr.f32.gmra.mrb[0].mxu0 %v2302
    %v2444 = vpop.f32.mrb[0].mxu0
    %v2445 = vadd.f32 0.0, %v2444
    %v2446 = vpop.f32.mrb[0].mxu0
    %2447 = vmatprep.mubr.f32.mxu0 0.0
    %2448 = vmatmul.mubr.f32.gmra.mrb[0].mxu0 %v2305
    %v2449 = vpop.f32.mrb[0].mxu0
    %v2450 = vadd.f32 0.0, %v2449
    %v2451 = vpop.f32.mrb[0].mxu0
    %2452 = vmatprep.mubr.f32.mxu0 0.0
    %2453 = vmatmul.mubr.f32.gmra.mrb[0].mxu0 %v2308
    %v2454 = vpop.f32.mrb[0].mxu0
    %v2455 = vadd.f32 0.0, %v2454
    %v2456 = vpop.f32.mrb[0].mxu0
    %2457 = vmatprep.mubr.f32.mxu0 0.0
    %2458 = vmatmul.mubr.f32.gmra.mrb[0].mxu0 %v2311
    %v2459 = vpop.f32.mrb[0].mxu0
    %v2460 = vadd.f32 0.0, %v2459
    %v2461 = vpop.f32.mrb[0].mxu0
    %2462 = vmatprep.mubr.f32.mxu0 0.0
    %2463 = vmatmul.mubr.f32.gmra.mrb[0].mxu0 %v2314
    %v2464 = vpop.f32.mrb[0].mxu0
    %v2465 = vadd.f32 0.0, %v2464
    %v2466 = vpop.f32.mrb[0].mxu0
    %2467 = vdwg.mxu0
    %v2468 = vsel %vm164, %v2385, 0.0
    %v2469 = vsel %vm164, %v2390, 0.0
    %v2470 = vsel %vm164, %v2395, 0.0
    %v2471 = vsel %vm164, %v2400, 0.0
    %v2472 = vsel %vm164, %v2405, 0.0
    %v2473 = vadd.f32 %v2468, 0.0
    %v2474 = vadd.f32 %v2469, 0.0
    %v2475 = vadd.f32 %v2470, 0.0
    %v2476 = vadd.f32 %v2471, 0.0
    %v2477 = vadd.f32 %v2472, 0.0
    %v2478 = vsel %vm167, %v2405, 0.0
    %v2479 = vsel %vm167, %v2410, 0.0
    %v2480 = vsel %vm167, %v2415, 0.0
    %v2481 = vsel %vm167, %v2420, 0.0
    %v2482 = vsel %vm167, %v2425, 0.0
    %v2488 = vrot.slane %v2478, 2
    %v2489 = vrot.slane %v2479, 2
    %v2490 = vsel %vm432, %v2488, %v2489
    %v2491 = vrot.slane %v2480, 2
    %v2492 = vsel %vm432, %v2489, %v2491
    %v2493 = vrot.slane %v2481, 2
    %v2494 = vsel %vm432, %v2491, %v2493
    %v2495 = vrot.slane %v2482, 2
    %v2496 = vsel %vm432, %v2493, %v2495
    %v2502 = vadd.f32 %v2473, %v2490
    %v2503 = vadd.f32 %v2474, %v2492
    %v2504 = vadd.f32 %v2475, %v2494
    %v2505 = vadd.f32 %v2476, %v2496
    %v2506 = vadd.f32 %v2477, %v2495
    %v2507 = vsel %vm170, %v2425, 0.0
    %v2508 = vsel %vm170, %v2430, 0.0
    %v2509 = vsel %vm170, %v2435, 0.0
    %v2510 = vsel %vm170, %v2440, 0.0
    %v2511 = vsel %vm170, %v2445, 0.0
    %v2517 = vrot.slane %v2507, 4
    %v2518 = vrot.slane %v2508, 4
    %v2519 = vsel %vm415, %v2517, %v2518
    %v2520 = vrot.slane %v2509, 4
    %v2521 = vsel %vm415, %v2518, %v2520
    %v2522 = vrot.slane %v2510, 4
    %v2523 = vsel %vm415, %v2520, %v2522
    %v2524 = vrot.slane %v2511, 4
    %v2525 = vsel %vm415, %v2522, %v2524
    %v2531 = vadd.f32 %v2502, %v2519
    %v2532 = vadd.f32 %v2503, %v2521
    %v2533 = vadd.f32 %v2504, %v2523
    %v2534 = vadd.f32 %v2505, %v2525
    %v2535 = vadd.f32 %v2506, %v2524
    %v2536 = vsel %vm173, %v2445, 0.0
    %v2537 = vsel %vm173, %v2450, 0.0
    %v2538 = vsel %vm173, %v2455, 0.0
    %v2539 = vsel %vm173, %v2460, 0.0
    %v2540 = vsel %vm173, %v2465, 0.0
    %v2546 = vrot.slane %v2536, 6
    %v2547 = vrot.slane %v2537, 6
    %v2548 = vsel %vm398, %v2546, %v2547
    %v2549 = vrot.slane %v2538, 6
    %v2550 = vsel %vm398, %v2547, %v2549
    %v2551 = vrot.slane %v2539, 6
    %v2552 = vsel %vm398, %v2549, %v2551
    %v2553 = vrot.slane %v2540, 6
    %v2554 = vsel %vm398, %v2551, %v2553
    %v2560 = vadd.f32 %v2531, %v2548
    %v2561 = vadd.f32 %v2532, %v2550
    %v2562 = vadd.f32 %v2533, %v2552
    %v2563 = vadd.f32 %v2534, %v2554
    %v2564 = vadd.f32 %v2535, %v2553
    %s2565 = scalar_lea.vmem %s5, 32
    %v2566 = vld [vmem:[%s2565] sm:$0xff]
    %v2567 = vld [vmem:[%s2565 + $0x8] sm:$0xff]
    %v2568 = vld [vmem:[%s2565 + $0x10] sm:$0xff]
    %v2569 = vld [vmem:[%s2565 + $0x18] sm:$0xff]
    %v2571 = vsel %vm192, %v2560, 0
    %v2574 = vsel %vm192, %v2561, 0
    %v2577 = vsel %vm192, %v2562, 0
    %v2580 = vsel %vm192, %v2563, 0
    %v2583 = vsel %vm192, %v2564, 0
    %2585 = vmatprep.subr.mxu0 0.0
    %2586 = vmatpush1.msra.mxu0 %v2566
    %2587 = vmatprep.subr.mxu0 0.0
    %2588 = vmatpush1.msra.mxu0 %v2567
    %2589 = vmatprep.subr.mxu0 0.0
    %2590 = vmatpush1.msra.mxu0 %v2568
    %2591 = vmatprep.subr.mxu0 0.0
    %2592 = vmatpush1.msra.mxu0 %v2569
    %2593 = vmatprep.subr.mxu0 0.0
    %2594 = vmatpush1.msra.mxu0 0.0
    %2595 = vmatprep.subr.mxu0 0.0
    %2596 = vmatpush1.msra.mxu0 0.0
    %2597 = vmatprep.subr.mxu0 0.0
    %2598 = vmatpush1.msra.mxu0 0.0
    %2599 = vmatprep.subr.mxu0 0.0
    %2600 = vmatpush1.msra.mxu0 0.0
    %2601 = vmatprep.subr.mxu0 0.0
    %2602 = vmatpush1.msra.mxu0 0.0
    %2603 = vmatprep.subr.mxu0 0.0
    %2604 = vmatpush1.msra.mxu0 0.0
    %2605 = vmatprep.subr.mxu0 0.0
    %2606 = vmatpush1.msra.mxu0 0.0
    %2607 = vmatprep.subr.mxu0 0.0
    %2608 = vmatpush1.msra.mxu0 0.0
    %2609 = vmatprep.subr.mxu0 0.0
    %2610 = vmatpush1.msra.mxu0 0.0
    %2611 = vmatprep.subr.mxu0 0.0
    %2612 = vmatpush1.msra.mxu0 0.0
    %2613 = vmatprep.subr.mxu0 0.0
    %2614 = vmatpush1.msra.mxu0 0.0
    %2615 = vmatprep.subr.mxu0 0.0
    %2616 = vmatpush1.msra.mxu0 0.0
    %2617 = vmatprep.subr.mxu0 0.0
    %2618 = vmatpush1.msra.mxu0 0.0
    %2619 = vmatprep.subr.mxu0 0.0
    %2620 = vmatpush1.msra.mxu0 0.0
    %2621 = vmatprep.subr.mxu0 0.0
    %2622 = vmatpush1.msra.mxu0 0.0
    %2623 = vmatprep.subr.mxu0 0.0
    %2624 = vmatpush1.msra.mxu0 0.0
    %2625 = vmatprep.subr.mxu0 0.0
    %2626 = vmatpush1.msra.mxu0 0.0
    %2627 = vmatprep.subr.mxu0 0.0
    %2628 = vmatpush1.msra.mxu0 0.0
    %2629 = vmatprep.subr.mxu0 0.0
    %2630 = vmatpush1.msra.mxu0 0.0
    %2631 = vmatprep.subr.mxu0 0.0
    %2632 = vmatpush1.msra.mxu0 0.0
    %2633 = vmatprep.subr.mxu0 0.0
    %2634 = vmatpush1.msra.mxu0 0.0
    %2635 = vmatprep.subr.mxu0 0.0
    %2636 = vmatpush1.msra.mxu0 0.0
    %2637 = vmatprep.subr.mxu0 0.0
    %2638 = vmatpush1.msra.mxu0 0.0
    %2639 = vmatprep.subr.mxu0 0.0
    %2640 = vmatpush1.msra.mxu0 0.0
    %2641 = vmatprep.subr.mxu0 0.0
    %2642 = vmatpush1.msra.mxu0 0.0
    %2643 = vmatprep.subr.mxu0 0.0
    %2644 = vmatpush1.msra.mxu0 0.0
    %2645 = vmatprep.subr.mxu0 0.0
    %2646 = vmatpush1.msra.mxu0 0.0
    %2647 = vmatprep.subr.mxu0 0.0
    %2648 = vmatpush1.msra.mxu0 0.0
    %2649 = vmatprep.mubr.f32.mxu0 0.0
    %2650 = vmatmul.mubr.f32.gmra.mrb[0].mxu0 %v2571
    %v2651 = vpop.f32.mrb[0].mxu0
    %v2652 = vadd.f32 0.0, %v2651
    %v2653 = vpop.f32.mrb[0].mxu0
    %2654 = vmatprep.mubr.f32.mxu0 0.0
    %2655 = vmatmul.mubr.f32.gmra.mrb[0].mxu0 %v2574
    %v2656 = vpop.f32.mrb[0].mxu0
    %v2657 = vadd.f32 0.0, %v2656
    %v2658 = vpop.f32.mrb[0].mxu0
    %2659 = vmatprep.mubr.f32.mxu0 0.0
    %2660 = vmatmul.mubr.f32.gmra.mrb[0].mxu0 %v2577
    %v2661 = vpop.f32.mrb[0].mxu0
    %v2662 = vadd.f32 0.0, %v2661
    %v2663 = vpop.f32.mrb[0].mxu0
    %2664 = vmatprep.mubr.f32.mxu0 0.0
    %2665 = vmatmul.mubr.f32.gmra.mrb[0].mxu0 %v2580
    %v2666 = vpop.f32.mrb[0].mxu0
    %v2667 = vadd.f32 0.0, %v2666
    %v2668 = vpop.f32.mrb[0].mxu0
    %2669 = vmatprep.mubr.f32.mxu0 0.0
    %2670 = vmatmul.mubr.f32.gmra.mrb[0].mxu0 %v2583
    %v2671 = vpop.f32.mrb[0].mxu0
    %v2672 = vadd.f32 0.0, %v2671
    %v2673 = vpop.f32.mrb[0].mxu0
    %2674 = vdwg.mxu0
    %v2675 = vadd.f32 %v1592, %v2652
    %v2676 = vadd.f32 %v1593, %v2657
    %v2677 = vadd.f32 %v1594, %v2662
    %v2678 = vadd.f32 %v1595, %v2667
    %v2679 = vadd.f32 %v1596, %v2672
    %v2680 = vlaneseq
    %v2681 = vshrl.u32 %v2680, 7
    %v2682 = vsub.s32 1, %v2681
    %v2683 = vrot.slane %v1598, %v2682
    %v2684 = vadd.f32 %v2675, %v2683
    %v2685 = vadd.f32 %v2676, %v2683
    %v2686 = vadd.f32 %v2677, %v2683
    %v2687 = vadd.f32 %v2678, %v2683
    %v2688 = vadd.f32 %v2679, %v2683
    %v2689 = vsel %vm192, %v2684, 0.0
    %2690 = vadd.xlane.f32.xlu0 %v2689
    %v2691 = vpop.xlane.xlu0 %2690
    %v2692 = vsel %vm192, %v2685, 0.0
    %2693 = vadd.xlane.f32.xlu0 %v2692
    %v2694 = vpop.xlane.xlu0 %2693
    %v2695 = vsel %vm192, %v2686, 0.0
    %2696 = vadd.xlane.f32.xlu0 %v2695
    %v2697 = vpop.xlane.xlu0 %2696
    %v2698 = vsel %vm192, %v2687, 0.0
    %2699 = vadd.xlane.f32.xlu0 %v2698
    %v2700 = vpop.xlane.xlu0 %2699
    %v2701 = vsel %vm205, %v2688, 0.0
    %2702 = vadd.xlane.f32.xlu0 %v2701
    %v2703 = vpop.xlane.xlu0 %2702
    %v2704 = vmul.f32 %v2691, %v209
    %v2705 = vmul.f32 %v2694, %v209
    %v2706 = vmul.f32 %v2697, %v209
    %v2707 = vmul.f32 %v2700, %v209
    %v2708 = vmul.f32 %v2703, %v209
    %v2709 = vsub.f32 %v2684, %v2704
    %v2710 = vsub.f32 %v2685, %v2705
    %v2711 = vsub.f32 %v2686, %v2706
    %v2712 = vsub.f32 %v2687, %v2707
    %v2713 = vsub.f32 %v2688, %v2708
    %v2714 = vmul.f32 %v2709, %v2709
    %v2715 = vmul.f32 %v2710, %v2710
    %v2716 = vmul.f32 %v2711, %v2711
    %v2717 = vmul.f32 %v2712, %v2712
    %v2718 = vmul.f32 %v2713, %v2713
    %v2719 = vsel %vm192, %v2714, 0.0
    %2720 = vadd.xlane.f32.xlu0 %v2719
    %v2721 = vpop.xlane.xlu0 %2720
    %v2722 = vsel %vm192, %v2715, 0.0
    %2723 = vadd.xlane.f32.xlu0 %v2722
    %v2724 = vpop.xlane.xlu0 %2723
    %v2725 = vsel %vm192, %v2716, 0.0
    %2726 = vadd.xlane.f32.xlu0 %v2725
    %v2727 = vpop.xlane.xlu0 %2726
    %v2728 = vsel %vm192, %v2717, 0.0
    %2729 = vadd.xlane.f32.xlu0 %v2728
    %v2730 = vpop.xlane.xlu0 %2729
    %v2731 = vsel %vm205, %v2718, 0.0
    %2732 = vadd.xlane.f32.xlu0 %v2731
    %v2733 = vpop.xlane.xlu0 %2732
    %v2734 = vmul.f32 %v2721, %v209
    %v2735 = vmul.f32 %v2724, %v209
    %v2736 = vmul.f32 %v2727, %v209
    %v2737 = vmul.f32 %v2730, %v209
    %v2738 = vmul.f32 %v2733, %v209
    %v2739 = vadd.f32 %v2734, 1e-05
    %v2740 = vadd.f32 %v2735, 1e-05
    %v2741 = vadd.f32 %v2736, 1e-05
    %v2742 = vadd.f32 %v2737, 1e-05
    %v2743 = vadd.f32 %v2738, 1e-05
    %v2744 = vrsqrt.pop %v2739
    %v2745 = vrsqrt.pop %v2740
    %v2746 = vrsqrt.pop %v2741
    %v2747 = vrsqrt.pop %v2742
    %v2748 = vrsqrt.pop %v2743
    %v2749 = vmul.f32 %v2709, %v2744
    %v2750 = vmul.f32 %v2710, %v2745
    %v2751 = vmul.f32 %v2711, %v2746
    %v2752 = vmul.f32 %v2712, %v2747
    %v2753 = vmul.f32 %v2713, %v2748
    %s2754 = scalar_lea.vmem %s6, 32
    %v2755 = vld [vmem:[%s2754] sm:$0xff]
    %v2756 = vld [vmem:[%s2754 + $0x8] sm:$0xff]
    %v2757 = vld [vmem:[%s2754 + $0x10] sm:$0xff]
    %v2758 = vld [vmem:[%s2754 + $0x18] sm:$0xff]
    %v2759 = vlaneseq
    %v2760 = vshrl.u32 %v2759, 7
    %v2761 = vsub.s32 2, %v2760
    %v2762 = vrot.slane %v1598, %v2761
    %v2764 = vsel %vm192, %v2749, 0
    %v2767 = vsel %vm192, %v2750, 0
    %v2770 = vsel %vm192, %v2751, 0
    %v2773 = vsel %vm192, %v2752, 0
    %v2776 = vsel %vm192, %v2753, 0
    %2778 = vmatprep.subr.mxu0 0.0
    %2779 = vmatpush1.msra.mxu0 %v2755
    %2780 = vmatprep.subr.mxu0 0.0
    %2781 = vmatpush1.msra.mxu0 %v2756
    %2782 = vmatprep.subr.mxu0 0.0
    %2783 = vmatpush1.msra.mxu0 %v2757
    %2784 = vmatprep.subr.mxu0 0.0
    %2785 = vmatpush1.msra.mxu0 %v2758
    %2786 = vmatprep.subr.mxu0 0.0
    %2787 = vmatpush1.msra.mxu0 0.0
    %2788 = vmatprep.subr.mxu0 0.0
    %2789 = vmatpush1.msra.mxu0 0.0
    %2790 = vmatprep.subr.mxu0 0.0
    %2791 = vmatpush1.msra.mxu0 0.0
    %2792 = vmatprep.subr.mxu0 0.0
    %2793 = vmatpush1.msra.mxu0 0.0
    %2794 = vmatprep.subr.mxu0 0.0
    %2795 = vmatpush1.msra.mxu0 0.0
    %2796 = vmatprep.subr.mxu0 0.0
    %2797 = vmatpush1.msra.mxu0 0.0
    %2798 = vmatprep.subr.mxu0 0.0
    %2799 = vmatpush1.msra.mxu0 0.0
    %2800 = vmatprep.subr.mxu0 0.0
    %2801 = vmatpush1.msra.mxu0 0.0
    %2802 = vmatprep.subr.mxu0 0.0
    %2803 = vmatpush1.msra.mxu0 0.0
    %2804 = vmatprep.subr.mxu0 0.0
    %2805 = vmatpush1.msra.mxu0 0.0
    %2806 = vmatprep.subr.mxu0 0.0
    %2807 = vmatpush1.msra.mxu0 0.0
    %2808 = vmatprep.subr.mxu0 0.0
    %2809 = vmatpush1.msra.mxu0 0.0
    %2810 = vmatprep.subr.mxu0 0.0
    %2811 = vmatpush1.msra.mxu0 0.0
    %2812 = vmatprep.subr.mxu0 0.0
    %2813 = vmatpush1.msra.mxu0 0.0
    %2814 = vmatprep.subr.mxu0 0.0
    %2815 = vmatpush1.msra.mxu0 0.0
    %2816 = vmatprep.subr.mxu0 0.0
    %2817 = vmatpush1.msra.mxu0 0.0
    %2818 = vmatprep.subr.mxu0 0.0
    %2819 = vmatpush1.msra.mxu0 0.0
    %2820 = vmatprep.subr.mxu0 0.0
    %2821 = vmatpush1.msra.mxu0 0.0
    %2822 = vmatprep.subr.mxu0 0.0
    %2823 = vmatpush1.msra.mxu0 0.0
    %2824 = vmatprep.subr.mxu0 0.0
    %2825 = vmatpush1.msra.mxu0 0.0
    %2826 = vmatprep.subr.mxu0 0.0
    %2827 = vmatpush1.msra.mxu0 0.0
    %2828 = vmatprep.subr.mxu0 0.0
    %2829 = vmatpush1.msra.mxu0 0.0
    %2830 = vmatprep.subr.mxu0 0.0
    %2831 = vmatpush1.msra.mxu0 0.0
    %2832 = vmatprep.subr.mxu0 0.0
    %2833 = vmatpush1.msra.mxu0 0.0
    %2834 = vmatprep.subr.mxu0 0.0
    %2835 = vmatpush1.msra.mxu0 0.0
    %2836 = vmatprep.subr.mxu0 0.0
    %2837 = vmatpush1.msra.mxu0 0.0
    %2838 = vmatprep.subr.mxu0 0.0
    %2839 = vmatpush1.msra.mxu0 0.0
    %2840 = vmatprep.subr.mxu0 0.0
    %2841 = vmatpush1.msra.mxu0 0.0
    %2842 = vmatprep.mubr.f32.mxu0 0.0
    %2843 = vmatmul.mubr.f32.gmra.mrb[0].mxu0 %v2764
    %v2844 = vpop.f32.mrb[0].mxu0
    %v2845 = vadd.f32 %v2762, %v2844
    %v2846 = vpop.f32.mrb[0].mxu0
    %2847 = vmatprep.mubr.f32.mxu0 0.0
    %2848 = vmatmul.mubr.f32.gmra.mrb[0].mxu0 %v2767
    %v2849 = vpop.f32.mrb[0].mxu0
    %v2850 = vadd.f32 %v2762, %v2849
    %v2851 = vpop.f32.mrb[0].mxu0
    %2852 = vmatprep.mubr.f32.mxu0 0.0
    %2853 = vmatmul.mubr.f32.gmra.mrb[0].mxu0 %v2770
    %v2854 = vpop.f32.mrb[0].mxu0
    %v2855 = vadd.f32 %v2762, %v2854
    %v2856 = vpop.f32.mrb[0].mxu0
    %2857 = vmatprep.mubr.f32.mxu0 0.0
    %2858 = vmatmul.mubr.f32.gmra.mrb[0].mxu0 %v2773
    %v2859 = vpop.f32.mrb[0].mxu0
    %v2860 = vadd.f32 %v2762, %v2859
    %v2861 = vpop.f32.mrb[0].mxu0
    %2862 = vmatprep.mubr.f32.mxu0 0.0
    %2863 = vmatmul.mubr.f32.gmra.mrb[0].mxu0 %v2776
    %v2864 = vpop.f32.mrb[0].mxu0
    %v2865 = vadd.f32 %v2762, %v2864
    %v2866 = vpop.f32.mrb[0].mxu0
    %2867 = vdwg.mxu0
    %v2868 = vmax.f32 %v2845, 0.0
    %v2869 = vmax.f32 %v2850, 0.0
    %v2870 = vmax.f32 %v2855, 0.0
    %v2871 = vmax.f32 %v2860, 0.0
    %v2872 = vmax.f32 %v2865, 0.0
    %s2873 = scalar_lea.vmem %s7, 64
    %v2874 = vld [vmem:[%s2873] sm:$0xff]
    %v2875 = vld [vmem:[%s2873 + $0x8] sm:$0xff]
    %v2876 = vld [vmem:[%s2873 + $0x10] sm:$0xff]
    %v2877 = vld [vmem:[%s2873 + $0x18] sm:$0xff]
    %v2878 = vld [vmem:[%s2873 + $0x20] sm:$0xff]
    %v2879 = vld [vmem:[%s2873 + $0x28] sm:$0xff]
    %v2880 = vld [vmem:[%s2873 + $0x30] sm:$0xff]
    %v2881 = vld [vmem:[%s2873 + $0x38] sm:$0xff]
    %v2883 = vsel %vm54, %v2868, 0
    %v2886 = vsel %vm54, %v2869, 0
    %v2889 = vsel %vm54, %v2870, 0
    %v2892 = vsel %vm54, %v2871, 0
    %v2895 = vsel %vm54, %v2872, 0
    %2897 = vmatprep.subr.mxu0 0.0
    %2898 = vmatpush1.msra.mxu0 %v2874
    %2899 = vmatprep.subr.mxu0 0.0
    %2900 = vmatpush1.msra.mxu0 %v2875
    %2901 = vmatprep.subr.mxu0 0.0
    %2902 = vmatpush1.msra.mxu0 %v2876
    %2903 = vmatprep.subr.mxu0 0.0
    %2904 = vmatpush1.msra.mxu0 %v2877
    %2905 = vmatprep.subr.mxu0 0.0
    %2906 = vmatpush1.msra.mxu0 %v2878
    %2907 = vmatprep.subr.mxu0 0.0
    %2908 = vmatpush1.msra.mxu0 %v2879
    %2909 = vmatprep.subr.mxu0 0.0
    %2910 = vmatpush1.msra.mxu0 %v2880
    %2911 = vmatprep.subr.mxu0 0.0
    %2912 = vmatpush1.msra.mxu0 %v2881
    %2913 = vmatprep.subr.mxu0 0.0
    %2914 = vmatpush1.msra.mxu0 0.0
    %2915 = vmatprep.subr.mxu0 0.0
    %2916 = vmatpush1.msra.mxu0 0.0
    %2917 = vmatprep.subr.mxu0 0.0
    %2918 = vmatpush1.msra.mxu0 0.0
    %2919 = vmatprep.subr.mxu0 0.0
    %2920 = vmatpush1.msra.mxu0 0.0
    %2921 = vmatprep.subr.mxu0 0.0
    %2922 = vmatpush1.msra.mxu0 0.0
    %2923 = vmatprep.subr.mxu0 0.0
    %2924 = vmatpush1.msra.mxu0 0.0
    %2925 = vmatprep.subr.mxu0 0.0
    %2926 = vmatpush1.msra.mxu0 0.0
    %2927 = vmatprep.subr.mxu0 0.0
    %2928 = vmatpush1.msra.mxu0 0.0
    %2929 = vmatprep.subr.mxu0 0.0
    %2930 = vmatpush1.msra.mxu0 0.0
    %2931 = vmatprep.subr.mxu0 0.0
    %2932 = vmatpush1.msra.mxu0 0.0
    %2933 = vmatprep.subr.mxu0 0.0
    %2934 = vmatpush1.msra.mxu0 0.0
    %2935 = vmatprep.subr.mxu0 0.0
    %2936 = vmatpush1.msra.mxu0 0.0
    %2937 = vmatprep.subr.mxu0 0.0
    %2938 = vmatpush1.msra.mxu0 0.0
    %2939 = vmatprep.subr.mxu0 0.0
    %2940 = vmatpush1.msra.mxu0 0.0
    %2941 = vmatprep.subr.mxu0 0.0
    %2942 = vmatpush1.msra.mxu0 0.0
    %2943 = vmatprep.subr.mxu0 0.0
    %2944 = vmatpush1.msra.mxu0 0.0
    %2945 = vmatprep.subr.mxu0 0.0
    %2946 = vmatpush1.msra.mxu0 0.0
    %2947 = vmatprep.subr.mxu0 0.0
    %2948 = vmatpush1.msra.mxu0 0.0
    %2949 = vmatprep.subr.mxu0 0.0
    %2950 = vmatpush1.msra.mxu0 0.0
    %2951 = vmatprep.subr.mxu0 0.0
    %2952 = vmatpush1.msra.mxu0 0.0
    %2953 = vmatprep.subr.mxu0 0.0
    %2954 = vmatpush1.msra.mxu0 0.0
    %2955 = vmatprep.subr.mxu0 0.0
    %2956 = vmatpush1.msra.mxu0 0.0
    %2957 = vmatprep.subr.mxu0 0.0
    %2958 = vmatpush1.msra.mxu0 0.0
    %2959 = vmatprep.subr.mxu0 0.0
    %2960 = vmatpush1.msra.mxu0 0.0
    %2961 = vmatprep.mubr.f32.mxu0 0.0
    %2962 = vmatmul.mubr.f32.gmra.mrb[0].mxu0 %v2883
    %v2963 = vpop.f32.mrb[0].mxu0
    %v2964 = vadd.f32 0.0, %v2963
    %v2965 = vpop.f32.mrb[0].mxu0
    %2966 = vmatprep.mubr.f32.mxu0 0.0
    %2967 = vmatmul.mubr.f32.gmra.mrb[0].mxu0 %v2886
    %v2968 = vpop.f32.mrb[0].mxu0
    %v2969 = vpop.f32.mrb[0].mxu0
    %2970 = vmatprep.mubr.f32.mxu0 0.0
    %2971 = vmatmul.mubr.f32.gmra.mrb[0].mxu0 %v2889
    %v2972 = vpop.f32.mrb[0].mxu0
    %v2973 = vadd.f32 0.0, %v2972
    %v2974 = vpop.f32.mrb[0].mxu0
    %2975 = vmatprep.mubr.f32.mxu0 0.0
    %2976 = vmatmul.mubr.f32.gmra.mrb[0].mxu0 %v2892
    %v2977 = vpop.f32.mrb[0].mxu0
    %v2978 = vpop.f32.mrb[0].mxu0
    %2979 = vmatprep.mubr.f32.mxu0 0.0
    %2980 = vmatmul.mubr.f32.gmra.mrb[0].mxu0 %v2895
    %v2981 = vpop.f32.mrb[0].mxu0
    %v2982 = vpop.f32.mrb[0].mxu0
    %2983 = vdwg.mxu0
    %v2984 = vadd.f32 %v2684, %v2964
    %v2985 = vadd.f32 %v2686, %v2973
    %v2986 = vlaneseq
    %v2987 = vshrl.u32 %v2986, 7
    %v2988 = vsub.s32 3, %v2987
    %v2989 = vrot.slane %v1598, %v2988
    %v2990 = vadd.f32 %v2984, %v2989
    %v2991 = vadd.f32 %v2985, %v2989
    %vm2992 = vcmask 1040384
    %v2993 = vsel %vm2992, %v2990, %v2991
    %v2994 = vsel %vm205, %v2993, 0.0
    %2995 = vadd.xlane.f32.xlu0 %v2994
    %v2996 = vpop.xlane.xlu0 %2995
    %v2997 = vmul.f32 %v2996, %v209
    %v2998 = vsub.f32 %v2993, %v2997
    %v2999 = vmul.f32 %v2998, %v2998
    %v3000 = vsel %vm205, %v2999, 0.0
    %3001 = vadd.xlane.f32.xlu0 %v3000
    %v3002 = vpop.xlane.xlu0 %3001
    %v3003 = vmul.f32 %v3002, %v209
    %v3004 = vadd.f32 %v3003, 1e-05
    %v3005 = vrsqrt.pop %v3004
    %v3006 = vmul.f32 %v2998, %v3005
    %v3007 = vld [vmem:[%s9] sm:$0xff]
    %v3008 = vld [vmem:[%s9 + $0x8] sm:$0xff]
    %v3009 = vld [vmem:[%s9 + $0x10] sm:$0xff]
    %v3010 = vld [vmem:[%s9 + $0x18] sm:$0xff]
    %v3011 = vld [vmem:[%s9 + $0x20] sm:$0x1]
    %v3012 = vlaneseq
    %v3013 = vshrl.u32 %v3012, 7
    %v3014 = vsub.s32 0, %v3013
    %v3015 = vrot.slane %v3011, %v3014
    %v3017 = vsel %vm192, %v3006, 0
    %3019 = vmatprep.subr.mxu0 0.0
    %3020 = vmatpush1.msra.mxu0 %v3007
    %3021 = vmatprep.subr.mxu0 0.0
    %3022 = vmatpush1.msra.mxu0 %v3008
    %3023 = vmatprep.subr.mxu0 0.0
    %3024 = vmatpush1.msra.mxu0 %v3009
    %3025 = vmatprep.subr.mxu0 0.0
    %3026 = vmatpush1.msra.mxu0 %v3010
    %3027 = vmatprep.subr.mxu0 0.0
    %3028 = vmatpush1.msra.mxu0 0.0
    %3029 = vmatprep.subr.mxu0 0.0
    %3030 = vmatpush1.msra.mxu0 0.0
    %3031 = vmatprep.subr.mxu0 0.0
    %3032 = vmatpush1.msra.mxu0 0.0
    %3033 = vmatprep.subr.mxu0 0.0
    %3034 = vmatpush1.msra.mxu0 0.0
    %3035 = vmatprep.subr.mxu0 0.0
    %3036 = vmatpush1.msra.mxu0 0.0
    %3037 = vmatprep.subr.mxu0 0.0
    %3038 = vmatpush1.msra.mxu0 0.0
    %3039 = vmatprep.subr.mxu0 0.0
    %3040 = vmatpush1.msra.mxu0 0.0
    %3041 = vmatprep.subr.mxu0 0.0
    %3042 = vmatpush1.msra.mxu0 0.0
    %3043 = vmatprep.subr.mxu0 0.0
    %3044 = vmatpush1.msra.mxu0 0.0
    %3045 = vmatprep.subr.mxu0 0.0
    %3046 = vmatpush1.msra.mxu0 0.0
    %3047 = vmatprep.subr.mxu0 0.0
    %3048 = vmatpush1.msra.mxu0 0.0
    %3049 = vmatprep.subr.mxu0 0.0
    %3050 = vmatpush1.msra.mxu0 0.0
    %3051 = vmatprep.subr.mxu0 0.0
    %3052 = vmatpush1.msra.mxu0 0.0
    %3053 = vmatprep.subr.mxu0 0.0
    %3054 = vmatpush1.msra.mxu0 0.0
    %3055 = vmatprep.subr.mxu0 0.0
    %3056 = vmatpush1.msra.mxu0 0.0
    %3057 = vmatprep.subr.mxu0 0.0
    %3058 = vmatpush1.msra.mxu0 0.0
    %3059 = vmatprep.subr.mxu0 0.0
    %3060 = vmatpush1.msra.mxu0 0.0
    %3061 = vmatprep.subr.mxu0 0.0
    %3062 = vmatpush1.msra.mxu0 0.0
    %3063 = vmatprep.subr.mxu0 0.0
    %3064 = vmatpush1.msra.mxu0 0.0
    %3065 = vmatprep.subr.mxu0 0.0
    %3066 = vmatpush1.msra.mxu0 0.0
    %3067 = vmatprep.subr.mxu0 0.0
    %3068 = vmatpush1.msra.mxu0 0.0
    %3069 = vmatprep.subr.mxu0 0.0
    %3070 = vmatpush1.msra.mxu0 0.0
    %3071 = vmatprep.subr.mxu0 0.0
    %3072 = vmatpush1.msra.mxu0 0.0
    %3073 = vmatprep.subr.mxu0 0.0
    %3074 = vmatpush1.msra.mxu0 0.0
    %3075 = vmatprep.subr.mxu0 0.0
    %3076 = vmatpush1.msra.mxu0 0.0
    %3077 = vmatprep.subr.mxu0 0.0
    %3078 = vmatpush1.msra.mxu0 0.0
    %3079 = vmatprep.subr.mxu0 0.0
    %3080 = vmatpush1.msra.mxu0 0.0
    %3081 = vmatprep.subr.mxu0 0.0
    %3082 = vmatpush1.msra.mxu0 0.0
    %3083 = vmatprep.mubr.f32.mxu0 0.0
    %3084 = vmatmul.mubr.f32.gmra.mrb[0].mxu0 %v3017
    %v3085 = vpop.f32.mrb[0].mxu0
    %v3086 = vadd.f32 %v3015, %v3085
    %v3087 = vpop.f32.mrb[0].mxu0
    %3088 = vdwg.mxu0
    %3089 = vst [vmem:[#allocation2] sm:$0x3] %v3086
    // Predicated region
    $region42: #{tpu_custom_call.1} parent=1 // pred_check
      _
    $region43: #{tpu_custom_call.1} parent=1 // pred_check_branch
      %3091 = sbr.rel (0) target = $region45
    $region44: #{tpu_custom_call.1} parent=1 // pred_region
      %s3093 = ssub.s32 32, 32
      %3094 = vsyncadd [#allocation3], %s3093
      %s3096 = sshll.u32 [#allocation2], 4
      %s3097 = int_to_ptr.vmem [resolvable:$true] %s3096
      %3099 = dma.vmem_to_hbm [thread:$0]  %s3097, 32, %s10, [#allocation3]
    $region45: #{tpu_custom_call.1} parent=1 // pred_fallthru
      _
    // Predicated region
    $region46: #{tpu_custom_call.1} parent=1 // pred_check
      _
    $region47: #{tpu_custom_call.1} parent=1 // pred_check_branch
      %3101 = sbr.rel (0) target = $region49
    $region48: #{tpu_custom_call.1} parent=1 // pred_region
      %3102 = dma.done [#allocation3], 32
    $region49: #{tpu_custom_call.1} parent=1 // pred_fallthru
      _
    %3103 = vsyncpa [#allocation3], 1

</llo_original>
